<compile_context>
chip_gen: v5e
topology: v5e:2x2
jax: 0.10.0
libtpu: 0.0.40
codegen_flags: <defaults>
</compile_context>

<pallas_src>
import jax
import jax.numpy as jnp
from jax import lax
from jax.experimental import pallas as pl
from jax.experimental.pallas import tpu as pltpu


def sw_kernel(w1_ref, a_ref, x_ref, o_ref):
    # x block: (TB, C, D, HW) float32, lane-dense (H*W on lanes).
    TB, C, D, HW = x_ref.shape
    M = TB * D

    # ---- conv1: 1x1x1, C -> 1 == scalar-weighted channel sum (VPU). ----
    # Read per channel so the full x block is never held live in vregs.
    t = w1_ref[0] * x_ref[:, 0]
    for c in range(1, C):
        t = t + w1_ref[c] * x_ref[:, c]            # (TB, D, HW)
    t2 = t.reshape(M, HW)                          # merge leading dims only

    # ---- conv2, in-plane 3x3 taps on the MXU. ----
    # A[dd] is a banded (HW, HW) matrix: Q[dd][m, l] = sum_{dj,dk}
    # w2[dd, dj+1, dk+1] * t[m, (h+dj)*W + (w+dk)], with H/W edge zero-padding
    # encoded structurally as zero bands.
    def dot(a, b):
        return jnp.dot(a, b, preferred_element_type=jnp.float32,
                       precision=lax.Precision.HIGHEST)

    q_m1 = dot(t2, a_ref[0])                       # (M, HW)
    q_0 = dot(t2, a_ref[1])
    q_p1 = dot(t2, a_ref[2])

    # ---- conv2, D direction: out[d] = Q[-1][d-1] + Q[0][d] + Q[+1][d+1]. ----
    # Rows are m = tb*D + d; rolling the flat (M, HW) array only mixes rows
    # across a batch boundary at d==0 / d==D-1, which are masked to zero anyway.
    row = lax.broadcasted_iota(jnp.int32, (M, HW), 0)
    d_idx = (row & (D - 1)) if (D & (D - 1)) == 0 else (row % D)
    up = jnp.where(d_idx > 0, pltpu.roll(q_m1, shift=1, axis=0), 0.0)
    dn = jnp.where(d_idx < D - 1, pltpu.roll(q_p1, shift=M - 1, axis=0), 0.0)
    y = up + q_0 + dn                              # (M, HW)

    # ---- sigmoid (EUP tanh, no VPU divide) and gate with the identity. ----
    s = (0.5 * (jnp.tanh(0.5 * y) + 1.0)).reshape(TB, D, HW)
    for c in range(C):
        o_ref[:, c] = (x_ref[:, c] * s).astype(o_ref.dtype)


def build_conv2_matrices(w2, H, W):
    """Three (HW, HW) banded matrices A[dd] such that (t @ A[dd])[:, l_dst] is
    the 3x3 in-plane tap sum of conv2's kD-slice dd, with zero-padding on the
    H/W edges encoded as missing (zero) bands."""
    HW = H * W
    k = w2.reshape(3, 3, 3)                        # (kD, kH, kW)
    l_dst = jnp.arange(HW, dtype=jnp.int32)
    h = l_dst // W
    w = l_dst % W
    A = jnp.zeros((3, HW, HW), jnp.float32)
    for dd in range(3):
        for dj in (-1, 0, 1):
            for dk in (-1, 0, 1):
                hh, ww = h + dj, w + dk
                valid = (hh >= 0) & (hh < H) & (ww >= 0) & (ww < W)
                l_src = jnp.where(valid, hh * W + ww, 0)
                vals = jnp.where(valid, k[dd, dj + 1, dk + 1], 0.0)
                A = A.at[dd, l_src, l_dst].add(vals)
    return A


def _pick_batch_tile(n, per_batch_bytes, *, target_bytes=2 << 20, min_steps=8):
    """~2 MiB blocks, but keep >= min_steps grid steps when N allows it so the
    pipeline (and v7x's two TensorCores) stays fed."""
    tb_cap = max(1, target_bytes // per_batch_bytes)
    tb_steps = max(1, n // min_steps)
    return int(max(1, min(n, tb_cap, tb_steps)))


def sw_forward(x, w1, w2):
    N, C, D, H, W = x.shape
    HW = H * W
    x_flat = x.reshape(N, C, D, HW)                # lane-dense: H*W on lanes
    a = build_conv2_matrices(w2, H, W)             # (3, HW, HW), 768 KiB @ 16^2

    tb = _pick_batch_tile(N, C * D * HW * 4)
    grid = (pl.cdiv(N, tb),)

    out_flat = pl.pallas_call(
        sw_kernel,
        out_shape=jax.ShapeDtypeStruct((N, C, D, HW), x.dtype),
        grid=grid,
        in_specs=[
            pl.BlockSpec(memory_space=pltpu.MemorySpace.SMEM),        # w1 (C,)
            pl.BlockSpec((3, HW, HW), lambda n: (0, 0, 0)),           # A, copied once
            pl.BlockSpec((tb, C, D, HW), lambda n: (n, 0, 0, 0)),     # x batch tile
        ],
        out_specs=pl.BlockSpec((tb, C, D, HW), lambda n: (n, 0, 0, 0)),
        input_output_aliases={2: 0},   # x block is fully read before o writeback
        compiler_params=pltpu.CompilerParams(
            dimension_semantics=("parallel",)),
    )(w1, a, x_flat)
    return out_flat.reshape(N, C, D, H, W)


def sw_reference(x, w1, w2):
    """Pure-JAX reference matching the PyTorch forward exactly."""
    N, C, D, H, W = x.shape
    y1 = lax.conv_general_dilated(
        x, w1.reshape(1, C, 1, 1, 1), window_strides=(1, 1, 1),
        padding="VALID", dimension_numbers=("NCDHW", "OIDHW", "NCDHW"),
        precision=lax.Precision.HIGHEST)
    y2 = lax.conv_general_dilated(
        y1, w2.reshape(1, 1, 3, 3, 3), window_strides=(1, 1, 1),
        padding=((1, 1), (1, 1), (1, 1)),
        dimension_numbers=("NCDHW", "OIDHW", "NCDHW"),
        precision=lax.Precision.HIGHEST)
    return jax.nn.sigmoid(y2) * x


if __name__ == "__main__":
    key = jax.random.PRNGKey(0)
    kx, k1, k2 = jax.random.split(key, 3)

    N, C, D, H, W = 2, 4, 8, 16, 16
    x = jax.random.normal(kx, (N, C, D, H, W), jnp.float32)

    # Deterministic in-script weight init (shapes from the module's __init__):
    # conv1.weight: (1, C, 1, 1, 1) -> flattened to (C,)
    # conv2.weight: (1, 1, 3, 3, 3) -> flattened to (27,)
    w1 = jax.random.uniform(k1, (C,), jnp.float32, -1.0, 1.0) / jnp.sqrt(C * 1.0)
    w2 = jax.random.uniform(k2, (27,), jnp.float32, -1.0, 1.0) / jnp.sqrt(27.0)

    ref = jax.block_until_ready(sw_reference(x, w1, w2))
    x_shape, x_dtype = x.shape, x.dtype

    # Donate x so the in-kernel input_output_aliases actually avoids a
    # defensive HBM copy (x's buffer is reused for the output).
    sw_jit = jax.jit(sw_forward, donate_argnums=0)
    out = jax.block_until_ready(sw_jit(x, w1, w2))

    assert out.shape == x_shape and out.dtype == x_dtype
    assert jnp.allclose(out, ref, atol=1e-5, rtol=1e-5)
    print("KERNEL_OK")
</pallas_src>

<mosaic_0001>
module attributes {stable_mosaic.version = 11 : i64} {
  func.func @sw_kernel(%arg0: i32, %arg1: memref<4xf32, #tpu.memory_space<smem>>, %arg2: memref<3x256x256xf32, #tpu.memory_space<vmem>>, %arg3: memref<1x4x8x256xf32, #tpu.memory_space<vmem>>, %arg4: memref<1x4x8x256xf32, #tpu.memory_space<vmem>>) attributes {dimension_semantics = [#tpu.dimension_semantics<parallel>], iteration_bounds = array<i64: 2>, scalar_prefetch = 0 : i64, scratch_operands = 0 : i64, tpu.core_type = #tpu.core_type<tc>, window_params = [{transform_indices = @transform_0, window_bounds = array<i64: 4>}, {pipeline_mode = #tpu.pipeline_mode<synchronous>, transform_indices = @transform_1, window_bounds = array<i64: 3, 256, 256>}, {transform_indices = @transform_2, window_bounds = array<i64: 1, 4, 8, 256>}, {transform_indices = @transform_3, window_bounds = array<i64: 1, 4, 8, 256>}]} {
    %c0 = arith.constant 0 : index
    %0 = memref.load %arg1[%c0] : memref<4xf32, #tpu.memory_space<smem>>
    %c0_0 = arith.constant 0 : index
    %c0_1 = arith.constant 0 : index
    %c0_2 = arith.constant 0 : index
    %c0_3 = arith.constant 0 : index
    %1 = vector.load %arg3[%c0_0, %c0_1, %c0_2, %c0_3] : memref<1x4x8x256xf32, #tpu.memory_space<vmem>>, vector<1x1x8x256xf32>
    %2 = vector.shape_cast %1 : vector<1x1x8x256xf32> to vector<1x8x256xf32>
    %3 = vector.broadcast %0 : f32 to vector<1x8x256xf32>
    %4 = arith.mulf %3, %2 : vector<1x8x256xf32>
    %c1 = arith.constant 1 : index
    %5 = memref.load %arg1[%c1] : memref<4xf32, #tpu.memory_space<smem>>
    %c0_4 = arith.constant 0 : index
    %c1_5 = arith.constant 1 : index
    %c0_6 = arith.constant 0 : index
    %c0_7 = arith.constant 0 : index
    %6 = vector.load %arg3[%c0_4, %c1_5, %c0_6, %c0_7] : memref<1x4x8x256xf32, #tpu.memory_space<vmem>>, vector<1x1x8x256xf32>
    %7 = vector.shape_cast %6 : vector<1x1x8x256xf32> to vector<1x8x256xf32>
    %8 = vector.broadcast %5 : f32 to vector<1x8x256xf32>
    %9 = arith.mulf %8, %7 : vector<1x8x256xf32>
    %10 = arith.addf %4, %9 : vector<1x8x256xf32>
    %c2 = arith.constant 2 : index
    %11 = memref.load %arg1[%c2] : memref<4xf32, #tpu.memory_space<smem>>
    %c0_8 = arith.constant 0 : index
    %c2_9 = arith.constant 2 : index
    %c0_10 = arith.constant 0 : index
    %c0_11 = arith.constant 0 : index
    %12 = vector.load %arg3[%c0_8, %c2_9, %c0_10, %c0_11] : memref<1x4x8x256xf32, #tpu.memory_space<vmem>>, vector<1x1x8x256xf32>
    %13 = vector.shape_cast %12 : vector<1x1x8x256xf32> to vector<1x8x256xf32>
    %14 = vector.broadcast %11 : f32 to vector<1x8x256xf32>
    %15 = arith.mulf %14, %13 : vector<1x8x256xf32>
    %16 = arith.addf %10, %15 : vector<1x8x256xf32>
    %c3 = arith.constant 3 : index
    %17 = memref.load %arg1[%c3] : memref<4xf32, #tpu.memory_space<smem>>
    %c0_12 = arith.constant 0 : index
    %c3_13 = arith.constant 3 : index
    %c0_14 = arith.constant 0 : index
    %c0_15 = arith.constant 0 : index
    %18 = vector.load %arg3[%c0_12, %c3_13, %c0_14, %c0_15] : memref<1x4x8x256xf32, #tpu.memory_space<vmem>>, vector<1x1x8x256xf32>
    %19 = vector.shape_cast %18 : vector<1x1x8x256xf32> to vector<1x8x256xf32>
    %20 = vector.broadcast %17 : f32 to vector<1x8x256xf32>
    %21 = arith.mulf %20, %19 : vector<1x8x256xf32>
    %22 = arith.addf %16, %21 : vector<1x8x256xf32>
    %23 = vector.shape_cast %22 : vector<1x8x256xf32> to vector<8x256xf32>
    %c0_16 = arith.constant 0 : index
    %c0_17 = arith.constant 0 : index
    %c0_18 = arith.constant 0 : index
    %24 = vector.load %arg2[%c0_16, %c0_17, %c0_18] : memref<3x256x256xf32, #tpu.memory_space<vmem>>, vector<1x256x256xf32>
    %25 = vector.shape_cast %24 : vector<1x256x256xf32> to vector<256x256xf32>
    %cst = arith.constant dense<0.000000e+00> : vector<8x256xf32>
    %26 = tpu.matmul %23, %25, %cst {dimension_numbers = #tpu.dot_dimension_numbers<[1], [0], [0], [1], [0, 0, 1, 1], [], []>, precision = #tpu.contract_precision<fp32>} : vector<8x256xf32>, vector<256x256xf32>, vector<8x256xf32> -> vector<8x256xf32>
    %c1_19 = arith.constant 1 : index
    %c0_20 = arith.constant 0 : index
    %c0_21 = arith.constant 0 : index
    %27 = vector.load %arg2[%c1_19, %c0_20, %c0_21] : memref<3x256x256xf32, #tpu.memory_space<vmem>>, vector<1x256x256xf32>
    %28 = vector.shape_cast %27 : vector<1x256x256xf32> to vector<256x256xf32>
    %cst_22 = arith.constant dense<0.000000e+00> : vector<8x256xf32>
    %29 = tpu.matmul %23, %28, %cst_22 {dimension_numbers = #tpu.dot_dimension_numbers<[1], [0], [0], [1], [0, 0, 1, 1], [], []>, precision = #tpu.contract_precision<fp32>} : vector<8x256xf32>, vector<256x256xf32>, vector<8x256xf32> -> vector<8x256xf32>
    %c2_23 = arith.constant 2 : index
    %c0_24 = arith.constant 0 : index
    %c0_25 = arith.constant 0 : index
    %30 = vector.load %arg2[%c2_23, %c0_24, %c0_25] : memref<3x256x256xf32, #tpu.memory_space<vmem>>, vector<1x256x256xf32>
    %31 = vector.shape_cast %30 : vector<1x256x256xf32> to vector<256x256xf32>
    %cst_26 = arith.constant dense<0.000000e+00> : vector<8x256xf32>
    %32 = tpu.matmul %23, %31, %cst_26 {dimension_numbers = #tpu.dot_dimension_numbers<[1], [0], [0], [1], [0, 0, 1, 1], [], []>, precision = #tpu.contract_precision<fp32>} : vector<8x256xf32>, vector<256x256xf32>, vector<8x256xf32> -> vector<8x256xf32>
    %33 = tpu.iota {dimensions = array<i32: 0>} : vector<8x256xi32>
    %c7_i32 = arith.constant 7 : i32
    %34 = vector.broadcast %c7_i32 : i32 to vector<8x256xi32>
    %35 = arith.andi %33, %34 : vector<8x256xi32>
    %c0_i32 = arith.constant 0 : i32
    %36 = vector.broadcast %c0_i32 : i32 to vector<8x256xi32>
    %37 = arith.cmpi sgt, %35, %36 : vector<8x256xi32>
    %c1_i32 = arith.constant 1 : i32
    %38 = tpu.dynamic_rotate %26 by %c1_i32 dim 0 : vector<8x256xf32>, i32 -> vector<8x256xf32>
    %cst_27 = arith.constant 0.000000e+00 : f32
    %39 = vector.broadcast %cst_27 : f32 to vector<8x256xf32>
    %40 = arith.select %37, %38, %39 : vector<8x256xi1>, vector<8x256xf32>
    %c7_i32_28 = arith.constant 7 : i32
    %41 = vector.broadcast %c7_i32_28 : i32 to vector<8x256xi32>
    %42 = arith.cmpi slt, %35, %41 : vector<8x256xi32>
    %c7_i32_29 = arith.constant 7 : i32
    %43 = tpu.dynamic_rotate %32 by %c7_i32_29 dim 0 : vector<8x256xf32>, i32 -> vector<8x256xf32>
    %cst_30 = arith.constant 0.000000e+00 : f32
    %44 = vector.broadcast %cst_30 : f32 to vector<8x256xf32>
    %45 = arith.select %42, %43, %44 : vector<8x256xi1>, vector<8x256xf32>
    %46 = arith.addf %40, %29 : vector<8x256xf32>
    %47 = arith.addf %46, %45 : vector<8x256xf32>
    %cst_31 = arith.constant 5.000000e-01 : f32
    %48 = vector.broadcast %cst_31 : f32 to vector<8x256xf32>
    %49 = arith.mulf %48, %47 : vector<8x256xf32>
    %50 = math.tanh %49 : vector<8x256xf32>
    %cst_32 = arith.constant 1.000000e+00 : f32
    %51 = vector.broadcast %cst_32 : f32 to vector<8x256xf32>
    %52 = arith.addf %50, %51 : vector<8x256xf32>
    %cst_33 = arith.constant 5.000000e-01 : f32
    %53 = vector.broadcast %cst_33 : f32 to vector<8x256xf32>
    %54 = arith.mulf %53, %52 : vector<8x256xf32>
    %55 = vector.shape_cast %54 : vector<8x256xf32> to vector<1x8x256xf32>
    %c0_34 = arith.constant 0 : index
    %c0_35 = arith.constant 0 : index
    %c0_36 = arith.constant 0 : index
    %c0_37 = arith.constant 0 : index
    %56 = vector.load %arg3[%c0_34, %c0_35, %c0_36, %c0_37] : memref<1x4x8x256xf32, #tpu.memory_space<vmem>>, vector<1x1x8x256xf32>
    %57 = vector.shape_cast %56 : vector<1x1x8x256xf32> to vector<1x8x256xf32>
    %58 = arith.mulf %57, %55 : vector<1x8x256xf32>
    %c0_38 = arith.constant 0 : index
    %c0_39 = arith.constant 0 : index
    %c0_40 = arith.constant 0 : index
    %c0_41 = arith.constant 0 : index
    %59 = vector.load %arg4[%c0_38, %c0_39, %c0_40, %c0_41] : memref<1x4x8x256xf32, #tpu.memory_space<vmem>>, vector<1x1x8x256xf32>
    %60 = vector.shape_cast %59 : vector<1x1x8x256xf32> to vector<1x8x256xf32>
    %61 = vector.shape_cast %58 : vector<1x8x256xf32> to vector<1x1x8x256xf32>
    tpu.vector_store %arg4[%c0_38, %c0_39, %c0_40, %c0_41], %61 {strides = array<i32>} : memref<1x4x8x256xf32, #tpu.memory_space<vmem>>, vector<1x1x8x256xf32>,
    %c0_42 = arith.constant 0 : index
    %c1_43 = arith.constant 1 : index
    %c0_44 = arith.constant 0 : index
    %c0_45 = arith.constant 0 : index
    %62 = vector.load %arg3[%c0_42, %c1_43, %c0_44, %c0_45] : memref<1x4x8x256xf32, #tpu.memory_space<vmem>>, vector<1x1x8x256xf32>
    %63 = vector.shape_cast %62 : vector<1x1x8x256xf32> to vector<1x8x256xf32>
    %64 = arith.mulf %63, %55 : vector<1x8x256xf32>
    %c0_46 = arith.constant 0 : index
    %c1_47 = arith.constant 1 : index
    %c0_48 = arith.constant 0 : index
    %c0_49 = arith.constant 0 : index
    %65 = vector.load %arg4[%c0_46, %c1_47, %c0_48, %c0_49] : memref<1x4x8x256xf32, #tpu.memory_space<vmem>>, vector<1x1x8x256xf32>
    %66 = vector.shape_cast %65 : vector<1x1x8x256xf32> to vector<1x8x256xf32>
    %67 = vector.shape_cast %64 : vector<1x8x256xf32> to vector<1x1x8x256xf32>
    tpu.vector_store %arg4[%c0_46, %c1_47, %c0_48, %c0_49], %67 {strides = array<i32>} : memref<1x4x8x256xf32, #tpu.memory_space<vmem>>, vector<1x1x8x256xf32>,
    %c0_50 = arith.constant 0 : index
    %c2_51 = arith.constant 2 : index
    %c0_52 = arith.constant 0 : index
    %c0_53 = arith.constant 0 : index
    %68 = vector.load %arg3[%c0_50, %c2_51, %c0_52, %c0_53] : memref<1x4x8x256xf32, #tpu.memory_space<vmem>>, vector<1x1x8x256xf32>
    %69 = vector.shape_cast %68 : vector<1x1x8x256xf32> to vector<1x8x256xf32>
    %70 = arith.mulf %69, %55 : vector<1x8x256xf32>
    %c0_54 = arith.constant 0 : index
    %c2_55 = arith.constant 2 : index
    %c0_56 = arith.constant 0 : index
    %c0_57 = arith.constant 0 : index
    %71 = vector.load %arg4[%c0_54, %c2_55, %c0_56, %c0_57] : memref<1x4x8x256xf32, #tpu.memory_space<vmem>>, vector<1x1x8x256xf32>
    %72 = vector.shape_cast %71 : vector<1x1x8x256xf32> to vector<1x8x256xf32>
    %73 = vector.shape_cast %70 : vector<1x8x256xf32> to vector<1x1x8x256xf32>
    tpu.vector_store %arg4[%c0_54, %c2_55, %c0_56, %c0_57], %73 {strides = array<i32>} : memref<1x4x8x256xf32, #tpu.memory_space<vmem>>, vector<1x1x8x256xf32>,
    %c0_58 = arith.constant 0 : index
    %c3_59 = arith.constant 3 : index
    %c0_60 = arith.constant 0 : index
    %c0_61 = arith.constant 0 : index
    %74 = vector.load %arg3[%c0_58, %c3_59, %c0_60, %c0_61] : memref<1x4x8x256xf32, #tpu.memory_space<vmem>>, vector<1x1x8x256xf32>
    %75 = vector.shape_cast %74 : vector<1x1x8x256xf32> to vector<1x8x256xf32>
    %76 = arith.mulf %75, %55 : vector<1x8x256xf32>
    %c0_62 = arith.constant 0 : index
    %c3_63 = arith.constant 3 : index
    %c0_64 = arith.constant 0 : index
    %c0_65 = arith.constant 0 : index
    %77 = vector.load %arg4[%c0_62, %c3_63, %c0_64, %c0_65] : memref<1x4x8x256xf32, #tpu.memory_space<vmem>>, vector<1x1x8x256xf32>
    %78 = vector.shape_cast %77 : vector<1x1x8x256xf32> to vector<1x8x256xf32>
    %79 = vector.shape_cast %76 : vector<1x8x256xf32> to vector<1x1x8x256xf32>
    tpu.vector_store %arg4[%c0_62, %c3_63, %c0_64, %c0_65], %79 {strides = array<i32>} : memref<1x4x8x256xf32, #tpu.memory_space<vmem>>, vector<1x1x8x256xf32>,
    return
  }
  func.func @transform_0(%arg0: i32) -> i32 {
    %c0_i32 = arith.constant 0 : i32
    %c0_i32_0 = arith.constant 0 : i32
    return %c0_i32 : i32
  }
  func.func @transform_1(%arg0: i32) -> (i32, i32, i32) {
    %c0_i32 = arith.constant 0 : i32
    %c0_i32_0 = arith.constant 0 : i32
    %c0_i32_1 = arith.constant 0 : i32
    %c0_i32_2 = arith.constant 0 : i32
    return %c0_i32, %c0_i32_0, %c0_i32_1 : i32, i32, i32
  }
  func.func @transform_2(%arg0: i32) -> (i32, i32, i32, i32) {
    %c0_i32 = arith.constant 0 : i32
    %c0_i32_0 = arith.constant 0 : i32
    %c0_i32_1 = arith.constant 0 : i32
    %c0_i32_2 = arith.constant 0 : i32
    return %arg0, %c0_i32, %c0_i32_0, %c0_i32_1 : i32, i32, i32, i32
  }
  func.func @transform_3(%arg0: i32) -> (i32, i32, i32, i32) {
    %c0_i32 = arith.constant 0 : i32
    %c0_i32_0 = arith.constant 0 : i32
    %c0_i32_1 = arith.constant 0 : i32
    %c0_i32_2 = arith.constant 0 : i32
    return %arg0, %c0_i32, %c0_i32_0, %c0_i32_1 : i32, i32, i32, i32
  }
}

</mosaic_0001>

<llo_original>
// kernel: sw_forward.1
$region0: #{sw_forward.1}
  #allocation0 [shape = 'u32[]', space=smem, size = 0x4, offset = 0x4, fixed_abs, tag = 'smem constant byte address 0x4 - core index']
  #allocation1 [shape = 'u32[72,128]{1,0:T(1,128)}', space=vmem, size = 0x9000, scoped, tag = 'internal scratch']
  %s0 = inlined_call_operand.vmem [shape: f32[4], index: 0, kind: input, shape index: {}]
  %s1 = inlined_call_operand.vmem [shape: f32[3,256,256], index: 1, kind: input, shape index: {}]
  %s2 = inlined_call_operand.vmem [shape: f32[2,4,8,256], index: 2, kind: input, shape index: {}, may-alias: {2,3}]
  %s3 = inlined_call_operand.vmem [shape: f32[2,4,8,256], index: 3, kind: output, shape index: {}, may-alias: {2,3}]
  %s4 = sld [smem:[#allocation0]]
  $region49: #{sw_forward.1} parent=0
    _
  %s6 = ssub.s32 1, %s4
  %s7 = scalar_select 0, %s6, %s4
  $region1: #{sw_forward.1} parent=0
    #allocation2 [shape = 'u8[512]{0}', space=smem, size = 0x200, scoped, tag = 'input window, operand 0, single buffered']
    #allocation3 [shape = 's32[2]{0}', space=sflag, size = 0x8, scoped, tag = 'scoped memory for sw_forward.1']
    %8 = vsyncpa [#allocation3], 0
    loop: start=0, step=1, limit=4
    $region2: #{sw_forward.1} parent=1 // loop_pre_header
      _
    $region3: #{sw_forward.1} parent=1 // loop_header
      %s10 = sphi 0, %s14
      %p11 = scmp.ge.s32.totalorder %s10, 4
      %s18 = sphi 0, %s18
      %s20 = sphi 0, %s18
      %s21 = sphi 0, %s20
      %s35 = sphi 0, %s21
      %s39 = sphi 0, %s39
      %s41 = sphi 0, %s39
      %s42 = sphi 0, %s41
      %s56 = sphi 0, %s42
      %s62 = sphi 0, %s64
      %s65 = sphi 0, %s62
      %s66 = sphi 0, %s65
      %s82 = sphi 0, %s66
      %s88 = sphi 0, %s90
      %s91 = sphi 0, %s88
      %s92 = sphi 0, %s91
      %s108 = sphi 0, %s92
    $region4: #{sw_forward.1} parent=1 // loop_header_branch
      %13 = sbr.rel (%p11) target = $region8
    $region5: #{sw_forward.1} parent=1 // loop_body
      %s15 = ssub.s32 %s10, 1
      %s16 = ssub.s32 %s10, 2
      %s17 = sadd.s32 %s10, 1
      %s19 = sadd.s32 %s18, 1
      %p22 = scmp.eq.s32.totalorder %s10, 1
      %p23 = scmp.ne.s32.totalorder %s18, %s20
      %p24 = scmp.eq.s32.totalorder %s10, 0
      %p25 = por %p23, %p24
      %p26 = scmp.ne.s32.totalorder %s18, %s20
      %p27 = scmp.eq.s32.totalorder %s15, 1
      %p28 = por %p26, %p27
      %p29 = scmp.ne.s32.totalorder %s20, %s21
      %p30 = scmp.eq.s32.totalorder %s15, 0
      %p31 = por %p29, %p30
      %p32 = scmp.ne.s32.totalorder %s20, %s21
      %p33 = scmp.eq.s32.totalorder %s16, 1
      %p34 = por %p32, %p33
      %p36 = scmp.ne.s32.totalorder %s21, %s35
      %p37 = scmp.eq.s32.totalorder %s16, 0
      %p38 = por %p36, %p37
      %s40 = sadd.s32 %s39, 1
      %p43 = scmp.eq.s32.totalorder %s10, 1
      %p44 = scmp.ne.s32.totalorder %s39, %s41
      %p45 = scmp.eq.s32.totalorder %s10, 0
      %p46 = por %p44, %p45
      %p47 = scmp.ne.s32.totalorder %s39, %s41
      %p48 = scmp.eq.s32.totalorder %s15, 1
      %p49 = por %p47, %p48
      %p50 = scmp.ne.s32.totalorder %s41, %s42
      %p51 = scmp.eq.s32.totalorder %s15, 0
      %p52 = por %p50, %p51
      %p53 = scmp.ne.s32.totalorder %s41, %s42
      %p54 = scmp.eq.s32.totalorder %s16, 1
      %p55 = por %p53, %p54
      %p57 = scmp.ne.s32.totalorder %s42, %s56
      %p58 = scmp.eq.s32.totalorder %s16, 0
      %p59 = por %p57, %p58
      %s60 = ssub.s32 %s10, %s17
      %p61 = scmp.eq.s32.totalorder %s60, 0
      %s63 = sadd.s32 %s62, 1
      %s64 = scalar_select %p61, %s62, %s63
      %p67 = pneg %p61
      %p68 = scmp.eq.s32.totalorder %s10, 1
      %p69 = por %p67, %p68
      %p70 = scmp.ne.s32.totalorder %s62, %s65
      %p71 = scmp.eq.s32.totalorder %s10, 0
      %p72 = por %p70, %p71
      %p73 = scmp.ne.s32.totalorder %s62, %s65
      %p74 = scmp.eq.s32.totalorder %s15, 1
      %p75 = por %p73, %p74
      %p76 = scmp.ne.s32.totalorder %s65, %s66
      %p77 = scmp.eq.s32.totalorder %s15, 0
      %p78 = por %p76, %p77
      %p79 = scmp.ne.s32.totalorder %s65, %s66
      %p80 = scmp.eq.s32.totalorder %s16, 1
      %p81 = por %p79, %p80
      %p83 = scmp.ne.s32.totalorder %s66, %s82
      %p84 = scmp.eq.s32.totalorder %s16, 0
      %p85 = por %p83, %p84
      %s86 = ssub.s32 %s10, %s17
      %p87 = scmp.eq.s32.totalorder %s86, 0
      %s89 = sadd.s32 %s88, 1
      %s90 = scalar_select %p87, %s88, %s89
      %p93 = pneg %p87
      %p94 = scmp.eq.s32.totalorder %s10, 1
      %p95 = por %p93, %p94
      %p96 = scmp.ne.s32.totalorder %s88, %s91
      %p97 = scmp.eq.s32.totalorder %s10, 0
      %p98 = por %p96, %p97
      %p99 = scmp.ne.s32.totalorder %s88, %s91
      %p100 = scmp.eq.s32.totalorder %s15, 1
      %p101 = por %p99, %p100
      %p102 = scmp.ne.s32.totalorder %s91, %s92
      %p103 = scmp.eq.s32.totalorder %s15, 0
      %p104 = por %p102, %p103
      %p105 = scmp.ne.s32.totalorder %s91, %s92
      %p106 = scmp.eq.s32.totalorder %s16, 1
      %p107 = por %p105, %p106
      %p109 = scmp.ne.s32.totalorder %s92, %s108
      %p110 = scmp.eq.s32.totalorder %s16, 0
      %p111 = por %p109, %p110
      %p112 = scmp.le.s32.totalorder 1, %s10
      %p113 = scmp.lt.s32.totalorder %s10, 3
      %p114 = pnand %p112, %p113
      %p115 = pneg %p114
      // Predicated region
      $region9: #{sw_forward.1} parent=5 // pred_check
        _
      $region10: #{sw_forward.1} parent=5 // pred_check_branch
        %117 = sbr.rel (%p114) target = $region12
      $region11: #{sw_forward.1} parent=5 // pred_region
        %s118 = ssub.s32 %s10, 1
        // Predicated region
        $region13: #{sw_forward.1} parent=11 // pred_check
          %p119 = pneg %p31
        $region14: #{sw_forward.1} parent=11 // pred_check_branch
          %121 = sbr.rel (%p119) target = $region16
        $region15: #{sw_forward.1} parent=11 // pred_region
          %123 = vsyncadd [#allocation3], 0
          %s125 = sshll.u32 %s0, 4
          %s126 = int_to_ptr.vmem [resolvable:$true] %s125
          %128 = dma.vmem_to_smem %s126, 16, [#allocation2], [#allocation3]
        $region16: #{sw_forward.1} parent=11 // pred_fallthru
          _
        // Predicated region
        $region17: #{sw_forward.1} parent=11 // pred_check
          %p129 = pneg %p52
        $region18: #{sw_forward.1} parent=11 // pred_check_branch
          %131 = sbr.rel (%p129) target = $region20
        $region19: #{sw_forward.1} parent=11 // pred_region
          _
        $region20: #{sw_forward.1} parent=11 // pred_fallthru
          _
      $region12: #{sw_forward.1} parent=5 // pred_fallthru
        _
      %p132 = scmp.lt.s32.totalorder %s10, 2
      // Predicated region
      $region21: #{sw_forward.1} parent=5 // pred_check
        %p133 = pneg %p132
      $region22: #{sw_forward.1} parent=5 // pred_check_branch
        %135 = sbr.rel (%p133) target = $region24
      $region23: #{sw_forward.1} parent=5 // pred_region
        // Predicated region
        $region25: #{sw_forward.1} parent=23 // pred_check
          %p136 = pneg %p72
        $region26: #{sw_forward.1} parent=23 // pred_check_branch
          %138 = sbr.rel (%p136) target = $region28
        $region27: #{sw_forward.1} parent=23 // pred_region
          %p139 = scmp.lt.s32.totalorder %s10, 1
          %s140 = scalar_select %p139, %s10, 1
          %s141 = smul.addr %s140, 8
          %s142 = smul.addr %s141, 8
          %s143 = scalar_lea.vmem %s2, %s142
        $region28: #{sw_forward.1} parent=23 // pred_fallthru
          _
      $region24: #{sw_forward.1} parent=5 // pred_fallthru
        _
      %p144 = scmp.le.s32.totalorder 1, %s10
      %p145 = scmp.lt.s32.totalorder %s10, 3
      %p146 = pnand %p144, %p145
      %p147 = pneg %p146
      // Predicated region
      $region29: #{sw_forward.1} parent=5 // pred_check
        _
      $region30: #{sw_forward.1} parent=5 // pred_check_branch
        %149 = sbr.rel (%p146) target = $region32
      $region31: #{sw_forward.1} parent=5 // pred_region
        %s150 = ssub.s32 %s10, 1
        // Predicated region
        $region33: #{sw_forward.1} parent=31 // pred_check
          %p151 = pneg %p31
        $region34: #{sw_forward.1} parent=31 // pred_check_branch
          %153 = sbr.rel (%p151) target = $region36
        $region35: #{sw_forward.1} parent=31 // pred_region
          %155 = dma.done [#allocation3], 16
        $region36: #{sw_forward.1} parent=31 // pred_fallthru
          _
        %156 = sfence
        %p157 = pneg %p31
        %p158 = pneg %p28
        %p159 = pneg %p52
        %p160 = pneg %p49
        %p161 = scmp.lt.s32.totalorder %s15, 1
        %s162 = scalar_select %p161, %s15, 1
        %s163 = smul.addr %s162, 8
        %s164 = smul.addr %s163, 8
        %s165 = scalar_lea.vmem %s2, %s164
        %p166 = pneg %p78
        %p167 = pneg %p75
        %p168 = pneg %p104
        %p169 = pneg %p101
        %p170 = scmp.lt.s32.totalorder %s15, 1
        %s171 = scalar_select %p170, %s15, 1
        %s172 = smul.addr %s171, 8
        %s173 = smul.addr %s172, 8
        %s174 = scalar_lea.vmem %s3, %s173
        %p175 = scmp.lt.s32.totalorder %s15, 1
        %s176 = scalar_select %p175, %s15, 1
        %s177 = smul.addr %s176, 8
        %s178 = smul.addr %s177, 8
        %s179 = scalar_lea.vmem %s2, %s178
        %p180 = scmp.lt.s32.totalorder %s15, 1
        %s181 = scalar_select %p180, %s15, 1
        %s182 = smul.addr %s181, 8
        %s183 = smul.addr %s182, 8
        %s184 = scalar_lea.vmem %s3, %s183
        %s185 = sld [smem:[#allocation2]]
        %v186 = vld [vmem:[%s179] sm:$0xff]
        %v187 = vld [vmem:[%s179 + $0x8] sm:$0xff]
        %v188 = vstv %s185
        %v189 = vmul.f32 %v188, %v186
        %v190 = vmul.f32 %v188, %v187
        %s191 = sld [smem:[#allocation2 + $0x1]]
        %s192 = scalar_lea.vmem %s179, 16
        %v193 = vld [vmem:[%s192] sm:$0xff]
        %v194 = vld [vmem:[%s192 + $0x8] sm:$0xff]
        %v195 = vstv %s191
        %v196 = vmul.f32 %v195, %v193
        %v197 = vmul.f32 %v195, %v194
        %v198 = vadd.f32 %v189, %v196
        %v199 = vadd.f32 %v190, %v197
        %s200 = sld [smem:[#allocation2 + $0x2]]
        %s201 = scalar_lea.vmem %s179, 32
        %v202 = vld [vmem:[%s201] sm:$0xff]
        %v203 = vld [vmem:[%s201 + $0x8] sm:$0xff]
        %v204 = vstv %s200
        %v205 = vmul.f32 %v204, %v202
        %v206 = vmul.f32 %v204, %v203
        %v207 = vadd.f32 %v198, %v205
        %v208 = vadd.f32 %v199, %v206
        %s209 = sld [smem:[#allocation2 + $0x3]]
        %s210 = scalar_lea.vmem %s179, 48
        %v211 = vld [vmem:[%s210] sm:$0xff]
        %v212 = vld [vmem:[%s210 + $0x8] sm:$0xff]
        %v213 = vstv %s209
        %v214 = vmul.f32 %v213, %v211
        %v215 = vmul.f32 %v213, %v212
        %v216 = vadd.f32 %v207, %v214
        %v217 = vadd.f32 %v208, %v215
        %v218 = vld [vmem:[%s1] sm:$0xff]
        %v219 = vld [vmem:[%s1 + $0x8] sm:$0xff]
        %v220 = vld [vmem:[%s1 + $0x10] sm:$0xff]
        %v221 = vld [vmem:[%s1 + $0x18] sm:$0xff]
        %v222 = vld [vmem:[%s1 + $0x20] sm:$0xff]
        %v223 = vld [vmem:[%s1 + $0x28] sm:$0xff]
        %v224 = vld [vmem:[%s1 + $0x30] sm:$0xff]
        %v225 = vld [vmem:[%s1 + $0x38] sm:$0xff]
        %v226 = vld [vmem:[%s1 + $0x40] sm:$0xff]
        %v227 = vld [vmem:[%s1 + $0x48] sm:$0xff]
        %v228 = vld [vmem:[%s1 + $0x50] sm:$0xff]
        %v229 = vld [vmem:[%s1 + $0x58] sm:$0xff]
        %v230 = vld [vmem:[%s1 + $0x60] sm:$0xff]
        %v231 = vld [vmem:[%s1 + $0x68] sm:$0xff]
        %v232 = vld [vmem:[%s1 + $0x70] sm:$0xff]
        %v233 = vld [vmem:[%s1 + $0x78] sm:$0xff]
        %v234 = vld [vmem:[%s1 + $0x80] sm:$0xff]
        %v235 = vld [vmem:[%s1 + $0x88] sm:$0xff]
        %v236 = vld [vmem:[%s1 + $0x90] sm:$0xff]
        %v237 = vld [vmem:[%s1 + $0x98] sm:$0xff]
        %v238 = vld [vmem:[%s1 + $0xa0] sm:$0xff]
        %v239 = vld [vmem:[%s1 + $0xa8] sm:$0xff]
        %v240 = vld [vmem:[%s1 + $0xb0] sm:$0xff]
        %v241 = vld [vmem:[%s1 + $0xb8] sm:$0xff]
        %v242 = vld [vmem:[%s1 + $0xc0] sm:$0xff]
        %v243 = vld [vmem:[%s1 + $0xc8] sm:$0xff]
        %v244 = vld [vmem:[%s1 + $0xd0] sm:$0xff]
        %v245 = vld [vmem:[%s1 + $0xd8] sm:$0xff]
        %v246 = vld [vmem:[%s1 + $0xe0] sm:$0xff]
        %v247 = vld [vmem:[%s1 + $0xe8] sm:$0xff]
        %v248 = vld [vmem:[%s1 + $0xf0] sm:$0xff]
        %v249 = vld [vmem:[%s1 + $0xf8] sm:$0xff]
        %v250 = vld [vmem:[%s1 + $0x100] sm:$0xff]
        %v251 = vld [vmem:[%s1 + $0x108] sm:$0xff]
        %v252 = vld [vmem:[%s1 + $0x110] sm:$0xff]
        %v253 = vld [vmem:[%s1 + $0x118] sm:$0xff]
        %v254 = vld [vmem:[%s1 + $0x120] sm:$0xff]
        %v255 = vld [vmem:[%s1 + $0x128] sm:$0xff]
        %v256 = vld [vmem:[%s1 + $0x130] sm:$0xff]
        %v257 = vld [vmem:[%s1 + $0x138] sm:$0xff]
        %v258 = vld [vmem:[%s1 + $0x140] sm:$0xff]
        %v259 = vld [vmem:[%s1 + $0x148] sm:$0xff]
        %v260 = vld [vmem:[%s1 + $0x150] sm:$0xff]
        %v261 = vld [vmem:[%s1 + $0x158] sm:$0xff]
        %v262 = vld [vmem:[%s1 + $0x160] sm:$0xff]
        %v263 = vld [vmem:[%s1 + $0x168] sm:$0xff]
        %v264 = vld [vmem:[%s1 + $0x170] sm:$0xff]
        %v265 = vld [vmem:[%s1 + $0x178] sm:$0xff]
        %v266 = vld [vmem:[%s1 + $0x180] sm:$0xff]
        %v267 = vld [vmem:[%s1 + $0x188] sm:$0xff]
        %v268 = vld [vmem:[%s1 + $0x190] sm:$0xff]
        %v269 = vld [vmem:[%s1 + $0x198] sm:$0xff]
        %v270 = vld [vmem:[%s1 + $0x1a0] sm:$0xff]
        %v271 = vld [vmem:[%s1 + $0x1a8] sm:$0xff]
        %v272 = vld [vmem:[%s1 + $0x1b0] sm:$0xff]
        %v273 = vld [vmem:[%s1 + $0x1b8] sm:$0xff]
        %v274 = vld [vmem:[%s1 + $0x1c0] sm:$0xff]
        %v275 = vld [vmem:[%s1 + $0x1c8] sm:$0xff]
        %v276 = vld [vmem:[%s1 + $0x1d0] sm:$0xff]
        %v277 = vld [vmem:[%s1 + $0x1d8] sm:$0xff]
        %v278 = vld [vmem:[%s1 + $0x1e0] sm:$0xff]
        %v279 = vld [vmem:[%s1 + $0x1e8] sm:$0xff]
        %v280 = vld [vmem:[%s1 + $0x1f0] sm:$0xff]
        %v281 = vld [vmem:[%s1 + $0x1f8] sm:$0xff]
        %v282 = vand.u32 %v248, 4294901760
        %283 = vmatpush.msra.mxu0 %v282
        %v284 = vand.u32 %v246, 4294901760
        %285 = vmatpush.msra.mxu0 %v284
        %v286 = vand.u32 %v244, 4294901760
        %287 = vmatpush.msra.mxu0 %v286
        %v288 = vand.u32 %v242, 4294901760
        %289 = vmatpush.msra.mxu0 %v288
        %v290 = vand.u32 %v240, 4294901760
        %291 = vmatpush.msra.mxu0 %v290
        %v292 = vand.u32 %v238, 4294901760
        %293 = vmatpush.msra.mxu0 %v292
        %v294 = vand.u32 %v236, 4294901760
        %295 = vmatpush.msra.mxu0 %v294
        %v296 = vand.u32 %v234, 4294901760
        %297 = vmatpush.msra.mxu0 %v296
        %v298 = vand.u32 %v232, 4294901760
        %299 = vmatpush.msra.mxu0 %v298
        %v300 = vand.u32 %v230, 4294901760
        %301 = vmatpush.msra.mxu0 %v300
        %v302 = vand.u32 %v228, 4294901760
        %303 = vmatpush.msra.mxu0 %v302
        %v304 = vand.u32 %v226, 4294901760
        %305 = vmatpush.msra.mxu0 %v304
        %v306 = vand.u32 %v224, 4294901760
        %307 = vmatpush.msra.mxu0 %v306
        %v308 = vand.u32 %v222, 4294901760
        %309 = vmatpush.msra.mxu0 %v308
        %v310 = vand.u32 %v220, 4294901760
        %311 = vmatpush.msra.mxu0 %v310
        %v312 = vand.u32 %v218, 4294901760
        %313 = vmatpush.msra.mxu0 %v312
        %v314 = vand.u32 %v216, 4294901760
        %v315 = vsub.f32 %v216, %v314
        %v316 = vand.u32 %v315, 4294901760
        %v317 = vsub.f32 %v315, %v316
        %v318 = vand.u32 %v317, 4294901760
        %319 = vmatmul.f32.gmra.mxu0 %v318
        %v320 = vpop.f32.mrf.mxu0
        %v321 = vadd.f32 0.0, %v320
        %322 = vdwg.mxu0
        %v323 = vand.u32 %v248, 4294901760
        %v324 = vsub.f32 %v248, %v323
        %v325 = vand.u32 %v324, 4294901760
        %v326 = vsub.f32 %v324, %v325
        %v327 = vand.u32 %v326, 4294901760
        %328 = vmatpush.msra.mxu0 %v327
        %v329 = vand.u32 %v246, 4294901760
        %v330 = vsub.f32 %v246, %v329
        %v331 = vand.u32 %v330, 4294901760
        %v332 = vsub.f32 %v330, %v331
        %v333 = vand.u32 %v332, 4294901760
        %334 = vmatpush.msra.mxu0 %v333
        %v335 = vand.u32 %v244, 4294901760
        %v336 = vsub.f32 %v244, %v335
        %v337 = vand.u32 %v336, 4294901760
        %v338 = vsub.f32 %v336, %v337
        %v339 = vand.u32 %v338, 4294901760
        %340 = vmatpush.msra.mxu0 %v339
        %v341 = vand.u32 %v242, 4294901760
        %v342 = vsub.f32 %v242, %v341
        %v343 = vand.u32 %v342, 4294901760
        %v344 = vsub.f32 %v342, %v343
        %v345 = vand.u32 %v344, 4294901760
        %346 = vmatpush.msra.mxu0 %v345
        %v347 = vand.u32 %v240, 4294901760
        %v348 = vsub.f32 %v240, %v347
        %v349 = vand.u32 %v348, 4294901760
        %v350 = vsub.f32 %v348, %v349
        %v351 = vand.u32 %v350, 4294901760
        %352 = vmatpush.msra.mxu0 %v351
        %v353 = vand.u32 %v238, 4294901760
        %v354 = vsub.f32 %v238, %v353
        %v355 = vand.u32 %v354, 4294901760
        %v356 = vsub.f32 %v354, %v355
        %v357 = vand.u32 %v356, 4294901760
        %358 = vmatpush.msra.mxu0 %v357
        %v359 = vand.u32 %v236, 4294901760
        %v360 = vsub.f32 %v236, %v359
        %v361 = vand.u32 %v360, 4294901760
        %v362 = vsub.f32 %v360, %v361
        %v363 = vand.u32 %v362, 4294901760
        %364 = vmatpush.msra.mxu0 %v363
        %v365 = vand.u32 %v234, 4294901760
        %v366 = vsub.f32 %v234, %v365
        %v367 = vand.u32 %v366, 4294901760
        %v368 = vsub.f32 %v366, %v367
        %v369 = vand.u32 %v368, 4294901760
        %370 = vmatpush.msra.mxu0 %v369
        %v371 = vand.u32 %v232, 4294901760
        %v372 = vsub.f32 %v232, %v371
        %v373 = vand.u32 %v372, 4294901760
        %v374 = vsub.f32 %v372, %v373
        %v375 = vand.u32 %v374, 4294901760
        %376 = vmatpush.msra.mxu0 %v375
        %v377 = vand.u32 %v230, 4294901760
        %v378 = vsub.f32 %v230, %v377
        %v379 = vand.u32 %v378, 4294901760
        %v380 = vsub.f32 %v378, %v379
        %v381 = vand.u32 %v380, 4294901760
        %382 = vmatpush.msra.mxu0 %v381
        %v383 = vand.u32 %v228, 4294901760
        %v384 = vsub.f32 %v228, %v383
        %v385 = vand.u32 %v384, 4294901760
        %v386 = vsub.f32 %v384, %v385
        %v387 = vand.u32 %v386, 4294901760
        %388 = vmatpush.msra.mxu0 %v387
        %v389 = vand.u32 %v226, 4294901760
        %v390 = vsub.f32 %v226, %v389
        %v391 = vand.u32 %v390, 4294901760
        %v392 = vsub.f32 %v390, %v391
        %v393 = vand.u32 %v392, 4294901760
        %394 = vmatpush.msra.mxu0 %v393
        %v395 = vand.u32 %v224, 4294901760
        %v396 = vsub.f32 %v224, %v395
        %v397 = vand.u32 %v396, 4294901760
        %v398 = vsub.f32 %v396, %v397
        %v399 = vand.u32 %v398, 4294901760
        %400 = vmatpush.msra.mxu0 %v399
        %v401 = vand.u32 %v222, 4294901760
        %v402 = vsub.f32 %v222, %v401
        %v403 = vand.u32 %v402, 4294901760
        %v404 = vsub.f32 %v402, %v403
        %v405 = vand.u32 %v404, 4294901760
        %406 = vmatpush.msra.mxu0 %v405
        %v407 = vand.u32 %v220, 4294901760
        %v408 = vsub.f32 %v220, %v407
        %v409 = vand.u32 %v408, 4294901760
        %v410 = vsub.f32 %v408, %v409
        %v411 = vand.u32 %v410, 4294901760
        %412 = vmatpush.msra.mxu0 %v411
        %v413 = vand.u32 %v218, 4294901760
        %v414 = vsub.f32 %v218, %v413
        %v415 = vand.u32 %v414, 4294901760
        %v416 = vsub.f32 %v414, %v415
        %v417 = vand.u32 %v416, 4294901760
        %418 = vmatpush.msra.mxu0 %v417
        %v419 = vand.u32 %v216, 4294901760
        %420 = vmatmul.f32.gmra.mxu0 %v419
        %v421 = vpop.f32.mrf.mxu0
        %v422 = vadd.f32 %v321, %v421
        %423 = vdwg.mxu0
        %v424 = vand.u32 %v248, 4294901760
        %v425 = vsub.f32 %v248, %v424
        %426 = vmatpush.msra.mxu0 %v425
        %v427 = vand.u32 %v246, 4294901760
        %v428 = vsub.f32 %v246, %v427
        %429 = vmatpush.msra.mxu0 %v428
        %v430 = vand.u32 %v244, 4294901760
        %v431 = vsub.f32 %v244, %v430
        %432 = vmatpush.msra.mxu0 %v431
        %v433 = vand.u32 %v242, 4294901760
        %v434 = vsub.f32 %v242, %v433
        %435 = vmatpush.msra.mxu0 %v434
        %v436 = vand.u32 %v240, 4294901760
        %v437 = vsub.f32 %v240, %v436
        %438 = vmatpush.msra.mxu0 %v437
        %v439 = vand.u32 %v238, 4294901760
        %v440 = vsub.f32 %v238, %v439
        %441 = vmatpush.msra.mxu0 %v440
        %v442 = vand.u32 %v236, 4294901760
        %v443 = vsub.f32 %v236, %v442
        %444 = vmatpush.msra.mxu0 %v443
        %v445 = vand.u32 %v234, 4294901760
        %v446 = vsub.f32 %v234, %v445
        %447 = vmatpush.msra.mxu0 %v446
        %v448 = vand.u32 %v232, 4294901760
        %v449 = vsub.f32 %v232, %v448
        %450 = vmatpush.msra.mxu0 %v449
        %v451 = vand.u32 %v230, 4294901760
        %v452 = vsub.f32 %v230, %v451
        %453 = vmatpush.msra.mxu0 %v452
        %v454 = vand.u32 %v228, 4294901760
        %v455 = vsub.f32 %v228, %v454
        %456 = vmatpush.msra.mxu0 %v455
        %v457 = vand.u32 %v226, 4294901760
        %v458 = vsub.f32 %v226, %v457
        %459 = vmatpush.msra.mxu0 %v458
        %v460 = vand.u32 %v224, 4294901760
        %v461 = vsub.f32 %v224, %v460
        %462 = vmatpush.msra.mxu0 %v461
        %v463 = vand.u32 %v222, 4294901760
        %v464 = vsub.f32 %v222, %v463
        %465 = vmatpush.msra.mxu0 %v464
        %v466 = vand.u32 %v220, 4294901760
        %v467 = vsub.f32 %v220, %v466
        %468 = vmatpush.msra.mxu0 %v467
        %v469 = vand.u32 %v218, 4294901760
        %v470 = vsub.f32 %v218, %v469
        %471 = vmatpush.msra.mxu0 %v470
        %v472 = vand.u32 %v216, 4294901760
        %v473 = vsub.f32 %v216, %v472
        %474 = vmatmul.f32.gmra.mxu0 %v473
        %v475 = vpop.f32.mrf.mxu0
        %v476 = vadd.f32 %v422, %v475
        %477 = vdwg.mxu0
        %v478 = vand.u32 %v248, 4294901760
        %479 = vmatpush.msra.mxu0 %v478
        %v480 = vand.u32 %v246, 4294901760
        %481 = vmatpush.msra.mxu0 %v480
        %v482 = vand.u32 %v244, 4294901760
        %483 = vmatpush.msra.mxu0 %v482
        %v484 = vand.u32 %v242, 4294901760
        %485 = vmatpush.msra.mxu0 %v484
        %v486 = vand.u32 %v240, 4294901760
        %487 = vmatpush.msra.mxu0 %v486
        %v488 = vand.u32 %v238, 4294901760
        %489 = vmatpush.msra.mxu0 %v488
        %v490 = vand.u32 %v236, 4294901760
        %491 = vmatpush.msra.mxu0 %v490
        %v492 = vand.u32 %v234, 4294901760
        %493 = vmatpush.msra.mxu0 %v492
        %v494 = vand.u32 %v232, 4294901760
        %495 = vmatpush.msra.mxu0 %v494
        %v496 = vand.u32 %v230, 4294901760
        %497 = vmatpush.msra.mxu0 %v496
        %v498 = vand.u32 %v228, 4294901760
        %499 = vmatpush.msra.mxu0 %v498
        %v500 = vand.u32 %v226, 4294901760
        %501 = vmatpush.msra.mxu0 %v500
        %v502 = vand.u32 %v224, 4294901760
        %503 = vmatpush.msra.mxu0 %v502
        %v504 = vand.u32 %v222, 4294901760
        %505 = vmatpush.msra.mxu0 %v504
        %v506 = vand.u32 %v220, 4294901760
        %507 = vmatpush.msra.mxu0 %v506
        %v508 = vand.u32 %v218, 4294901760
        %509 = vmatpush.msra.mxu0 %v508
        %v510 = vand.u32 %v216, 4294901760
        %v511 = vsub.f32 %v216, %v510
        %v512 = vand.u32 %v511, 4294901760
        %513 = vmatmul.f32.gmra.mxu0 %v512
        %v514 = vpop.f32.mrf.mxu0
        %v515 = vadd.f32 %v476, %v514
        %516 = vdwg.mxu0
        %v517 = vand.u32 %v248, 4294901760
        %v518 = vsub.f32 %v248, %v517
        %v519 = vand.u32 %v518, 4294901760
        %520 = vmatpush.msra.mxu0 %v519
        %v521 = vand.u32 %v246, 4294901760
        %v522 = vsub.f32 %v246, %v521
        %v523 = vand.u32 %v522, 4294901760
        %524 = vmatpush.msra.mxu0 %v523
        %v525 = vand.u32 %v244, 4294901760
        %v526 = vsub.f32 %v244, %v525
        %v527 = vand.u32 %v526, 4294901760
        %528 = vmatpush.msra.mxu0 %v527
        %v529 = vand.u32 %v242, 4294901760
        %v530 = vsub.f32 %v242, %v529
        %v531 = vand.u32 %v530, 4294901760
        %532 = vmatpush.msra.mxu0 %v531
        %v533 = vand.u32 %v240, 4294901760
        %v534 = vsub.f32 %v240, %v533
        %v535 = vand.u32 %v534, 4294901760
        %536 = vmatpush.msra.mxu0 %v535
        %v537 = vand.u32 %v238, 4294901760
        %v538 = vsub.f32 %v238, %v537
        %v539 = vand.u32 %v538, 4294901760
        %540 = vmatpush.msra.mxu0 %v539
        %v541 = vand.u32 %v236, 4294901760
        %v542 = vsub.f32 %v236, %v541
        %v543 = vand.u32 %v542, 4294901760
        %544 = vmatpush.msra.mxu0 %v543
        %v545 = vand.u32 %v234, 4294901760
        %v546 = vsub.f32 %v234, %v545
        %v547 = vand.u32 %v546, 4294901760
        %548 = vmatpush.msra.mxu0 %v547
        %v549 = vand.u32 %v232, 4294901760
        %v550 = vsub.f32 %v232, %v549
        %v551 = vand.u32 %v550, 4294901760
        %552 = vmatpush.msra.mxu0 %v551
        %v553 = vand.u32 %v230, 4294901760
        %v554 = vsub.f32 %v230, %v553
        %v555 = vand.u32 %v554, 4294901760
        %556 = vmatpush.msra.mxu0 %v555
        %v557 = vand.u32 %v228, 4294901760
        %v558 = vsub.f32 %v228, %v557
        %v559 = vand.u32 %v558, 4294901760
        %560 = vmatpush.msra.mxu0 %v559
        %v561 = vand.u32 %v226, 4294901760
        %v562 = vsub.f32 %v226, %v561
        %v563 = vand.u32 %v562, 4294901760
        %564 = vmatpush.msra.mxu0 %v563
        %v565 = vand.u32 %v224, 4294901760
        %v566 = vsub.f32 %v224, %v565
        %v567 = vand.u32 %v566, 4294901760
        %568 = vmatpush.msra.mxu0 %v567
        %v569 = vand.u32 %v222, 4294901760
        %v570 = vsub.f32 %v222, %v569
        %v571 = vand.u32 %v570, 4294901760
        %572 = vmatpush.msra.mxu0 %v571
        %v573 = vand.u32 %v220, 4294901760
        %v574 = vsub.f32 %v220, %v573
        %v575 = vand.u32 %v574, 4294901760
        %576 = vmatpush.msra.mxu0 %v575
        %v577 = vand.u32 %v218, 4294901760
        %v578 = vsub.f32 %v218, %v577
        %v579 = vand.u32 %v578, 4294901760
        %580 = vmatpush.msra.mxu0 %v579
        %v581 = vand.u32 %v216, 4294901760
        %582 = vmatmul.f32.gmra.mxu0 %v581
        %v583 = vpop.f32.mrf.mxu0
        %v584 = vadd.f32 %v515, %v583
        %585 = vdwg.mxu0
        %v586 = vand.u32 %v248, 4294901760
        %587 = vmatpush.msra.mxu0 %v586
        %v588 = vand.u32 %v246, 4294901760
        %589 = vmatpush.msra.mxu0 %v588
        %v590 = vand.u32 %v244, 4294901760
        %591 = vmatpush.msra.mxu0 %v590
        %v592 = vand.u32 %v242, 4294901760
        %593 = vmatpush.msra.mxu0 %v592
        %v594 = vand.u32 %v240, 4294901760
        %595 = vmatpush.msra.mxu0 %v594
        %v596 = vand.u32 %v238, 4294901760
        %597 = vmatpush.msra.mxu0 %v596
        %v598 = vand.u32 %v236, 4294901760
        %599 = vmatpush.msra.mxu0 %v598
        %v600 = vand.u32 %v234, 4294901760
        %601 = vmatpush.msra.mxu0 %v600
        %v602 = vand.u32 %v232, 4294901760
        %603 = vmatpush.msra.mxu0 %v602
        %v604 = vand.u32 %v230, 4294901760
        %605 = vmatpush.msra.mxu0 %v604
        %v606 = vand.u32 %v228, 4294901760
        %607 = vmatpush.msra.mxu0 %v606
        %v608 = vand.u32 %v226, 4294901760
        %609 = vmatpush.msra.mxu0 %v608
        %v610 = vand.u32 %v224, 4294901760
        %611 = vmatpush.msra.mxu0 %v610
        %v612 = vand.u32 %v222, 4294901760
        %613 = vmatpush.msra.mxu0 %v612
        %v614 = vand.u32 %v220, 4294901760
        %615 = vmatpush.msra.mxu0 %v614
        %v616 = vand.u32 %v218, 4294901760
        %617 = vmatpush.msra.mxu0 %v616
        %v618 = vand.u32 %v216, 4294901760
        %619 = vmatmul.f32.gmra.mxu0 %v618
        %v620 = vpop.f32.mrf.mxu0
        %v621 = vadd.f32 %v584, %v620
        %622 = vdwg.mxu0
        %v623 = vand.u32 %v280, 4294901760
        %624 = vmatpush.msra.mxu0 %v623
        %v625 = vand.u32 %v278, 4294901760
        %626 = vmatpush.msra.mxu0 %v625
        %v627 = vand.u32 %v276, 4294901760
        %628 = vmatpush.msra.mxu0 %v627
        %v629 = vand.u32 %v274, 4294901760
        %630 = vmatpush.msra.mxu0 %v629
        %v631 = vand.u32 %v272, 4294901760
        %632 = vmatpush.msra.mxu0 %v631
        %v633 = vand.u32 %v270, 4294901760
        %634 = vmatpush.msra.mxu0 %v633
        %v635 = vand.u32 %v268, 4294901760
        %636 = vmatpush.msra.mxu0 %v635
        %v637 = vand.u32 %v266, 4294901760
        %638 = vmatpush.msra.mxu0 %v637
        %v639 = vand.u32 %v264, 4294901760
        %640 = vmatpush.msra.mxu0 %v639
        %v641 = vand.u32 %v262, 4294901760
        %642 = vmatpush.msra.mxu0 %v641
        %v643 = vand.u32 %v260, 4294901760
        %644 = vmatpush.msra.mxu0 %v643
        %v645 = vand.u32 %v258, 4294901760
        %646 = vmatpush.msra.mxu0 %v645
        %v647 = vand.u32 %v256, 4294901760
        %648 = vmatpush.msra.mxu0 %v647
        %v649 = vand.u32 %v254, 4294901760
        %650 = vmatpush.msra.mxu0 %v649
        %v651 = vand.u32 %v252, 4294901760
        %652 = vmatpush.msra.mxu0 %v651
        %v653 = vand.u32 %v250, 4294901760
        %654 = vmatpush.msra.mxu0 %v653
        %v655 = vand.u32 %v217, 4294901760
        %v656 = vsub.f32 %v217, %v655
        %v657 = vand.u32 %v656, 4294901760
        %v658 = vsub.f32 %v656, %v657
        %v659 = vand.u32 %v658, 4294901760
        %660 = vmatmul.f32.gmra.mxu0 %v659
        %v661 = vpop.f32.mrf.mxu0
        %v662 = vadd.f32 %v621, %v661
        %663 = vdwg.mxu0
        %v664 = vand.u32 %v280, 4294901760
        %v665 = vsub.f32 %v280, %v664
        %v666 = vand.u32 %v665, 4294901760
        %v667 = vsub.f32 %v665, %v666
        %v668 = vand.u32 %v667, 4294901760
        %669 = vmatpush.msra.mxu0 %v668
        %v670 = vand.u32 %v278, 4294901760
        %v671 = vsub.f32 %v278, %v670
        %v672 = vand.u32 %v671, 4294901760
        %v673 = vsub.f32 %v671, %v672
        %v674 = vand.u32 %v673, 4294901760
        %675 = vmatpush.msra.mxu0 %v674
        %v676 = vand.u32 %v276, 4294901760
        %v677 = vsub.f32 %v276, %v676
        %v678 = vand.u32 %v677, 4294901760
        %v679 = vsub.f32 %v677, %v678
        %v680 = vand.u32 %v679, 4294901760
        %681 = vmatpush.msra.mxu0 %v680
        %v682 = vand.u32 %v274, 4294901760
        %v683 = vsub.f32 %v274, %v682
        %v684 = vand.u32 %v683, 4294901760
        %v685 = vsub.f32 %v683, %v684
        %v686 = vand.u32 %v685, 4294901760
        %687 = vmatpush.msra.mxu0 %v686
        %v688 = vand.u32 %v272, 4294901760
        %v689 = vsub.f32 %v272, %v688
        %v690 = vand.u32 %v689, 4294901760
        %v691 = vsub.f32 %v689, %v690
        %v692 = vand.u32 %v691, 4294901760
        %693 = vmatpush.msra.mxu0 %v692
        %v694 = vand.u32 %v270, 4294901760
        %v695 = vsub.f32 %v270, %v694
        %v696 = vand.u32 %v695, 4294901760
        %v697 = vsub.f32 %v695, %v696
        %v698 = vand.u32 %v697, 4294901760
        %699 = vmatpush.msra.mxu0 %v698
        %v700 = vand.u32 %v268, 4294901760
        %v701 = vsub.f32 %v268, %v700
        %v702 = vand.u32 %v701, 4294901760
        %v703 = vsub.f32 %v701, %v702
        %v704 = vand.u32 %v703, 4294901760
        %705 = vmatpush.msra.mxu0 %v704
        %v706 = vand.u32 %v266, 4294901760
        %v707 = vsub.f32 %v266, %v706
        %v708 = vand.u32 %v707, 4294901760
        %v709 = vsub.f32 %v707, %v708
        %v710 = vand.u32 %v709, 4294901760
        %711 = vmatpush.msra.mxu0 %v710
        %v712 = vand.u32 %v264, 4294901760
        %v713 = vsub.f32 %v264, %v712
        %v714 = vand.u32 %v713, 4294901760
        %v715 = vsub.f32 %v713, %v714
        %v716 = vand.u32 %v715, 4294901760
        %717 = vmatpush.msra.mxu0 %v716
        %v718 = vand.u32 %v262, 4294901760
        %v719 = vsub.f32 %v262, %v718
        %v720 = vand.u32 %v719, 4294901760
        %v721 = vsub.f32 %v719, %v720
        %v722 = vand.u32 %v721, 4294901760
        %723 = vmatpush.msra.mxu0 %v722
        %v724 = vand.u32 %v260, 4294901760
        %v725 = vsub.f32 %v260, %v724
        %v726 = vand.u32 %v725, 4294901760
        %v727 = vsub.f32 %v725, %v726
        %v728 = vand.u32 %v727, 4294901760
        %729 = vmatpush.msra.mxu0 %v728
        %v730 = vand.u32 %v258, 4294901760
        %v731 = vsub.f32 %v258, %v730
        %v732 = vand.u32 %v731, 4294901760
        %v733 = vsub.f32 %v731, %v732
        %v734 = vand.u32 %v733, 4294901760
        %735 = vmatpush.msra.mxu0 %v734
        %v736 = vand.u32 %v256, 4294901760
        %v737 = vsub.f32 %v256, %v736
        %v738 = vand.u32 %v737, 4294901760
        %v739 = vsub.f32 %v737, %v738
        %v740 = vand.u32 %v739, 4294901760
        %741 = vmatpush.msra.mxu0 %v740
        %v742 = vand.u32 %v254, 4294901760
        %v743 = vsub.f32 %v254, %v742
        %v744 = vand.u32 %v743, 4294901760
        %v745 = vsub.f32 %v743, %v744
        %v746 = vand.u32 %v745, 4294901760
        %747 = vmatpush.msra.mxu0 %v746
        %v748 = vand.u32 %v252, 4294901760
        %v749 = vsub.f32 %v252, %v748
        %v750 = vand.u32 %v749, 4294901760
        %v751 = vsub.f32 %v749, %v750
        %v752 = vand.u32 %v751, 4294901760
        %753 = vmatpush.msra.mxu0 %v752
        %v754 = vand.u32 %v250, 4294901760
        %v755 = vsub.f32 %v250, %v754
        %v756 = vand.u32 %v755, 4294901760
        %v757 = vsub.f32 %v755, %v756
        %v758 = vand.u32 %v757, 4294901760
        %759 = vmatpush.msra.mxu0 %v758
        %v760 = vand.u32 %v217, 4294901760
        %761 = vmatmul.f32.gmra.mxu0 %v760
        %v762 = vpop.f32.mrf.mxu0
        %v763 = vadd.f32 %v662, %v762
        %764 = vdwg.mxu0
        %v765 = vand.u32 %v280, 4294901760
        %v766 = vsub.f32 %v280, %v765
        %767 = vmatpush.msra.mxu0 %v766
        %v768 = vand.u32 %v278, 4294901760
        %v769 = vsub.f32 %v278, %v768
        %770 = vmatpush.msra.mxu0 %v769
        %v771 = vand.u32 %v276, 4294901760
        %v772 = vsub.f32 %v276, %v771
        %773 = vmatpush.msra.mxu0 %v772
        %v774 = vand.u32 %v274, 4294901760
        %v775 = vsub.f32 %v274, %v774
        %776 = vmatpush.msra.mxu0 %v775
        %v777 = vand.u32 %v272, 4294901760
        %v778 = vsub.f32 %v272, %v777
        %779 = vmatpush.msra.mxu0 %v778
        %v780 = vand.u32 %v270, 4294901760
        %v781 = vsub.f32 %v270, %v780
        %782 = vmatpush.msra.mxu0 %v781
        %v783 = vand.u32 %v268, 4294901760
        %v784 = vsub.f32 %v268, %v783
        %785 = vmatpush.msra.mxu0 %v784
        %v786 = vand.u32 %v266, 4294901760
        %v787 = vsub.f32 %v266, %v786
        %788 = vmatpush.msra.mxu0 %v787
        %v789 = vand.u32 %v264, 4294901760
        %v790 = vsub.f32 %v264, %v789
        %791 = vmatpush.msra.mxu0 %v790
        %v792 = vand.u32 %v262, 4294901760
        %v793 = vsub.f32 %v262, %v792
        %794 = vmatpush.msra.mxu0 %v793
        %v795 = vand.u32 %v260, 4294901760
        %v796 = vsub.f32 %v260, %v795
        %797 = vmatpush.msra.mxu0 %v796
        %v798 = vand.u32 %v258, 4294901760
        %v799 = vsub.f32 %v258, %v798
        %800 = vmatpush.msra.mxu0 %v799
        %v801 = vand.u32 %v256, 4294901760
        %v802 = vsub.f32 %v256, %v801
        %803 = vmatpush.msra.mxu0 %v802
        %v804 = vand.u32 %v254, 4294901760
        %v805 = vsub.f32 %v254, %v804
        %806 = vmatpush.msra.mxu0 %v805
        %v807 = vand.u32 %v252, 4294901760
        %v808 = vsub.f32 %v252, %v807
        %809 = vmatpush.msra.mxu0 %v808
        %v810 = vand.u32 %v250, 4294901760
        %v811 = vsub.f32 %v250, %v810
        %812 = vmatpush.msra.mxu0 %v811
        %v813 = vand.u32 %v217, 4294901760
        %v814 = vsub.f32 %v217, %v813
        %815 = vmatmul.f32.gmra.mxu0 %v814
        %v816 = vpop.f32.mrf.mxu0
        %v817 = vadd.f32 %v763, %v816
        %818 = vdwg.mxu0
        %v819 = vand.u32 %v280, 4294901760
        %820 = vmatpush.msra.mxu0 %v819
        %v821 = vand.u32 %v278, 4294901760
        %822 = vmatpush.msra.mxu0 %v821
        %v823 = vand.u32 %v276, 4294901760
        %824 = vmatpush.msra.mxu0 %v823
        %v825 = vand.u32 %v274, 4294901760
        %826 = vmatpush.msra.mxu0 %v825
        %v827 = vand.u32 %v272, 4294901760
        %828 = vmatpush.msra.mxu0 %v827
        %v829 = vand.u32 %v270, 4294901760
        %830 = vmatpush.msra.mxu0 %v829
        %v831 = vand.u32 %v268, 4294901760
        %832 = vmatpush.msra.mxu0 %v831
        %v833 = vand.u32 %v266, 4294901760
        %834 = vmatpush.msra.mxu0 %v833
        %v835 = vand.u32 %v264, 4294901760
        %836 = vmatpush.msra.mxu0 %v835
        %v837 = vand.u32 %v262, 4294901760
        %838 = vmatpush.msra.mxu0 %v837
        %v839 = vand.u32 %v260, 4294901760
        %840 = vmatpush.msra.mxu0 %v839
        %v841 = vand.u32 %v258, 4294901760
        %842 = vmatpush.msra.mxu0 %v841
        %v843 = vand.u32 %v256, 4294901760
        %844 = vmatpush.msra.mxu0 %v843
        %v845 = vand.u32 %v254, 4294901760
        %846 = vmatpush.msra.mxu0 %v845
        %v847 = vand.u32 %v252, 4294901760
        %848 = vmatpush.msra.mxu0 %v847
        %v849 = vand.u32 %v250, 4294901760
        %850 = vmatpush.msra.mxu0 %v849
        %v851 = vand.u32 %v217, 4294901760
        %v852 = vsub.f32 %v217, %v851
        %v853 = vand.u32 %v852, 4294901760
        %854 = vmatmul.f32.gmra.mxu0 %v853
        %v855 = vpop.f32.mrf.mxu0
        %v856 = vadd.f32 %v817, %v855
        %857 = vdwg.mxu0
        %v858 = vand.u32 %v280, 4294901760
        %v859 = vsub.f32 %v280, %v858
        %v860 = vand.u32 %v859, 4294901760
        %861 = vmatpush.msra.mxu0 %v860
        %v862 = vand.u32 %v278, 4294901760
        %v863 = vsub.f32 %v278, %v862
        %v864 = vand.u32 %v863, 4294901760
        %865 = vmatpush.msra.mxu0 %v864
        %v866 = vand.u32 %v276, 4294901760
        %v867 = vsub.f32 %v276, %v866
        %v868 = vand.u32 %v867, 4294901760
        %869 = vmatpush.msra.mxu0 %v868
        %v870 = vand.u32 %v274, 4294901760
        %v871 = vsub.f32 %v274, %v870
        %v872 = vand.u32 %v871, 4294901760
        %873 = vmatpush.msra.mxu0 %v872
        %v874 = vand.u32 %v272, 4294901760
        %v875 = vsub.f32 %v272, %v874
        %v876 = vand.u32 %v875, 4294901760
        %877 = vmatpush.msra.mxu0 %v876
        %v878 = vand.u32 %v270, 4294901760
        %v879 = vsub.f32 %v270, %v878
        %v880 = vand.u32 %v879, 4294901760
        %881 = vmatpush.msra.mxu0 %v880
        %v882 = vand.u32 %v268, 4294901760
        %v883 = vsub.f32 %v268, %v882
        %v884 = vand.u32 %v883, 4294901760
        %885 = vmatpush.msra.mxu0 %v884
        %v886 = vand.u32 %v266, 4294901760
        %v887 = vsub.f32 %v266, %v886
        %v888 = vand.u32 %v887, 4294901760
        %889 = vmatpush.msra.mxu0 %v888
        %v890 = vand.u32 %v264, 4294901760
        %v891 = vsub.f32 %v264, %v890
        %v892 = vand.u32 %v891, 4294901760
        %893 = vmatpush.msra.mxu0 %v892
        %v894 = vand.u32 %v262, 4294901760
        %v895 = vsub.f32 %v262, %v894
        %v896 = vand.u32 %v895, 4294901760
        %897 = vmatpush.msra.mxu0 %v896
        %v898 = vand.u32 %v260, 4294901760
        %v899 = vsub.f32 %v260, %v898
        %v900 = vand.u32 %v899, 4294901760
        %901 = vmatpush.msra.mxu0 %v900
        %v902 = vand.u32 %v258, 4294901760
        %v903 = vsub.f32 %v258, %v902
        %v904 = vand.u32 %v903, 4294901760
        %905 = vmatpush.msra.mxu0 %v904
        %v906 = vand.u32 %v256, 4294901760
        %v907 = vsub.f32 %v256, %v906
        %v908 = vand.u32 %v907, 4294901760
        %909 = vmatpush.msra.mxu0 %v908
        %v910 = vand.u32 %v254, 4294901760
        %v911 = vsub.f32 %v254, %v910
        %v912 = vand.u32 %v911, 4294901760
        %913 = vmatpush.msra.mxu0 %v912
        %v914 = vand.u32 %v252, 4294901760
        %v915 = vsub.f32 %v252, %v914
        %v916 = vand.u32 %v915, 4294901760
        %917 = vmatpush.msra.mxu0 %v916
        %v918 = vand.u32 %v250, 4294901760
        %v919 = vsub.f32 %v250, %v918
        %v920 = vand.u32 %v919, 4294901760
        %921 = vmatpush.msra.mxu0 %v920
        %v922 = vand.u32 %v217, 4294901760
        %923 = vmatmul.f32.gmra.mxu0 %v922
        %v924 = vpop.f32.mrf.mxu0
        %v925 = vadd.f32 %v856, %v924
        %926 = vdwg.mxu0
        %v927 = vand.u32 %v280, 4294901760
        %928 = vmatpush.msra.mxu0 %v927
        %v929 = vand.u32 %v278, 4294901760
        %930 = vmatpush.msra.mxu0 %v929
        %v931 = vand.u32 %v276, 4294901760
        %932 = vmatpush.msra.mxu0 %v931
        %v933 = vand.u32 %v274, 4294901760
        %934 = vmatpush.msra.mxu0 %v933
        %v935 = vand.u32 %v272, 4294901760
        %936 = vmatpush.msra.mxu0 %v935
        %v937 = vand.u32 %v270, 4294901760
        %938 = vmatpush.msra.mxu0 %v937
        %v939 = vand.u32 %v268, 4294901760
        %940 = vmatpush.msra.mxu0 %v939
        %v941 = vand.u32 %v266, 4294901760
        %942 = vmatpush.msra.mxu0 %v941
        %v943 = vand.u32 %v264, 4294901760
        %944 = vmatpush.msra.mxu0 %v943
        %v945 = vand.u32 %v262, 4294901760
        %946 = vmatpush.msra.mxu0 %v945
        %v947 = vand.u32 %v260, 4294901760
        %948 = vmatpush.msra.mxu0 %v947
        %v949 = vand.u32 %v258, 4294901760
        %950 = vmatpush.msra.mxu0 %v949
        %v951 = vand.u32 %v256, 4294901760
        %952 = vmatpush.msra.mxu0 %v951
        %v953 = vand.u32 %v254, 4294901760
        %954 = vmatpush.msra.mxu0 %v953
        %v955 = vand.u32 %v252, 4294901760
        %956 = vmatpush.msra.mxu0 %v955
        %v957 = vand.u32 %v250, 4294901760
        %958 = vmatpush.msra.mxu0 %v957
        %v959 = vand.u32 %v217, 4294901760
        %960 = vmatmul.f32.gmra.mxu0 %v959
        %v961 = vpop.f32.mrf.mxu0
        %v962 = vadd.f32 %v925, %v961
        %963 = vdwg.mxu0
        %v964 = vand.u32 %v249, 4294901760
        %965 = vmatpush.msra.mxu0 %v964
        %v966 = vand.u32 %v247, 4294901760
        %967 = vmatpush.msra.mxu0 %v966
        %v968 = vand.u32 %v245, 4294901760
        %969 = vmatpush.msra.mxu0 %v968
        %v970 = vand.u32 %v243, 4294901760
        %971 = vmatpush.msra.mxu0 %v970
        %v972 = vand.u32 %v241, 4294901760
        %973 = vmatpush.msra.mxu0 %v972
        %v974 = vand.u32 %v239, 4294901760
        %975 = vmatpush.msra.mxu0 %v974
        %v976 = vand.u32 %v237, 4294901760
        %977 = vmatpush.msra.mxu0 %v976
        %v978 = vand.u32 %v235, 4294901760
        %979 = vmatpush.msra.mxu0 %v978
        %v980 = vand.u32 %v233, 4294901760
        %981 = vmatpush.msra.mxu0 %v980
        %v982 = vand.u32 %v231, 4294901760
        %983 = vmatpush.msra.mxu0 %v982
        %v984 = vand.u32 %v229, 4294901760
        %985 = vmatpush.msra.mxu0 %v984
        %v986 = vand.u32 %v227, 4294901760
        %987 = vmatpush.msra.mxu0 %v986
        %v988 = vand.u32 %v225, 4294901760
        %989 = vmatpush.msra.mxu0 %v988
        %v990 = vand.u32 %v223, 4294901760
        %991 = vmatpush.msra.mxu0 %v990
        %v992 = vand.u32 %v221, 4294901760
        %993 = vmatpush.msra.mxu0 %v992
        %v994 = vand.u32 %v219, 4294901760
        %995 = vmatpush.msra.mxu0 %v994
        %v996 = vand.u32 %v216, 4294901760
        %v997 = vsub.f32 %v216, %v996
        %v998 = vand.u32 %v997, 4294901760
        %v999 = vsub.f32 %v997, %v998
        %v1000 = vand.u32 %v999, 4294901760
        %1001 = vmatmul.f32.gmra.mxu0 %v1000
        %v1002 = vpop.f32.mrf.mxu0
        %v1003 = vadd.f32 0.0, %v1002
        %1004 = vdwg.mxu0
        %v1005 = vand.u32 %v249, 4294901760
        %v1006 = vsub.f32 %v249, %v1005
        %v1007 = vand.u32 %v1006, 4294901760
        %v1008 = vsub.f32 %v1006, %v1007
        %v1009 = vand.u32 %v1008, 4294901760
        %1010 = vmatpush.msra.mxu0 %v1009
        %v1011 = vand.u32 %v247, 4294901760
        %v1012 = vsub.f32 %v247, %v1011
        %v1013 = vand.u32 %v1012, 4294901760
        %v1014 = vsub.f32 %v1012, %v1013
        %v1015 = vand.u32 %v1014, 4294901760
        %1016 = vmatpush.msra.mxu0 %v1015
        %v1017 = vand.u32 %v245, 4294901760
        %v1018 = vsub.f32 %v245, %v1017
        %v1019 = vand.u32 %v1018, 4294901760
        %v1020 = vsub.f32 %v1018, %v1019
        %v1021 = vand.u32 %v1020, 4294901760
        %1022 = vmatpush.msra.mxu0 %v1021
        %v1023 = vand.u32 %v243, 4294901760
        %v1024 = vsub.f32 %v243, %v1023
        %v1025 = vand.u32 %v1024, 4294901760
        %v1026 = vsub.f32 %v1024, %v1025
        %v1027 = vand.u32 %v1026, 4294901760
        %1028 = vmatpush.msra.mxu0 %v1027
        %v1029 = vand.u32 %v241, 4294901760
        %v1030 = vsub.f32 %v241, %v1029
        %v1031 = vand.u32 %v1030, 4294901760
        %v1032 = vsub.f32 %v1030, %v1031
        %v1033 = vand.u32 %v1032, 4294901760
        %1034 = vmatpush.msra.mxu0 %v1033
        %v1035 = vand.u32 %v239, 4294901760
        %v1036 = vsub.f32 %v239, %v1035
        %v1037 = vand.u32 %v1036, 4294901760
        %v1038 = vsub.f32 %v1036, %v1037
        %v1039 = vand.u32 %v1038, 4294901760
        %1040 = vmatpush.msra.mxu0 %v1039
        %v1041 = vand.u32 %v237, 4294901760
        %v1042 = vsub.f32 %v237, %v1041
        %v1043 = vand.u32 %v1042, 4294901760
        %v1044 = vsub.f32 %v1042, %v1043
        %v1045 = vand.u32 %v1044, 4294901760
        %1046 = vmatpush.msra.mxu0 %v1045
        %v1047 = vand.u32 %v235, 4294901760
        %v1048 = vsub.f32 %v235, %v1047
        %v1049 = vand.u32 %v1048, 4294901760
        %v1050 = vsub.f32 %v1048, %v1049
        %v1051 = vand.u32 %v1050, 4294901760
        %1052 = vmatpush.msra.mxu0 %v1051
        %v1053 = vand.u32 %v233, 4294901760
        %v1054 = vsub.f32 %v233, %v1053
        %v1055 = vand.u32 %v1054, 4294901760
        %v1056 = vsub.f32 %v1054, %v1055
        %v1057 = vand.u32 %v1056, 4294901760
        %1058 = vmatpush.msra.mxu0 %v1057
        %v1059 = vand.u32 %v231, 4294901760
        %v1060 = vsub.f32 %v231, %v1059
        %v1061 = vand.u32 %v1060, 4294901760
        %v1062 = vsub.f32 %v1060, %v1061
        %v1063 = vand.u32 %v1062, 4294901760
        %1064 = vmatpush.msra.mxu0 %v1063
        %v1065 = vand.u32 %v229, 4294901760
        %v1066 = vsub.f32 %v229, %v1065
        %v1067 = vand.u32 %v1066, 4294901760
        %v1068 = vsub.f32 %v1066, %v1067
        %v1069 = vand.u32 %v1068, 4294901760
        %1070 = vmatpush.msra.mxu0 %v1069
        %v1071 = vand.u32 %v227, 4294901760
        %v1072 = vsub.f32 %v227, %v1071
        %v1073 = vand.u32 %v1072, 4294901760
        %v1074 = vsub.f32 %v1072, %v1073
        %v1075 = vand.u32 %v1074, 4294901760
        %1076 = vmatpush.msra.mxu0 %v1075
        %v1077 = vand.u32 %v225, 4294901760
        %v1078 = vsub.f32 %v225, %v1077
        %v1079 = vand.u32 %v1078, 4294901760
        %v1080 = vsub.f32 %v1078, %v1079
        %v1081 = vand.u32 %v1080, 4294901760
        %1082 = vmatpush.msra.mxu0 %v1081
        %v1083 = vand.u32 %v223, 4294901760
        %v1084 = vsub.f32 %v223, %v1083
        %v1085 = vand.u32 %v1084, 4294901760
        %v1086 = vsub.f32 %v1084, %v1085
        %v1087 = vand.u32 %v1086, 4294901760
        %1088 = vmatpush.msra.mxu0 %v1087
        %v1089 = vand.u32 %v221, 4294901760
        %v1090 = vsub.f32 %v221, %v1089
        %v1091 = vand.u32 %v1090, 4294901760
        %v1092 = vsub.f32 %v1090, %v1091
        %v1093 = vand.u32 %v1092, 4294901760
        %1094 = vmatpush.msra.mxu0 %v1093
        %v1095 = vand.u32 %v219, 4294901760
        %v1096 = vsub.f32 %v219, %v1095
        %v1097 = vand.u32 %v1096, 4294901760
        %v1098 = vsub.f32 %v1096, %v1097
        %v1099 = vand.u32 %v1098, 4294901760
        %1100 = vmatpush.msra.mxu0 %v1099
        %v1101 = vand.u32 %v216, 4294901760
        %1102 = vmatmul.f32.gmra.mxu0 %v1101
        %v1103 = vpop.f32.mrf.mxu0
        %v1104 = vadd.f32 %v1003, %v1103
        %1105 = vdwg.mxu0
        %v1106 = vand.u32 %v249, 4294901760
        %v1107 = vsub.f32 %v249, %v1106
        %1108 = vmatpush.msra.mxu0 %v1107
        %v1109 = vand.u32 %v247, 4294901760
        %v1110 = vsub.f32 %v247, %v1109
        %1111 = vmatpush.msra.mxu0 %v1110
        %v1112 = vand.u32 %v245, 4294901760
        %v1113 = vsub.f32 %v245, %v1112
        %1114 = vmatpush.msra.mxu0 %v1113
        %v1115 = vand.u32 %v243, 4294901760
        %v1116 = vsub.f32 %v243, %v1115
        %1117 = vmatpush.msra.mxu0 %v1116
        %v1118 = vand.u32 %v241, 4294901760
        %v1119 = vsub.f32 %v241, %v1118
        %1120 = vmatpush.msra.mxu0 %v1119
        %v1121 = vand.u32 %v239, 4294901760
        %v1122 = vsub.f32 %v239, %v1121
        %1123 = vmatpush.msra.mxu0 %v1122
        %v1124 = vand.u32 %v237, 4294901760
        %v1125 = vsub.f32 %v237, %v1124
        %1126 = vmatpush.msra.mxu0 %v1125
        %v1127 = vand.u32 %v235, 4294901760
        %v1128 = vsub.f32 %v235, %v1127
        %1129 = vmatpush.msra.mxu0 %v1128
        %v1130 = vand.u32 %v233, 4294901760
        %v1131 = vsub.f32 %v233, %v1130
        %1132 = vmatpush.msra.mxu0 %v1131
        %v1133 = vand.u32 %v231, 4294901760
        %v1134 = vsub.f32 %v231, %v1133
        %1135 = vmatpush.msra.mxu0 %v1134
        %v1136 = vand.u32 %v229, 4294901760
        %v1137 = vsub.f32 %v229, %v1136
        %1138 = vmatpush.msra.mxu0 %v1137
        %v1139 = vand.u32 %v227, 4294901760
        %v1140 = vsub.f32 %v227, %v1139
        %1141 = vmatpush.msra.mxu0 %v1140
        %v1142 = vand.u32 %v225, 4294901760
        %v1143 = vsub.f32 %v225, %v1142
        %1144 = vmatpush.msra.mxu0 %v1143
        %v1145 = vand.u32 %v223, 4294901760
        %v1146 = vsub.f32 %v223, %v1145
        %1147 = vmatpush.msra.mxu0 %v1146
        %v1148 = vand.u32 %v221, 4294901760
        %v1149 = vsub.f32 %v221, %v1148
        %1150 = vmatpush.msra.mxu0 %v1149
        %v1151 = vand.u32 %v219, 4294901760
        %v1152 = vsub.f32 %v219, %v1151
        %1153 = vmatpush.msra.mxu0 %v1152
        %v1154 = vand.u32 %v216, 4294901760
        %v1155 = vsub.f32 %v216, %v1154
        %1156 = vmatmul.f32.gmra.mxu0 %v1155
        %v1157 = vpop.f32.mrf.mxu0
        %v1158 = vadd.f32 %v1104, %v1157
        %1159 = vdwg.mxu0
        %v1160 = vand.u32 %v249, 4294901760
        %1161 = vmatpush.msra.mxu0 %v1160
        %v1162 = vand.u32 %v247, 4294901760
        %1163 = vmatpush.msra.mxu0 %v1162
        %v1164 = vand.u32 %v245, 4294901760
        %1165 = vmatpush.msra.mxu0 %v1164
        %v1166 = vand.u32 %v243, 4294901760
        %1167 = vmatpush.msra.mxu0 %v1166
        %v1168 = vand.u32 %v241, 4294901760
        %1169 = vmatpush.msra.mxu0 %v1168
        %v1170 = vand.u32 %v239, 4294901760
        %1171 = vmatpush.msra.mxu0 %v1170
        %v1172 = vand.u32 %v237, 4294901760
        %1173 = vmatpush.msra.mxu0 %v1172
        %v1174 = vand.u32 %v235, 4294901760
        %1175 = vmatpush.msra.mxu0 %v1174
        %v1176 = vand.u32 %v233, 4294901760
        %1177 = vmatpush.msra.mxu0 %v1176
        %v1178 = vand.u32 %v231, 4294901760
        %1179 = vmatpush.msra.mxu0 %v1178
        %v1180 = vand.u32 %v229, 4294901760
        %1181 = vmatpush.msra.mxu0 %v1180
        %v1182 = vand.u32 %v227, 4294901760
        %1183 = vmatpush.msra.mxu0 %v1182
        %v1184 = vand.u32 %v225, 4294901760
        %1185 = vmatpush.msra.mxu0 %v1184
        %v1186 = vand.u32 %v223, 4294901760
        %1187 = vmatpush.msra.mxu0 %v1186
        %v1188 = vand.u32 %v221, 4294901760
        %1189 = vmatpush.msra.mxu0 %v1188
        %v1190 = vand.u32 %v219, 4294901760
        %1191 = vmatpush.msra.mxu0 %v1190
        %v1192 = vand.u32 %v216, 4294901760
        %v1193 = vsub.f32 %v216, %v1192
        %v1194 = vand.u32 %v1193, 4294901760
        %1195 = vmatmul.f32.gmra.mxu0 %v1194
        %v1196 = vpop.f32.mrf.mxu0
        %v1197 = vadd.f32 %v1158, %v1196
        %1198 = vdwg.mxu0
        %v1199 = vand.u32 %v249, 4294901760
        %v1200 = vsub.f32 %v249, %v1199
        %v1201 = vand.u32 %v1200, 4294901760
        %1202 = vmatpush.msra.mxu0 %v1201
        %v1203 = vand.u32 %v247, 4294901760
        %v1204 = vsub.f32 %v247, %v1203
        %v1205 = vand.u32 %v1204, 4294901760
        %1206 = vmatpush.msra.mxu0 %v1205
        %v1207 = vand.u32 %v245, 4294901760
        %v1208 = vsub.f32 %v245, %v1207
        %v1209 = vand.u32 %v1208, 4294901760
        %1210 = vmatpush.msra.mxu0 %v1209
        %v1211 = vand.u32 %v243, 4294901760
        %v1212 = vsub.f32 %v243, %v1211
        %v1213 = vand.u32 %v1212, 4294901760
        %1214 = vmatpush.msra.mxu0 %v1213
        %v1215 = vand.u32 %v241, 4294901760
        %v1216 = vsub.f32 %v241, %v1215
        %v1217 = vand.u32 %v1216, 4294901760
        %1218 = vmatpush.msra.mxu0 %v1217
        %v1219 = vand.u32 %v239, 4294901760
        %v1220 = vsub.f32 %v239, %v1219
        %v1221 = vand.u32 %v1220, 4294901760
        %1222 = vmatpush.msra.mxu0 %v1221
        %v1223 = vand.u32 %v237, 4294901760
        %v1224 = vsub.f32 %v237, %v1223
        %v1225 = vand.u32 %v1224, 4294901760
        %1226 = vmatpush.msra.mxu0 %v1225
        %v1227 = vand.u32 %v235, 4294901760
        %v1228 = vsub.f32 %v235, %v1227
        %v1229 = vand.u32 %v1228, 4294901760
        %1230 = vmatpush.msra.mxu0 %v1229
        %v1231 = vand.u32 %v233, 4294901760
        %v1232 = vsub.f32 %v233, %v1231
        %v1233 = vand.u32 %v1232, 4294901760
        %1234 = vmatpush.msra.mxu0 %v1233
        %v1235 = vand.u32 %v231, 4294901760
        %v1236 = vsub.f32 %v231, %v1235
        %v1237 = vand.u32 %v1236, 4294901760
        %1238 = vmatpush.msra.mxu0 %v1237
        %v1239 = vand.u32 %v229, 4294901760
        %v1240 = vsub.f32 %v229, %v1239
        %v1241 = vand.u32 %v1240, 4294901760
        %1242 = vmatpush.msra.mxu0 %v1241
        %v1243 = vand.u32 %v227, 4294901760
        %v1244 = vsub.f32 %v227, %v1243
        %v1245 = vand.u32 %v1244, 4294901760
        %1246 = vmatpush.msra.mxu0 %v1245
        %v1247 = vand.u32 %v225, 4294901760
        %v1248 = vsub.f32 %v225, %v1247
        %v1249 = vand.u32 %v1248, 4294901760
        %1250 = vmatpush.msra.mxu0 %v1249
        %v1251 = vand.u32 %v223, 4294901760
        %v1252 = vsub.f32 %v223, %v1251
        %v1253 = vand.u32 %v1252, 4294901760
        %1254 = vmatpush.msra.mxu0 %v1253
        %v1255 = vand.u32 %v221, 4294901760
        %v1256 = vsub.f32 %v221, %v1255
        %v1257 = vand.u32 %v1256, 4294901760
        %1258 = vmatpush.msra.mxu0 %v1257
        %v1259 = vand.u32 %v219, 4294901760
        %v1260 = vsub.f32 %v219, %v1259
        %v1261 = vand.u32 %v1260, 4294901760
        %1262 = vmatpush.msra.mxu0 %v1261
        %v1263 = vand.u32 %v216, 4294901760
        %1264 = vmatmul.f32.gmra.mxu0 %v1263
        %v1265 = vpop.f32.mrf.mxu0
        %v1266 = vadd.f32 %v1197, %v1265
        %1267 = vdwg.mxu0
        %v1268 = vand.u32 %v249, 4294901760
        %1269 = vmatpush.msra.mxu0 %v1268
        %v1270 = vand.u32 %v247, 4294901760
        %1271 = vmatpush.msra.mxu0 %v1270
        %v1272 = vand.u32 %v245, 4294901760
        %1273 = vmatpush.msra.mxu0 %v1272
        %v1274 = vand.u32 %v243, 4294901760
        %1275 = vmatpush.msra.mxu0 %v1274
        %v1276 = vand.u32 %v241, 4294901760
        %1277 = vmatpush.msra.mxu0 %v1276
        %v1278 = vand.u32 %v239, 4294901760
        %1279 = vmatpush.msra.mxu0 %v1278
        %v1280 = vand.u32 %v237, 4294901760
        %1281 = vmatpush.msra.mxu0 %v1280
        %v1282 = vand.u32 %v235, 4294901760
        %1283 = vmatpush.msra.mxu0 %v1282
        %v1284 = vand.u32 %v233, 4294901760
        %1285 = vmatpush.msra.mxu0 %v1284
        %v1286 = vand.u32 %v231, 4294901760
        %1287 = vmatpush.msra.mxu0 %v1286
        %v1288 = vand.u32 %v229, 4294901760
        %1289 = vmatpush.msra.mxu0 %v1288
        %v1290 = vand.u32 %v227, 4294901760
        %1291 = vmatpush.msra.mxu0 %v1290
        %v1292 = vand.u32 %v225, 4294901760
        %1293 = vmatpush.msra.mxu0 %v1292
        %v1294 = vand.u32 %v223, 4294901760
        %1295 = vmatpush.msra.mxu0 %v1294
        %v1296 = vand.u32 %v221, 4294901760
        %1297 = vmatpush.msra.mxu0 %v1296
        %v1298 = vand.u32 %v219, 4294901760
        %1299 = vmatpush.msra.mxu0 %v1298
        %v1300 = vand.u32 %v216, 4294901760
        %1301 = vmatmul.f32.gmra.mxu0 %v1300
        %v1302 = vpop.f32.mrf.mxu0
        %v1303 = vadd.f32 %v1266, %v1302
        %1304 = vdwg.mxu0
        %v1305 = vand.u32 %v281, 4294901760
        %1306 = vmatpush.msra.mxu0 %v1305
        %v1307 = vand.u32 %v279, 4294901760
        %1308 = vmatpush.msra.mxu0 %v1307
        %v1309 = vand.u32 %v277, 4294901760
        %1310 = vmatpush.msra.mxu0 %v1309
        %v1311 = vand.u32 %v275, 4294901760
        %1312 = vmatpush.msra.mxu0 %v1311
        %v1313 = vand.u32 %v273, 4294901760
        %1314 = vmatpush.msra.mxu0 %v1313
        %v1315 = vand.u32 %v271, 4294901760
        %1316 = vmatpush.msra.mxu0 %v1315
        %v1317 = vand.u32 %v269, 4294901760
        %1318 = vmatpush.msra.mxu0 %v1317
        %v1319 = vand.u32 %v267, 4294901760
        %1320 = vmatpush.msra.mxu0 %v1319
        %v1321 = vand.u32 %v265, 4294901760
        %1322 = vmatpush.msra.mxu0 %v1321
        %v1323 = vand.u32 %v263, 4294901760
        %1324 = vmatpush.msra.mxu0 %v1323
        %v1325 = vand.u32 %v261, 4294901760
        %1326 = vmatpush.msra.mxu0 %v1325
        %v1327 = vand.u32 %v259, 4294901760
        %1328 = vmatpush.msra.mxu0 %v1327
        %v1329 = vand.u32 %v257, 4294901760
        %1330 = vmatpush.msra.mxu0 %v1329
        %v1331 = vand.u32 %v255, 4294901760
        %1332 = vmatpush.msra.mxu0 %v1331
        %v1333 = vand.u32 %v253, 4294901760
        %1334 = vmatpush.msra.mxu0 %v1333
        %v1335 = vand.u32 %v251, 4294901760
        %1336 = vmatpush.msra.mxu0 %v1335
        %v1337 = vand.u32 %v217, 4294901760
        %v1338 = vsub.f32 %v217, %v1337
        %v1339 = vand.u32 %v1338, 4294901760
        %v1340 = vsub.f32 %v1338, %v1339
        %v1341 = vand.u32 %v1340, 4294901760
        %1342 = vmatmul.f32.gmra.mxu0 %v1341
        %v1343 = vpop.f32.mrf.mxu0
        %v1344 = vadd.f32 %v1303, %v1343
        %1345 = vdwg.mxu0
        %v1346 = vand.u32 %v281, 4294901760
        %v1347 = vsub.f32 %v281, %v1346
        %v1348 = vand.u32 %v1347, 4294901760
        %v1349 = vsub.f32 %v1347, %v1348
        %v1350 = vand.u32 %v1349, 4294901760
        %1351 = vmatpush.msra.mxu0 %v1350
        %v1352 = vand.u32 %v279, 4294901760
        %v1353 = vsub.f32 %v279, %v1352
        %v1354 = vand.u32 %v1353, 4294901760
        %v1355 = vsub.f32 %v1353, %v1354
        %v1356 = vand.u32 %v1355, 4294901760
        %1357 = vmatpush.msra.mxu0 %v1356
        %v1358 = vand.u32 %v277, 4294901760
        %v1359 = vsub.f32 %v277, %v1358
        %v1360 = vand.u32 %v1359, 4294901760
        %v1361 = vsub.f32 %v1359, %v1360
        %v1362 = vand.u32 %v1361, 4294901760
        %1363 = vmatpush.msra.mxu0 %v1362
        %v1364 = vand.u32 %v275, 4294901760
        %v1365 = vsub.f32 %v275, %v1364
        %v1366 = vand.u32 %v1365, 4294901760
        %v1367 = vsub.f32 %v1365, %v1366
        %v1368 = vand.u32 %v1367, 4294901760
        %1369 = vmatpush.msra.mxu0 %v1368
        %v1370 = vand.u32 %v273, 4294901760
        %v1371 = vsub.f32 %v273, %v1370
        %v1372 = vand.u32 %v1371, 4294901760
        %v1373 = vsub.f32 %v1371, %v1372
        %v1374 = vand.u32 %v1373, 4294901760
        %1375 = vmatpush.msra.mxu0 %v1374
        %v1376 = vand.u32 %v271, 4294901760
        %v1377 = vsub.f32 %v271, %v1376
        %v1378 = vand.u32 %v1377, 4294901760
        %v1379 = vsub.f32 %v1377, %v1378
        %v1380 = vand.u32 %v1379, 4294901760
        %1381 = vmatpush.msra.mxu0 %v1380
        %v1382 = vand.u32 %v269, 4294901760
        %v1383 = vsub.f32 %v269, %v1382
        %v1384 = vand.u32 %v1383, 4294901760
        %v1385 = vsub.f32 %v1383, %v1384
        %v1386 = vand.u32 %v1385, 4294901760
        %1387 = vmatpush.msra.mxu0 %v1386
        %v1388 = vand.u32 %v267, 4294901760
        %v1389 = vsub.f32 %v267, %v1388
        %v1390 = vand.u32 %v1389, 4294901760
        %v1391 = vsub.f32 %v1389, %v1390
        %v1392 = vand.u32 %v1391, 4294901760
        %1393 = vmatpush.msra.mxu0 %v1392
        %v1394 = vand.u32 %v265, 4294901760
        %v1395 = vsub.f32 %v265, %v1394
        %v1396 = vand.u32 %v1395, 4294901760
        %v1397 = vsub.f32 %v1395, %v1396
        %v1398 = vand.u32 %v1397, 4294901760
        %1399 = vmatpush.msra.mxu0 %v1398
        %v1400 = vand.u32 %v263, 4294901760
        %v1401 = vsub.f32 %v263, %v1400
        %v1402 = vand.u32 %v1401, 4294901760
        %v1403 = vsub.f32 %v1401, %v1402
        %v1404 = vand.u32 %v1403, 4294901760
        %1405 = vmatpush.msra.mxu0 %v1404
        %v1406 = vand.u32 %v261, 4294901760
        %v1407 = vsub.f32 %v261, %v1406
        %v1408 = vand.u32 %v1407, 4294901760
        %v1409 = vsub.f32 %v1407, %v1408
        %v1410 = vand.u32 %v1409, 4294901760
        %1411 = vmatpush.msra.mxu0 %v1410
        %v1412 = vand.u32 %v259, 4294901760
        %v1413 = vsub.f32 %v259, %v1412
        %v1414 = vand.u32 %v1413, 4294901760
        %v1415 = vsub.f32 %v1413, %v1414
        %v1416 = vand.u32 %v1415, 4294901760
        %1417 = vmatpush.msra.mxu0 %v1416
        %v1418 = vand.u32 %v257, 4294901760
        %v1419 = vsub.f32 %v257, %v1418
        %v1420 = vand.u32 %v1419, 4294901760
        %v1421 = vsub.f32 %v1419, %v1420
        %v1422 = vand.u32 %v1421, 4294901760
        %1423 = vmatpush.msra.mxu0 %v1422
        %v1424 = vand.u32 %v255, 4294901760
        %v1425 = vsub.f32 %v255, %v1424
        %v1426 = vand.u32 %v1425, 4294901760
        %v1427 = vsub.f32 %v1425, %v1426
        %v1428 = vand.u32 %v1427, 4294901760
        %1429 = vmatpush.msra.mxu0 %v1428
        %v1430 = vand.u32 %v253, 4294901760
        %v1431 = vsub.f32 %v253, %v1430
        %v1432 = vand.u32 %v1431, 4294901760
        %v1433 = vsub.f32 %v1431, %v1432
        %v1434 = vand.u32 %v1433, 4294901760
        %1435 = vmatpush.msra.mxu0 %v1434
        %v1436 = vand.u32 %v251, 4294901760
        %v1437 = vsub.f32 %v251, %v1436
        %v1438 = vand.u32 %v1437, 4294901760
        %v1439 = vsub.f32 %v1437, %v1438
        %v1440 = vand.u32 %v1439, 4294901760
        %1441 = vmatpush.msra.mxu0 %v1440
        %v1442 = vand.u32 %v217, 4294901760
        %1443 = vmatmul.f32.gmra.mxu0 %v1442
        %v1444 = vpop.f32.mrf.mxu0
        %v1445 = vadd.f32 %v1344, %v1444
        %1446 = vdwg.mxu0
        %v1447 = vand.u32 %v281, 4294901760
        %v1448 = vsub.f32 %v281, %v1447
        %1449 = vmatpush.msra.mxu0 %v1448
        %v1450 = vand.u32 %v279, 4294901760
        %v1451 = vsub.f32 %v279, %v1450
        %1452 = vmatpush.msra.mxu0 %v1451
        %v1453 = vand.u32 %v277, 4294901760
        %v1454 = vsub.f32 %v277, %v1453
        %1455 = vmatpush.msra.mxu0 %v1454
        %v1456 = vand.u32 %v275, 4294901760
        %v1457 = vsub.f32 %v275, %v1456
        %1458 = vmatpush.msra.mxu0 %v1457
        %v1459 = vand.u32 %v273, 4294901760
        %v1460 = vsub.f32 %v273, %v1459
        %1461 = vmatpush.msra.mxu0 %v1460
        %v1462 = vand.u32 %v271, 4294901760
        %v1463 = vsub.f32 %v271, %v1462
        %1464 = vmatpush.msra.mxu0 %v1463
        %v1465 = vand.u32 %v269, 4294901760
        %v1466 = vsub.f32 %v269, %v1465
        %1467 = vmatpush.msra.mxu0 %v1466
        %v1468 = vand.u32 %v267, 4294901760
        %v1469 = vsub.f32 %v267, %v1468
        %1470 = vmatpush.msra.mxu0 %v1469
        %v1471 = vand.u32 %v265, 4294901760
        %v1472 = vsub.f32 %v265, %v1471
        %1473 = vmatpush.msra.mxu0 %v1472
        %v1474 = vand.u32 %v263, 4294901760
        %v1475 = vsub.f32 %v263, %v1474
        %1476 = vmatpush.msra.mxu0 %v1475
        %v1477 = vand.u32 %v261, 4294901760
        %v1478 = vsub.f32 %v261, %v1477
        %1479 = vmatpush.msra.mxu0 %v1478
        %v1480 = vand.u32 %v259, 4294901760
        %v1481 = vsub.f32 %v259, %v1480
        %1482 = vmatpush.msra.mxu0 %v1481
        %v1483 = vand.u32 %v257, 4294901760
        %v1484 = vsub.f32 %v257, %v1483
        %1485 = vmatpush.msra.mxu0 %v1484
        %v1486 = vand.u32 %v255, 4294901760
        %v1487 = vsub.f32 %v255, %v1486
        %1488 = vmatpush.msra.mxu0 %v1487
        %v1489 = vand.u32 %v253, 4294901760
        %v1490 = vsub.f32 %v253, %v1489
        %1491 = vmatpush.msra.mxu0 %v1490
        %v1492 = vand.u32 %v251, 4294901760
        %v1493 = vsub.f32 %v251, %v1492
        %1494 = vmatpush.msra.mxu0 %v1493
        %v1495 = vand.u32 %v217, 4294901760
        %v1496 = vsub.f32 %v217, %v1495
        %1497 = vmatmul.f32.gmra.mxu0 %v1496
        %v1498 = vpop.f32.mrf.mxu0
        %v1499 = vadd.f32 %v1445, %v1498
        %1500 = vdwg.mxu0
        %v1501 = vand.u32 %v281, 4294901760
        %1502 = vmatpush.msra.mxu0 %v1501
        %v1503 = vand.u32 %v279, 4294901760
        %1504 = vmatpush.msra.mxu0 %v1503
        %v1505 = vand.u32 %v277, 4294901760
        %1506 = vmatpush.msra.mxu0 %v1505
        %v1507 = vand.u32 %v275, 4294901760
        %1508 = vmatpush.msra.mxu0 %v1507
        %v1509 = vand.u32 %v273, 4294901760
        %1510 = vmatpush.msra.mxu0 %v1509
        %v1511 = vand.u32 %v271, 4294901760
        %1512 = vmatpush.msra.mxu0 %v1511
        %v1513 = vand.u32 %v269, 4294901760
        %1514 = vmatpush.msra.mxu0 %v1513
        %v1515 = vand.u32 %v267, 4294901760
        %1516 = vmatpush.msra.mxu0 %v1515
        %v1517 = vand.u32 %v265, 4294901760
        %1518 = vmatpush.msra.mxu0 %v1517
        %v1519 = vand.u32 %v263, 4294901760
        %1520 = vmatpush.msra.mxu0 %v1519
        %v1521 = vand.u32 %v261, 4294901760
        %1522 = vmatpush.msra.mxu0 %v1521
        %v1523 = vand.u32 %v259, 4294901760
        %1524 = vmatpush.msra.mxu0 %v1523
        %v1525 = vand.u32 %v257, 4294901760
        %1526 = vmatpush.msra.mxu0 %v1525
        %v1527 = vand.u32 %v255, 4294901760
        %1528 = vmatpush.msra.mxu0 %v1527
        %v1529 = vand.u32 %v253, 4294901760
        %1530 = vmatpush.msra.mxu0 %v1529
        %v1531 = vand.u32 %v251, 4294901760
        %1532 = vmatpush.msra.mxu0 %v1531
        %v1533 = vand.u32 %v217, 4294901760
        %v1534 = vsub.f32 %v217, %v1533
        %v1535 = vand.u32 %v1534, 4294901760
        %1536 = vmatmul.f32.gmra.mxu0 %v1535
        %v1537 = vpop.f32.mrf.mxu0
        %v1538 = vadd.f32 %v1499, %v1537
        %1539 = vdwg.mxu0
        %v1540 = vand.u32 %v281, 4294901760
        %v1541 = vsub.f32 %v281, %v1540
        %v1542 = vand.u32 %v1541, 4294901760
        %1543 = vmatpush.msra.mxu0 %v1542
        %v1544 = vand.u32 %v279, 4294901760
        %v1545 = vsub.f32 %v279, %v1544
        %v1546 = vand.u32 %v1545, 4294901760
        %1547 = vmatpush.msra.mxu0 %v1546
        %v1548 = vand.u32 %v277, 4294901760
        %v1549 = vsub.f32 %v277, %v1548
        %v1550 = vand.u32 %v1549, 4294901760
        %1551 = vmatpush.msra.mxu0 %v1550
        %v1552 = vand.u32 %v275, 4294901760
        %v1553 = vsub.f32 %v275, %v1552
        %v1554 = vand.u32 %v1553, 4294901760
        %1555 = vmatpush.msra.mxu0 %v1554
        %v1556 = vand.u32 %v273, 4294901760
        %v1557 = vsub.f32 %v273, %v1556
        %v1558 = vand.u32 %v1557, 4294901760
        %1559 = vmatpush.msra.mxu0 %v1558
        %v1560 = vand.u32 %v271, 4294901760
        %v1561 = vsub.f32 %v271, %v1560
        %v1562 = vand.u32 %v1561, 4294901760
        %1563 = vmatpush.msra.mxu0 %v1562
        %v1564 = vand.u32 %v269, 4294901760
        %v1565 = vsub.f32 %v269, %v1564
        %v1566 = vand.u32 %v1565, 4294901760
        %1567 = vmatpush.msra.mxu0 %v1566
        %v1568 = vand.u32 %v267, 4294901760
        %v1569 = vsub.f32 %v267, %v1568
        %v1570 = vand.u32 %v1569, 4294901760
        %1571 = vmatpush.msra.mxu0 %v1570
        %v1572 = vand.u32 %v265, 4294901760
        %v1573 = vsub.f32 %v265, %v1572
        %v1574 = vand.u32 %v1573, 4294901760
        %1575 = vmatpush.msra.mxu0 %v1574
        %v1576 = vand.u32 %v263, 4294901760
        %v1577 = vsub.f32 %v263, %v1576
        %v1578 = vand.u32 %v1577, 4294901760
        %1579 = vmatpush.msra.mxu0 %v1578
        %v1580 = vand.u32 %v261, 4294901760
        %v1581 = vsub.f32 %v261, %v1580
        %v1582 = vand.u32 %v1581, 4294901760
        %1583 = vmatpush.msra.mxu0 %v1582
        %v1584 = vand.u32 %v259, 4294901760
        %v1585 = vsub.f32 %v259, %v1584
        %v1586 = vand.u32 %v1585, 4294901760
        %1587 = vmatpush.msra.mxu0 %v1586
        %v1588 = vand.u32 %v257, 4294901760
        %v1589 = vsub.f32 %v257, %v1588
        %v1590 = vand.u32 %v1589, 4294901760
        %1591 = vmatpush.msra.mxu0 %v1590
        %v1592 = vand.u32 %v255, 4294901760
        %v1593 = vsub.f32 %v255, %v1592
        %v1594 = vand.u32 %v1593, 4294901760
        %1595 = vmatpush.msra.mxu0 %v1594
        %v1596 = vand.u32 %v253, 4294901760
        %v1597 = vsub.f32 %v253, %v1596
        %v1598 = vand.u32 %v1597, 4294901760
        %1599 = vmatpush.msra.mxu0 %v1598
        %v1600 = vand.u32 %v251, 4294901760
        %v1601 = vsub.f32 %v251, %v1600
        %v1602 = vand.u32 %v1601, 4294901760
        %1603 = vmatpush.msra.mxu0 %v1602
        %v1604 = vand.u32 %v217, 4294901760
        %1605 = vmatmul.f32.gmra.mxu0 %v1604
        %v1606 = vpop.f32.mrf.mxu0
        %v1607 = vadd.f32 %v1538, %v1606
        %1608 = vdwg.mxu0
        %v1609 = vand.u32 %v281, 4294901760
        %1610 = vmatpush.msra.mxu0 %v1609
        %v1611 = vand.u32 %v279, 4294901760
        %1612 = vmatpush.msra.mxu0 %v1611
        %v1613 = vand.u32 %v277, 4294901760
        %1614 = vmatpush.msra.mxu0 %v1613
        %v1615 = vand.u32 %v275, 4294901760
        %1616 = vmatpush.msra.mxu0 %v1615
        %v1617 = vand.u32 %v273, 4294901760
        %1618 = vmatpush.msra.mxu0 %v1617
        %v1619 = vand.u32 %v271, 4294901760
        %1620 = vmatpush.msra.mxu0 %v1619
        %v1621 = vand.u32 %v269, 4294901760
        %1622 = vmatpush.msra.mxu0 %v1621
        %v1623 = vand.u32 %v267, 4294901760
        %1624 = vmatpush.msra.mxu0 %v1623
        %v1625 = vand.u32 %v265, 4294901760
        %1626 = vmatpush.msra.mxu0 %v1625
        %v1627 = vand.u32 %v263, 4294901760
        %1628 = vmatpush.msra.mxu0 %v1627
        %v1629 = vand.u32 %v261, 4294901760
        %1630 = vmatpush.msra.mxu0 %v1629
        %v1631 = vand.u32 %v259, 4294901760
        %1632 = vmatpush.msra.mxu0 %v1631
        %v1633 = vand.u32 %v257, 4294901760
        %1634 = vmatpush.msra.mxu0 %v1633
        %v1635 = vand.u32 %v255, 4294901760
        %1636 = vmatpush.msra.mxu0 %v1635
        %v1637 = vand.u32 %v253, 4294901760
        %1638 = vmatpush.msra.mxu0 %v1637
        %v1639 = vand.u32 %v251, 4294901760
        %1640 = vmatpush.msra.mxu0 %v1639
        %v1641 = vand.u32 %v217, 4294901760
        %1642 = vmatmul.f32.gmra.mxu0 %v1641
        %v1643 = vpop.f32.mrf.mxu0
        %v1644 = vadd.f32 %v1607, %v1643
        %1645 = vdwg.mxu0
        %s1646 = scalar_lea.vmem %s1, 512
        %v1647 = vld [vmem:[%s1646] sm:$0xff]
        %v1648 = vld [vmem:[%s1646 + $0x8] sm:$0xff]
        %v1649 = vld [vmem:[%s1646 + $0x10] sm:$0xff]
        %v1650 = vld [vmem:[%s1646 + $0x18] sm:$0xff]
        %v1651 = vld [vmem:[%s1646 + $0x20] sm:$0xff]
        %v1652 = vld [vmem:[%s1646 + $0x28] sm:$0xff]
        %v1653 = vld [vmem:[%s1646 + $0x30] sm:$0xff]
        %v1654 = vld [vmem:[%s1646 + $0x38] sm:$0xff]
        %v1655 = vld [vmem:[%s1646 + $0x40] sm:$0xff]
        %v1656 = vld [vmem:[%s1646 + $0x48] sm:$0xff]
        %v1657 = vld [vmem:[%s1646 + $0x50] sm:$0xff]
        %v1658 = vld [vmem:[%s1646 + $0x58] sm:$0xff]
        %v1659 = vld [vmem:[%s1646 + $0x60] sm:$0xff]
        %v1660 = vld [vmem:[%s1646 + $0x68] sm:$0xff]
        %v1661 = vld [vmem:[%s1646 + $0x70] sm:$0xff]
        %v1662 = vld [vmem:[%s1646 + $0x78] sm:$0xff]
        %v1663 = vld [vmem:[%s1646 + $0x80] sm:$0xff]
        %v1664 = vld [vmem:[%s1646 + $0x88] sm:$0xff]
        %v1665 = vld [vmem:[%s1646 + $0x90] sm:$0xff]
        %v1666 = vld [vmem:[%s1646 + $0x98] sm:$0xff]
        %v1667 = vld [vmem:[%s1646 + $0xa0] sm:$0xff]
        %v1668 = vld [vmem:[%s1646 + $0xa8] sm:$0xff]
        %v1669 = vld [vmem:[%s1646 + $0xb0] sm:$0xff]
        %v1670 = vld [vmem:[%s1646 + $0xb8] sm:$0xff]
        %v1671 = vld [vmem:[%s1646 + $0xc0] sm:$0xff]
        %v1672 = vld [vmem:[%s1646 + $0xc8] sm:$0xff]
        %v1673 = vld [vmem:[%s1646 + $0xd0] sm:$0xff]
        %v1674 = vld [vmem:[%s1646 + $0xd8] sm:$0xff]
        %v1675 = vld [vmem:[%s1646 + $0xe0] sm:$0xff]
        %v1676 = vld [vmem:[%s1646 + $0xe8] sm:$0xff]
        %v1677 = vld [vmem:[%s1646 + $0xf0] sm:$0xff]
        %v1678 = vld [vmem:[%s1646 + $0xf8] sm:$0xff]
        %v1679 = vld [vmem:[%s1646 + $0x100] sm:$0xff]
        %v1680 = vld [vmem:[%s1646 + $0x108] sm:$0xff]
        %v1681 = vld [vmem:[%s1646 + $0x110] sm:$0xff]
        %v1682 = vld [vmem:[%s1646 + $0x118] sm:$0xff]
        %v1683 = vld [vmem:[%s1646 + $0x120] sm:$0xff]
        %v1684 = vld [vmem:[%s1646 + $0x128] sm:$0xff]
        %v1685 = vld [vmem:[%s1646 + $0x130] sm:$0xff]
        %v1686 = vld [vmem:[%s1646 + $0x138] sm:$0xff]
        %v1687 = vld [vmem:[%s1646 + $0x140] sm:$0xff]
        %v1688 = vld [vmem:[%s1646 + $0x148] sm:$0xff]
        %v1689 = vld [vmem:[%s1646 + $0x150] sm:$0xff]
        %v1690 = vld [vmem:[%s1646 + $0x158] sm:$0xff]
        %v1691 = vld [vmem:[%s1646 + $0x160] sm:$0xff]
        %v1692 = vld [vmem:[%s1646 + $0x168] sm:$0xff]
        %v1693 = vld [vmem:[%s1646 + $0x170] sm:$0xff]
        %v1694 = vld [vmem:[%s1646 + $0x178] sm:$0xff]
        %v1695 = vld [vmem:[%s1646 + $0x180] sm:$0xff]
        %v1696 = vld [vmem:[%s1646 + $0x188] sm:$0xff]
        %v1697 = vld [vmem:[%s1646 + $0x190] sm:$0xff]
        %v1698 = vld [vmem:[%s1646 + $0x198] sm:$0xff]
        %v1699 = vld [vmem:[%s1646 + $0x1a0] sm:$0xff]
        %v1700 = vld [vmem:[%s1646 + $0x1a8] sm:$0xff]
        %v1701 = vld [vmem:[%s1646 + $0x1b0] sm:$0xff]
        %v1702 = vld [vmem:[%s1646 + $0x1b8] sm:$0xff]
        %v1703 = vld [vmem:[%s1646 + $0x1c0] sm:$0xff]
        %v1704 = vld [vmem:[%s1646 + $0x1c8] sm:$0xff]
        %v1705 = vld [vmem:[%s1646 + $0x1d0] sm:$0xff]
        %v1706 = vld [vmem:[%s1646 + $0x1d8] sm:$0xff]
        %v1707 = vld [vmem:[%s1646 + $0x1e0] sm:$0xff]
        %v1708 = vld [vmem:[%s1646 + $0x1e8] sm:$0xff]
        %v1709 = vld [vmem:[%s1646 + $0x1f0] sm:$0xff]
        %v1710 = vld [vmem:[%s1646 + $0x1f8] sm:$0xff]
        %v1711 = vand.u32 %v1677, 4294901760
        %1712 = vmatpush.msra.mxu0 %v1711
        %v1713 = vand.u32 %v1675, 4294901760
        %1714 = vmatpush.msra.mxu0 %v1713
        %v1715 = vand.u32 %v1673, 4294901760
        %1716 = vmatpush.msra.mxu0 %v1715
        %v1717 = vand.u32 %v1671, 4294901760
        %1718 = vmatpush.msra.mxu0 %v1717
        %v1719 = vand.u32 %v1669, 4294901760
        %1720 = vmatpush.msra.mxu0 %v1719
        %v1721 = vand.u32 %v1667, 4294901760
        %1722 = vmatpush.msra.mxu0 %v1721
        %v1723 = vand.u32 %v1665, 4294901760
        %1724 = vmatpush.msra.mxu0 %v1723
        %v1725 = vand.u32 %v1663, 4294901760
        %1726 = vmatpush.msra.mxu0 %v1725
        %v1727 = vand.u32 %v1661, 4294901760
        %1728 = vmatpush.msra.mxu0 %v1727
        %v1729 = vand.u32 %v1659, 4294901760
        %1730 = vmatpush.msra.mxu0 %v1729
        %v1731 = vand.u32 %v1657, 4294901760
        %1732 = vmatpush.msra.mxu0 %v1731
        %v1733 = vand.u32 %v1655, 4294901760
        %1734 = vmatpush.msra.mxu0 %v1733
        %v1735 = vand.u32 %v1653, 4294901760
        %1736 = vmatpush.msra.mxu0 %v1735
        %v1737 = vand.u32 %v1651, 4294901760
        %1738 = vmatpush.msra.mxu0 %v1737
        %v1739 = vand.u32 %v1649, 4294901760
        %1740 = vmatpush.msra.mxu0 %v1739
        %v1741 = vand.u32 %v1647, 4294901760
        %1742 = vmatpush.msra.mxu0 %v1741
        %v1743 = vand.u32 %v216, 4294901760
        %v1744 = vsub.f32 %v216, %v1743
        %v1745 = vand.u32 %v1744, 4294901760
        %v1746 = vsub.f32 %v1744, %v1745
        %v1747 = vand.u32 %v1746, 4294901760
        %1748 = vmatmul.f32.gmra.mxu0 %v1747
        %v1749 = vpop.f32.mrf.mxu0
        %v1750 = vadd.f32 0.0, %v1749
        %1751 = vdwg.mxu0
        %v1752 = vand.u32 %v1677, 4294901760
        %v1753 = vsub.f32 %v1677, %v1752
        %v1754 = vand.u32 %v1753, 4294901760
        %v1755 = vsub.f32 %v1753, %v1754
        %v1756 = vand.u32 %v1755, 4294901760
        %1757 = vmatpush.msra.mxu0 %v1756
        %v1758 = vand.u32 %v1675, 4294901760
        %v1759 = vsub.f32 %v1675, %v1758
        %v1760 = vand.u32 %v1759, 4294901760
        %v1761 = vsub.f32 %v1759, %v1760
        %v1762 = vand.u32 %v1761, 4294901760
        %1763 = vmatpush.msra.mxu0 %v1762
        %v1764 = vand.u32 %v1673, 4294901760
        %v1765 = vsub.f32 %v1673, %v1764
        %v1766 = vand.u32 %v1765, 4294901760
        %v1767 = vsub.f32 %v1765, %v1766
        %v1768 = vand.u32 %v1767, 4294901760
        %1769 = vmatpush.msra.mxu0 %v1768
        %v1770 = vand.u32 %v1671, 4294901760
        %v1771 = vsub.f32 %v1671, %v1770
        %v1772 = vand.u32 %v1771, 4294901760
        %v1773 = vsub.f32 %v1771, %v1772
        %v1774 = vand.u32 %v1773, 4294901760
        %1775 = vmatpush.msra.mxu0 %v1774
        %v1776 = vand.u32 %v1669, 4294901760
        %v1777 = vsub.f32 %v1669, %v1776
        %v1778 = vand.u32 %v1777, 4294901760
        %v1779 = vsub.f32 %v1777, %v1778
        %v1780 = vand.u32 %v1779, 4294901760
        %1781 = vmatpush.msra.mxu0 %v1780
        %v1782 = vand.u32 %v1667, 4294901760
        %v1783 = vsub.f32 %v1667, %v1782
        %v1784 = vand.u32 %v1783, 4294901760
        %v1785 = vsub.f32 %v1783, %v1784
        %v1786 = vand.u32 %v1785, 4294901760
        %1787 = vmatpush.msra.mxu0 %v1786
        %v1788 = vand.u32 %v1665, 4294901760
        %v1789 = vsub.f32 %v1665, %v1788
        %v1790 = vand.u32 %v1789, 4294901760
        %v1791 = vsub.f32 %v1789, %v1790
        %v1792 = vand.u32 %v1791, 4294901760
        %1793 = vmatpush.msra.mxu0 %v1792
        %v1794 = vand.u32 %v1663, 4294901760
        %v1795 = vsub.f32 %v1663, %v1794
        %v1796 = vand.u32 %v1795, 4294901760
        %v1797 = vsub.f32 %v1795, %v1796
        %v1798 = vand.u32 %v1797, 4294901760
        %1799 = vmatpush.msra.mxu0 %v1798
        %v1800 = vand.u32 %v1661, 4294901760
        %v1801 = vsub.f32 %v1661, %v1800
        %v1802 = vand.u32 %v1801, 4294901760
        %v1803 = vsub.f32 %v1801, %v1802
        %v1804 = vand.u32 %v1803, 4294901760
        %1805 = vmatpush.msra.mxu0 %v1804
        %v1806 = vand.u32 %v1659, 4294901760
        %v1807 = vsub.f32 %v1659, %v1806
        %v1808 = vand.u32 %v1807, 4294901760
        %v1809 = vsub.f32 %v1807, %v1808
        %v1810 = vand.u32 %v1809, 4294901760
        %1811 = vmatpush.msra.mxu0 %v1810
        %v1812 = vand.u32 %v1657, 4294901760
        %v1813 = vsub.f32 %v1657, %v1812
        %v1814 = vand.u32 %v1813, 4294901760
        %v1815 = vsub.f32 %v1813, %v1814
        %v1816 = vand.u32 %v1815, 4294901760
        %1817 = vmatpush.msra.mxu0 %v1816
        %v1818 = vand.u32 %v1655, 4294901760
        %v1819 = vsub.f32 %v1655, %v1818
        %v1820 = vand.u32 %v1819, 4294901760
        %v1821 = vsub.f32 %v1819, %v1820
        %v1822 = vand.u32 %v1821, 4294901760
        %1823 = vmatpush.msra.mxu0 %v1822
        %v1824 = vand.u32 %v1653, 4294901760
        %v1825 = vsub.f32 %v1653, %v1824
        %v1826 = vand.u32 %v1825, 4294901760
        %v1827 = vsub.f32 %v1825, %v1826
        %v1828 = vand.u32 %v1827, 4294901760
        %1829 = vmatpush.msra.mxu0 %v1828
        %v1830 = vand.u32 %v1651, 4294901760
        %v1831 = vsub.f32 %v1651, %v1830
        %v1832 = vand.u32 %v1831, 4294901760
        %v1833 = vsub.f32 %v1831, %v1832
        %v1834 = vand.u32 %v1833, 4294901760
        %1835 = vmatpush.msra.mxu0 %v1834
        %v1836 = vand.u32 %v1649, 4294901760
        %v1837 = vsub.f32 %v1649, %v1836
        %v1838 = vand.u32 %v1837, 4294901760
        %v1839 = vsub.f32 %v1837, %v1838
        %v1840 = vand.u32 %v1839, 4294901760
        %1841 = vmatpush.msra.mxu0 %v1840
        %v1842 = vand.u32 %v1647, 4294901760
        %v1843 = vsub.f32 %v1647, %v1842
        %v1844 = vand.u32 %v1843, 4294901760
        %v1845 = vsub.f32 %v1843, %v1844
        %v1846 = vand.u32 %v1845, 4294901760
        %1847 = vmatpush.msra.mxu0 %v1846
        %v1848 = vand.u32 %v216, 4294901760
        %1849 = vmatmul.f32.gmra.mxu0 %v1848
        %v1850 = vpop.f32.mrf.mxu0
        %v1851 = vadd.f32 %v1750, %v1850
        %1852 = vdwg.mxu0
        %v1853 = vand.u32 %v1677, 4294901760
        %v1854 = vsub.f32 %v1677, %v1853
        %1855 = vmatpush.msra.mxu0 %v1854
        %v1856 = vand.u32 %v1675, 4294901760
        %v1857 = vsub.f32 %v1675, %v1856
        %1858 = vmatpush.msra.mxu0 %v1857
        %v1859 = vand.u32 %v1673, 4294901760
        %v1860 = vsub.f32 %v1673, %v1859
        %1861 = vmatpush.msra.mxu0 %v1860
        %v1862 = vand.u32 %v1671, 4294901760
        %v1863 = vsub.f32 %v1671, %v1862
        %1864 = vmatpush.msra.mxu0 %v1863
        %v1865 = vand.u32 %v1669, 4294901760
        %v1866 = vsub.f32 %v1669, %v1865
        %1867 = vmatpush.msra.mxu0 %v1866
        %v1868 = vand.u32 %v1667, 4294901760
        %v1869 = vsub.f32 %v1667, %v1868
        %1870 = vmatpush.msra.mxu0 %v1869
        %v1871 = vand.u32 %v1665, 4294901760
        %v1872 = vsub.f32 %v1665, %v1871
        %1873 = vmatpush.msra.mxu0 %v1872
        %v1874 = vand.u32 %v1663, 4294901760
        %v1875 = vsub.f32 %v1663, %v1874
        %1876 = vmatpush.msra.mxu0 %v1875
        %v1877 = vand.u32 %v1661, 4294901760
        %v1878 = vsub.f32 %v1661, %v1877
        %1879 = vmatpush.msra.mxu0 %v1878
        %v1880 = vand.u32 %v1659, 4294901760
        %v1881 = vsub.f32 %v1659, %v1880
        %1882 = vmatpush.msra.mxu0 %v1881
        %v1883 = vand.u32 %v1657, 4294901760
        %v1884 = vsub.f32 %v1657, %v1883
        %1885 = vmatpush.msra.mxu0 %v1884
        %v1886 = vand.u32 %v1655, 4294901760
        %v1887 = vsub.f32 %v1655, %v1886
        %1888 = vmatpush.msra.mxu0 %v1887
        %v1889 = vand.u32 %v1653, 4294901760
        %v1890 = vsub.f32 %v1653, %v1889
        %1891 = vmatpush.msra.mxu0 %v1890
        %v1892 = vand.u32 %v1651, 4294901760
        %v1893 = vsub.f32 %v1651, %v1892
        %1894 = vmatpush.msra.mxu0 %v1893
        %v1895 = vand.u32 %v1649, 4294901760
        %v1896 = vsub.f32 %v1649, %v1895
        %1897 = vmatpush.msra.mxu0 %v1896
        %v1898 = vand.u32 %v1647, 4294901760
        %v1899 = vsub.f32 %v1647, %v1898
        %1900 = vmatpush.msra.mxu0 %v1899
        %v1901 = vand.u32 %v216, 4294901760
        %v1902 = vsub.f32 %v216, %v1901
        %1903 = vmatmul.f32.gmra.mxu0 %v1902
        %v1904 = vpop.f32.mrf.mxu0
        %v1905 = vadd.f32 %v1851, %v1904
        %1906 = vdwg.mxu0
        %v1907 = vand.u32 %v1677, 4294901760
        %1908 = vmatpush.msra.mxu0 %v1907
        %v1909 = vand.u32 %v1675, 4294901760
        %1910 = vmatpush.msra.mxu0 %v1909
        %v1911 = vand.u32 %v1673, 4294901760
        %1912 = vmatpush.msra.mxu0 %v1911
        %v1913 = vand.u32 %v1671, 4294901760
        %1914 = vmatpush.msra.mxu0 %v1913
        %v1915 = vand.u32 %v1669, 4294901760
        %1916 = vmatpush.msra.mxu0 %v1915
        %v1917 = vand.u32 %v1667, 4294901760
        %1918 = vmatpush.msra.mxu0 %v1917
        %v1919 = vand.u32 %v1665, 4294901760
        %1920 = vmatpush.msra.mxu0 %v1919
        %v1921 = vand.u32 %v1663, 4294901760
        %1922 = vmatpush.msra.mxu0 %v1921
        %v1923 = vand.u32 %v1661, 4294901760
        %1924 = vmatpush.msra.mxu0 %v1923
        %v1925 = vand.u32 %v1659, 4294901760
        %1926 = vmatpush.msra.mxu0 %v1925
        %v1927 = vand.u32 %v1657, 4294901760
        %1928 = vmatpush.msra.mxu0 %v1927
        %v1929 = vand.u32 %v1655, 4294901760
        %1930 = vmatpush.msra.mxu0 %v1929
        %v1931 = vand.u32 %v1653, 4294901760
        %1932 = vmatpush.msra.mxu0 %v1931
        %v1933 = vand.u32 %v1651, 4294901760
        %1934 = vmatpush.msra.mxu0 %v1933
        %v1935 = vand.u32 %v1649, 4294901760
        %1936 = vmatpush.msra.mxu0 %v1935
        %v1937 = vand.u32 %v1647, 4294901760
        %1938 = vmatpush.msra.mxu0 %v1937
        %v1939 = vand.u32 %v216, 4294901760
        %v1940 = vsub.f32 %v216, %v1939
        %v1941 = vand.u32 %v1940, 4294901760
        %1942 = vmatmul.f32.gmra.mxu0 %v1941
        %v1943 = vpop.f32.mrf.mxu0
        %v1944 = vadd.f32 %v1905, %v1943
        %1945 = vdwg.mxu0
        %v1946 = vand.u32 %v1677, 4294901760
        %v1947 = vsub.f32 %v1677, %v1946
        %v1948 = vand.u32 %v1947, 4294901760
        %1949 = vmatpush.msra.mxu0 %v1948
        %v1950 = vand.u32 %v1675, 4294901760
        %v1951 = vsub.f32 %v1675, %v1950
        %v1952 = vand.u32 %v1951, 4294901760
        %1953 = vmatpush.msra.mxu0 %v1952
        %v1954 = vand.u32 %v1673, 4294901760
        %v1955 = vsub.f32 %v1673, %v1954
        %v1956 = vand.u32 %v1955, 4294901760
        %1957 = vmatpush.msra.mxu0 %v1956
        %v1958 = vand.u32 %v1671, 4294901760
        %v1959 = vsub.f32 %v1671, %v1958
        %v1960 = vand.u32 %v1959, 4294901760
        %1961 = vmatpush.msra.mxu0 %v1960
        %v1962 = vand.u32 %v1669, 4294901760
        %v1963 = vsub.f32 %v1669, %v1962
        %v1964 = vand.u32 %v1963, 4294901760
        %1965 = vmatpush.msra.mxu0 %v1964
        %v1966 = vand.u32 %v1667, 4294901760
        %v1967 = vsub.f32 %v1667, %v1966
        %v1968 = vand.u32 %v1967, 4294901760
        %1969 = vmatpush.msra.mxu0 %v1968
        %v1970 = vand.u32 %v1665, 4294901760
        %v1971 = vsub.f32 %v1665, %v1970
        %v1972 = vand.u32 %v1971, 4294901760
        %1973 = vmatpush.msra.mxu0 %v1972
        %v1974 = vand.u32 %v1663, 4294901760
        %v1975 = vsub.f32 %v1663, %v1974
        %v1976 = vand.u32 %v1975, 4294901760
        %1977 = vmatpush.msra.mxu0 %v1976
        %v1978 = vand.u32 %v1661, 4294901760
        %v1979 = vsub.f32 %v1661, %v1978
        %v1980 = vand.u32 %v1979, 4294901760
        %1981 = vmatpush.msra.mxu0 %v1980
        %v1982 = vand.u32 %v1659, 4294901760
        %v1983 = vsub.f32 %v1659, %v1982
        %v1984 = vand.u32 %v1983, 4294901760
        %1985 = vmatpush.msra.mxu0 %v1984
        %v1986 = vand.u32 %v1657, 4294901760
        %v1987 = vsub.f32 %v1657, %v1986
        %v1988 = vand.u32 %v1987, 4294901760
        %1989 = vmatpush.msra.mxu0 %v1988
        %v1990 = vand.u32 %v1655, 4294901760
        %v1991 = vsub.f32 %v1655, %v1990
        %v1992 = vand.u32 %v1991, 4294901760
        %1993 = vmatpush.msra.mxu0 %v1992
        %v1994 = vand.u32 %v1653, 4294901760
        %v1995 = vsub.f32 %v1653, %v1994
        %v1996 = vand.u32 %v1995, 4294901760
        %1997 = vmatpush.msra.mxu0 %v1996
        %v1998 = vand.u32 %v1651, 4294901760
        %v1999 = vsub.f32 %v1651, %v1998
        %v2000 = vand.u32 %v1999, 4294901760
        %2001 = vmatpush.msra.mxu0 %v2000
        %v2002 = vand.u32 %v1649, 4294901760
        %v2003 = vsub.f32 %v1649, %v2002
        %v2004 = vand.u32 %v2003, 4294901760
        %2005 = vmatpush.msra.mxu0 %v2004
        %v2006 = vand.u32 %v1647, 4294901760
        %v2007 = vsub.f32 %v1647, %v2006
        %v2008 = vand.u32 %v2007, 4294901760
        %2009 = vmatpush.msra.mxu0 %v2008
        %v2010 = vand.u32 %v216, 4294901760
        %2011 = vmatmul.f32.gmra.mxu0 %v2010
        %v2012 = vpop.f32.mrf.mxu0
        %v2013 = vadd.f32 %v1944, %v2012
        %2014 = vdwg.mxu0
        %v2015 = vand.u32 %v1677, 4294901760
        %2016 = vmatpush.msra.mxu0 %v2015
        %v2017 = vand.u32 %v1675, 4294901760
        %2018 = vmatpush.msra.mxu0 %v2017
        %v2019 = vand.u32 %v1673, 4294901760
        %2020 = vmatpush.msra.mxu0 %v2019
        %v2021 = vand.u32 %v1671, 4294901760
        %2022 = vmatpush.msra.mxu0 %v2021
        %v2023 = vand.u32 %v1669, 4294901760
        %2024 = vmatpush.msra.mxu0 %v2023
        %v2025 = vand.u32 %v1667, 4294901760
        %2026 = vmatpush.msra.mxu0 %v2025
        %v2027 = vand.u32 %v1665, 4294901760
        %2028 = vmatpush.msra.mxu0 %v2027
        %v2029 = vand.u32 %v1663, 4294901760
        %2030 = vmatpush.msra.mxu0 %v2029
        %v2031 = vand.u32 %v1661, 4294901760
        %2032 = vmatpush.msra.mxu0 %v2031
        %v2033 = vand.u32 %v1659, 4294901760
        %2034 = vmatpush.msra.mxu0 %v2033
        %v2035 = vand.u32 %v1657, 4294901760
        %2036 = vmatpush.msra.mxu0 %v2035
        %v2037 = vand.u32 %v1655, 4294901760
        %2038 = vmatpush.msra.mxu0 %v2037
        %v2039 = vand.u32 %v1653, 4294901760
        %2040 = vmatpush.msra.mxu0 %v2039
        %v2041 = vand.u32 %v1651, 4294901760
        %2042 = vmatpush.msra.mxu0 %v2041
        %v2043 = vand.u32 %v1649, 4294901760
        %2044 = vmatpush.msra.mxu0 %v2043
        %v2045 = vand.u32 %v1647, 4294901760
        %2046 = vmatpush.msra.mxu0 %v2045
        %v2047 = vand.u32 %v216, 4294901760
        %2048 = vmatmul.f32.gmra.mxu0 %v2047
        %v2049 = vpop.f32.mrf.mxu0
        %v2050 = vadd.f32 %v2013, %v2049
        %2051 = vdwg.mxu0
        %v2052 = vand.u32 %v1709, 4294901760
        %2053 = vmatpush.msra.mxu0 %v2052
        %v2054 = vand.u32 %v1707, 4294901760
        %2055 = vmatpush.msra.mxu0 %v2054
        %v2056 = vand.u32 %v1705, 4294901760
        %2057 = vmatpush.msra.mxu0 %v2056
        %v2058 = vand.u32 %v1703, 4294901760
        %2059 = vmatpush.msra.mxu0 %v2058
        %v2060 = vand.u32 %v1701, 4294901760
        %2061 = vmatpush.msra.mxu0 %v2060
        %v2062 = vand.u32 %v1699, 4294901760
        %2063 = vmatpush.msra.mxu0 %v2062
        %v2064 = vand.u32 %v1697, 4294901760
        %2065 = vmatpush.msra.mxu0 %v2064
        %v2066 = vand.u32 %v1695, 4294901760
        %2067 = vmatpush.msra.mxu0 %v2066
        %v2068 = vand.u32 %v1693, 4294901760
        %2069 = vmatpush.msra.mxu0 %v2068
        %v2070 = vand.u32 %v1691, 4294901760
        %2071 = vmatpush.msra.mxu0 %v2070
        %v2072 = vand.u32 %v1689, 4294901760
        %2073 = vmatpush.msra.mxu0 %v2072
        %v2074 = vand.u32 %v1687, 4294901760
        %2075 = vmatpush.msra.mxu0 %v2074
        %v2076 = vand.u32 %v1685, 4294901760
        %2077 = vmatpush.msra.mxu0 %v2076
        %v2078 = vand.u32 %v1683, 4294901760
        %2079 = vmatpush.msra.mxu0 %v2078
        %v2080 = vand.u32 %v1681, 4294901760
        %2081 = vmatpush.msra.mxu0 %v2080
        %v2082 = vand.u32 %v1679, 4294901760
        %2083 = vmatpush.msra.mxu0 %v2082
        %v2084 = vand.u32 %v217, 4294901760
        %v2085 = vsub.f32 %v217, %v2084
        %v2086 = vand.u32 %v2085, 4294901760
        %v2087 = vsub.f32 %v2085, %v2086
        %v2088 = vand.u32 %v2087, 4294901760
        %2089 = vmatmul.f32.gmra.mxu0 %v2088
        %v2090 = vpop.f32.mrf.mxu0
        %v2091 = vadd.f32 %v2050, %v2090
        %2092 = vdwg.mxu0
        %v2093 = vand.u32 %v1709, 4294901760
        %v2094 = vsub.f32 %v1709, %v2093
        %v2095 = vand.u32 %v2094, 4294901760
        %v2096 = vsub.f32 %v2094, %v2095
        %v2097 = vand.u32 %v2096, 4294901760
        %2098 = vmatpush.msra.mxu0 %v2097
        %v2099 = vand.u32 %v1707, 4294901760
        %v2100 = vsub.f32 %v1707, %v2099
        %v2101 = vand.u32 %v2100, 4294901760
        %v2102 = vsub.f32 %v2100, %v2101
        %v2103 = vand.u32 %v2102, 4294901760
        %2104 = vmatpush.msra.mxu0 %v2103
        %v2105 = vand.u32 %v1705, 4294901760
        %v2106 = vsub.f32 %v1705, %v2105
        %v2107 = vand.u32 %v2106, 4294901760
        %v2108 = vsub.f32 %v2106, %v2107
        %v2109 = vand.u32 %v2108, 4294901760
        %2110 = vmatpush.msra.mxu0 %v2109
        %v2111 = vand.u32 %v1703, 4294901760
        %v2112 = vsub.f32 %v1703, %v2111
        %v2113 = vand.u32 %v2112, 4294901760
        %v2114 = vsub.f32 %v2112, %v2113
        %v2115 = vand.u32 %v2114, 4294901760
        %2116 = vmatpush.msra.mxu0 %v2115
        %v2117 = vand.u32 %v1701, 4294901760
        %v2118 = vsub.f32 %v1701, %v2117
        %v2119 = vand.u32 %v2118, 4294901760
        %v2120 = vsub.f32 %v2118, %v2119
        %v2121 = vand.u32 %v2120, 4294901760
        %2122 = vmatpush.msra.mxu0 %v2121
        %v2123 = vand.u32 %v1699, 4294901760
        %v2124 = vsub.f32 %v1699, %v2123
        %v2125 = vand.u32 %v2124, 4294901760
        %v2126 = vsub.f32 %v2124, %v2125
        %v2127 = vand.u32 %v2126, 4294901760
        %2128 = vmatpush.msra.mxu0 %v2127
        %v2129 = vand.u32 %v1697, 4294901760
        %v2130 = vsub.f32 %v1697, %v2129
        %v2131 = vand.u32 %v2130, 4294901760
        %v2132 = vsub.f32 %v2130, %v2131
        %v2133 = vand.u32 %v2132, 4294901760
        %2134 = vmatpush.msra.mxu0 %v2133
        %v2135 = vand.u32 %v1695, 4294901760
        %v2136 = vsub.f32 %v1695, %v2135
        %v2137 = vand.u32 %v2136, 4294901760
        %v2138 = vsub.f32 %v2136, %v2137
        %v2139 = vand.u32 %v2138, 4294901760
        %2140 = vmatpush.msra.mxu0 %v2139
        %v2141 = vand.u32 %v1693, 4294901760
        %v2142 = vsub.f32 %v1693, %v2141
        %v2143 = vand.u32 %v2142, 4294901760
        %v2144 = vsub.f32 %v2142, %v2143
        %v2145 = vand.u32 %v2144, 4294901760
        %2146 = vmatpush.msra.mxu0 %v2145
        %v2147 = vand.u32 %v1691, 4294901760
        %v2148 = vsub.f32 %v1691, %v2147
        %v2149 = vand.u32 %v2148, 4294901760
        %v2150 = vsub.f32 %v2148, %v2149
        %v2151 = vand.u32 %v2150, 4294901760
        %2152 = vmatpush.msra.mxu0 %v2151
        %v2153 = vand.u32 %v1689, 4294901760
        %v2154 = vsub.f32 %v1689, %v2153
        %v2155 = vand.u32 %v2154, 4294901760
        %v2156 = vsub.f32 %v2154, %v2155
        %v2157 = vand.u32 %v2156, 4294901760
        %2158 = vmatpush.msra.mxu0 %v2157
        %v2159 = vand.u32 %v1687, 4294901760
        %v2160 = vsub.f32 %v1687, %v2159
        %v2161 = vand.u32 %v2160, 4294901760
        %v2162 = vsub.f32 %v2160, %v2161
        %v2163 = vand.u32 %v2162, 4294901760
        %2164 = vmatpush.msra.mxu0 %v2163
        %v2165 = vand.u32 %v1685, 4294901760
        %v2166 = vsub.f32 %v1685, %v2165
        %v2167 = vand.u32 %v2166, 4294901760
        %v2168 = vsub.f32 %v2166, %v2167
        %v2169 = vand.u32 %v2168, 4294901760
        %2170 = vmatpush.msra.mxu0 %v2169
        %v2171 = vand.u32 %v1683, 4294901760
        %v2172 = vsub.f32 %v1683, %v2171
        %v2173 = vand.u32 %v2172, 4294901760
        %v2174 = vsub.f32 %v2172, %v2173
        %v2175 = vand.u32 %v2174, 4294901760
        %2176 = vmatpush.msra.mxu0 %v2175
        %v2177 = vand.u32 %v1681, 4294901760
        %v2178 = vsub.f32 %v1681, %v2177
        %v2179 = vand.u32 %v2178, 4294901760
        %v2180 = vsub.f32 %v2178, %v2179
        %v2181 = vand.u32 %v2180, 4294901760
        %2182 = vmatpush.msra.mxu0 %v2181
        %v2183 = vand.u32 %v1679, 4294901760
        %v2184 = vsub.f32 %v1679, %v2183
        %v2185 = vand.u32 %v2184, 4294901760
        %v2186 = vsub.f32 %v2184, %v2185
        %v2187 = vand.u32 %v2186, 4294901760
        %2188 = vmatpush.msra.mxu0 %v2187
        %v2189 = vand.u32 %v217, 4294901760
        %2190 = vmatmul.f32.gmra.mxu0 %v2189
        %v2191 = vpop.f32.mrf.mxu0
        %v2192 = vadd.f32 %v2091, %v2191
        %2193 = vdwg.mxu0
        %v2194 = vand.u32 %v1709, 4294901760
        %v2195 = vsub.f32 %v1709, %v2194
        %2196 = vmatpush.msra.mxu0 %v2195
        %v2197 = vand.u32 %v1707, 4294901760
        %v2198 = vsub.f32 %v1707, %v2197
        %2199 = vmatpush.msra.mxu0 %v2198
        %v2200 = vand.u32 %v1705, 4294901760
        %v2201 = vsub.f32 %v1705, %v2200
        %2202 = vmatpush.msra.mxu0 %v2201
        %v2203 = vand.u32 %v1703, 4294901760
        %v2204 = vsub.f32 %v1703, %v2203
        %2205 = vmatpush.msra.mxu0 %v2204
        %v2206 = vand.u32 %v1701, 4294901760
        %v2207 = vsub.f32 %v1701, %v2206
        %2208 = vmatpush.msra.mxu0 %v2207
        %v2209 = vand.u32 %v1699, 4294901760
        %v2210 = vsub.f32 %v1699, %v2209
        %2211 = vmatpush.msra.mxu0 %v2210
        %v2212 = vand.u32 %v1697, 4294901760
        %v2213 = vsub.f32 %v1697, %v2212
        %2214 = vmatpush.msra.mxu0 %v2213
        %v2215 = vand.u32 %v1695, 4294901760
        %v2216 = vsub.f32 %v1695, %v2215
        %2217 = vmatpush.msra.mxu0 %v2216
        %v2218 = vand.u32 %v1693, 4294901760
        %v2219 = vsub.f32 %v1693, %v2218
        %2220 = vmatpush.msra.mxu0 %v2219
        %v2221 = vand.u32 %v1691, 4294901760
        %v2222 = vsub.f32 %v1691, %v2221
        %2223 = vmatpush.msra.mxu0 %v2222
        %v2224 = vand.u32 %v1689, 4294901760
        %v2225 = vsub.f32 %v1689, %v2224
        %2226 = vmatpush.msra.mxu0 %v2225
        %v2227 = vand.u32 %v1687, 4294901760
        %v2228 = vsub.f32 %v1687, %v2227
        %2229 = vmatpush.msra.mxu0 %v2228
        %v2230 = vand.u32 %v1685, 4294901760
        %v2231 = vsub.f32 %v1685, %v2230
        %2232 = vmatpush.msra.mxu0 %v2231
        %v2233 = vand.u32 %v1683, 4294901760
        %v2234 = vsub.f32 %v1683, %v2233
        %2235 = vmatpush.msra.mxu0 %v2234
        %v2236 = vand.u32 %v1681, 4294901760
        %v2237 = vsub.f32 %v1681, %v2236
        %2238 = vmatpush.msra.mxu0 %v2237
        %v2239 = vand.u32 %v1679, 4294901760
        %v2240 = vsub.f32 %v1679, %v2239
        %2241 = vmatpush.msra.mxu0 %v2240
        %v2242 = vand.u32 %v217, 4294901760
        %v2243 = vsub.f32 %v217, %v2242
        %2244 = vmatmul.f32.gmra.mxu0 %v2243
        %v2245 = vpop.f32.mrf.mxu0
        %v2246 = vadd.f32 %v2192, %v2245
        %2247 = vdwg.mxu0
        %v2248 = vand.u32 %v1709, 4294901760
        %2249 = vmatpush.msra.mxu0 %v2248
        %v2250 = vand.u32 %v1707, 4294901760
        %2251 = vmatpush.msra.mxu0 %v2250
        %v2252 = vand.u32 %v1705, 4294901760
        %2253 = vmatpush.msra.mxu0 %v2252
        %v2254 = vand.u32 %v1703, 4294901760
        %2255 = vmatpush.msra.mxu0 %v2254
        %v2256 = vand.u32 %v1701, 4294901760
        %2257 = vmatpush.msra.mxu0 %v2256
        %v2258 = vand.u32 %v1699, 4294901760
        %2259 = vmatpush.msra.mxu0 %v2258
        %v2260 = vand.u32 %v1697, 4294901760
        %2261 = vmatpush.msra.mxu0 %v2260
        %v2262 = vand.u32 %v1695, 4294901760
        %2263 = vmatpush.msra.mxu0 %v2262
        %v2264 = vand.u32 %v1693, 4294901760
        %2265 = vmatpush.msra.mxu0 %v2264
        %v2266 = vand.u32 %v1691, 4294901760
        %2267 = vmatpush.msra.mxu0 %v2266
        %v2268 = vand.u32 %v1689, 4294901760
        %2269 = vmatpush.msra.mxu0 %v2268
        %v2270 = vand.u32 %v1687, 4294901760
        %2271 = vmatpush.msra.mxu0 %v2270
        %v2272 = vand.u32 %v1685, 4294901760
        %2273 = vmatpush.msra.mxu0 %v2272
        %v2274 = vand.u32 %v1683, 4294901760
        %2275 = vmatpush.msra.mxu0 %v2274
        %v2276 = vand.u32 %v1681, 4294901760
        %2277 = vmatpush.msra.mxu0 %v2276
        %v2278 = vand.u32 %v1679, 4294901760
        %2279 = vmatpush.msra.mxu0 %v2278
        %v2280 = vand.u32 %v217, 4294901760
        %v2281 = vsub.f32 %v217, %v2280
        %v2282 = vand.u32 %v2281, 4294901760
        %2283 = vmatmul.f32.gmra.mxu0 %v2282
        %v2284 = vpop.f32.mrf.mxu0
        %v2285 = vadd.f32 %v2246, %v2284
        %2286 = vdwg.mxu0
        %v2287 = vand.u32 %v1709, 4294901760
        %v2288 = vsub.f32 %v1709, %v2287
        %v2289 = vand.u32 %v2288, 4294901760
        %2290 = vmatpush.msra.mxu0 %v2289
        %v2291 = vand.u32 %v1707, 4294901760
        %v2292 = vsub.f32 %v1707, %v2291
        %v2293 = vand.u32 %v2292, 4294901760
        %2294 = vmatpush.msra.mxu0 %v2293
        %v2295 = vand.u32 %v1705, 4294901760
        %v2296 = vsub.f32 %v1705, %v2295
        %v2297 = vand.u32 %v2296, 4294901760
        %2298 = vmatpush.msra.mxu0 %v2297
        %v2299 = vand.u32 %v1703, 4294901760
        %v2300 = vsub.f32 %v1703, %v2299
        %v2301 = vand.u32 %v2300, 4294901760
        %2302 = vmatpush.msra.mxu0 %v2301
        %v2303 = vand.u32 %v1701, 4294901760
        %v2304 = vsub.f32 %v1701, %v2303
        %v2305 = vand.u32 %v2304, 4294901760
        %2306 = vmatpush.msra.mxu0 %v2305
        %v2307 = vand.u32 %v1699, 4294901760
        %v2308 = vsub.f32 %v1699, %v2307
        %v2309 = vand.u32 %v2308, 4294901760
        %2310 = vmatpush.msra.mxu0 %v2309
        %v2311 = vand.u32 %v1697, 4294901760
        %v2312 = vsub.f32 %v1697, %v2311
        %v2313 = vand.u32 %v2312, 4294901760
        %2314 = vmatpush.msra.mxu0 %v2313
        %v2315 = vand.u32 %v1695, 4294901760
        %v2316 = vsub.f32 %v1695, %v2315
        %v2317 = vand.u32 %v2316, 4294901760
        %2318 = vmatpush.msra.mxu0 %v2317
        %v2319 = vand.u32 %v1693, 4294901760
        %v2320 = vsub.f32 %v1693, %v2319
        %v2321 = vand.u32 %v2320, 4294901760
        %2322 = vmatpush.msra.mxu0 %v2321
        %v2323 = vand.u32 %v1691, 4294901760
        %v2324 = vsub.f32 %v1691, %v2323
        %v2325 = vand.u32 %v2324, 4294901760
        %2326 = vmatpush.msra.mxu0 %v2325
        %v2327 = vand.u32 %v1689, 4294901760
        %v2328 = vsub.f32 %v1689, %v2327
        %v2329 = vand.u32 %v2328, 4294901760
        %2330 = vmatpush.msra.mxu0 %v2329
        %v2331 = vand.u32 %v1687, 4294901760
        %v2332 = vsub.f32 %v1687, %v2331
        %v2333 = vand.u32 %v2332, 4294901760
        %2334 = vmatpush.msra.mxu0 %v2333
        %v2335 = vand.u32 %v1685, 4294901760
        %v2336 = vsub.f32 %v1685, %v2335
        %v2337 = vand.u32 %v2336, 4294901760
        %2338 = vmatpush.msra.mxu0 %v2337
        %v2339 = vand.u32 %v1683, 4294901760
        %v2340 = vsub.f32 %v1683, %v2339
        %v2341 = vand.u32 %v2340, 4294901760
        %2342 = vmatpush.msra.mxu0 %v2341
        %v2343 = vand.u32 %v1681, 4294901760
        %v2344 = vsub.f32 %v1681, %v2343
        %v2345 = vand.u32 %v2344, 4294901760
        %2346 = vmatpush.msra.mxu0 %v2345
        %v2347 = vand.u32 %v1679, 4294901760
        %v2348 = vsub.f32 %v1679, %v2347
        %v2349 = vand.u32 %v2348, 4294901760
        %2350 = vmatpush.msra.mxu0 %v2349
        %v2351 = vand.u32 %v217, 4294901760
        %2352 = vmatmul.f32.gmra.mxu0 %v2351
        %v2353 = vpop.f32.mrf.mxu0
        %v2354 = vadd.f32 %v2285, %v2353
        %2355 = vdwg.mxu0
        %v2356 = vand.u32 %v1709, 4294901760
        %2357 = vmatpush.msra.mxu0 %v2356
        %v2358 = vand.u32 %v1707, 4294901760
        %2359 = vmatpush.msra.mxu0 %v2358
        %v2360 = vand.u32 %v1705, 4294901760
        %2361 = vmatpush.msra.mxu0 %v2360
        %v2362 = vand.u32 %v1703, 4294901760
        %2363 = vmatpush.msra.mxu0 %v2362
        %v2364 = vand.u32 %v1701, 4294901760
        %2365 = vmatpush.msra.mxu0 %v2364
        %v2366 = vand.u32 %v1699, 4294901760
        %2367 = vmatpush.msra.mxu0 %v2366
        %v2368 = vand.u32 %v1697, 4294901760
        %2369 = vmatpush.msra.mxu0 %v2368
        %v2370 = vand.u32 %v1695, 4294901760
        %2371 = vmatpush.msra.mxu0 %v2370
        %v2372 = vand.u32 %v1693, 4294901760
        %2373 = vmatpush.msra.mxu0 %v2372
        %v2374 = vand.u32 %v1691, 4294901760
        %2375 = vmatpush.msra.mxu0 %v2374
        %v2376 = vand.u32 %v1689, 4294901760
        %2377 = vmatpush.msra.mxu0 %v2376
        %v2378 = vand.u32 %v1687, 4294901760
        %2379 = vmatpush.msra.mxu0 %v2378
        %v2380 = vand.u32 %v1685, 4294901760
        %2381 = vmatpush.msra.mxu0 %v2380
        %v2382 = vand.u32 %v1683, 4294901760
        %2383 = vmatpush.msra.mxu0 %v2382
        %v2384 = vand.u32 %v1681, 4294901760
        %2385 = vmatpush.msra.mxu0 %v2384
        %v2386 = vand.u32 %v1679, 4294901760
        %2387 = vmatpush.msra.mxu0 %v2386
        %v2388 = vand.u32 %v217, 4294901760
        %2389 = vmatmul.f32.gmra.mxu0 %v2388
        %v2390 = vpop.f32.mrf.mxu0
        %v2391 = vadd.f32 %v2354, %v2390
        %2392 = vdwg.mxu0
        %v2393 = vand.u32 %v1678, 4294901760
        %2394 = vmatpush.msra.mxu0 %v2393
        %v2395 = vand.u32 %v1676, 4294901760
        %2396 = vmatpush.msra.mxu0 %v2395
        %v2397 = vand.u32 %v1674, 4294901760
        %2398 = vmatpush.msra.mxu0 %v2397
        %v2399 = vand.u32 %v1672, 4294901760
        %2400 = vmatpush.msra.mxu0 %v2399
        %v2401 = vand.u32 %v1670, 4294901760
        %2402 = vmatpush.msra.mxu0 %v2401
        %v2403 = vand.u32 %v1668, 4294901760
        %2404 = vmatpush.msra.mxu0 %v2403
        %v2405 = vand.u32 %v1666, 4294901760
        %2406 = vmatpush.msra.mxu0 %v2405
        %v2407 = vand.u32 %v1664, 4294901760
        %2408 = vmatpush.msra.mxu0 %v2407
        %v2409 = vand.u32 %v1662, 4294901760
        %2410 = vmatpush.msra.mxu0 %v2409
        %v2411 = vand.u32 %v1660, 4294901760
        %2412 = vmatpush.msra.mxu0 %v2411
        %v2413 = vand.u32 %v1658, 4294901760
        %2414 = vmatpush.msra.mxu0 %v2413
        %v2415 = vand.u32 %v1656, 4294901760
        %2416 = vmatpush.msra.mxu0 %v2415
        %v2417 = vand.u32 %v1654, 4294901760
        %2418 = vmatpush.msra.mxu0 %v2417
        %v2419 = vand.u32 %v1652, 4294901760
        %2420 = vmatpush.msra.mxu0 %v2419
        %v2421 = vand.u32 %v1650, 4294901760
        %2422 = vmatpush.msra.mxu0 %v2421
        %v2423 = vand.u32 %v1648, 4294901760
        %2424 = vmatpush.msra.mxu0 %v2423
        %v2425 = vand.u32 %v216, 4294901760
        %v2426 = vsub.f32 %v216, %v2425
        %v2427 = vand.u32 %v2426, 4294901760
        %v2428 = vsub.f32 %v2426, %v2427
        %v2429 = vand.u32 %v2428, 4294901760
        %2430 = vmatmul.f32.gmra.mxu0 %v2429
        %v2431 = vpop.f32.mrf.mxu0
        %v2432 = vadd.f32 0.0, %v2431
        %2433 = vdwg.mxu0
        %v2434 = vand.u32 %v1678, 4294901760
        %v2435 = vsub.f32 %v1678, %v2434
        %v2436 = vand.u32 %v2435, 4294901760
        %v2437 = vsub.f32 %v2435, %v2436
        %v2438 = vand.u32 %v2437, 4294901760
        %2439 = vmatpush.msra.mxu0 %v2438
        %v2440 = vand.u32 %v1676, 4294901760
        %v2441 = vsub.f32 %v1676, %v2440
        %v2442 = vand.u32 %v2441, 4294901760
        %v2443 = vsub.f32 %v2441, %v2442
        %v2444 = vand.u32 %v2443, 4294901760
        %2445 = vmatpush.msra.mxu0 %v2444
        %v2446 = vand.u32 %v1674, 4294901760
        %v2447 = vsub.f32 %v1674, %v2446
        %v2448 = vand.u32 %v2447, 4294901760
        %v2449 = vsub.f32 %v2447, %v2448
        %v2450 = vand.u32 %v2449, 4294901760
        %2451 = vmatpush.msra.mxu0 %v2450
        %v2452 = vand.u32 %v1672, 4294901760
        %v2453 = vsub.f32 %v1672, %v2452
        %v2454 = vand.u32 %v2453, 4294901760
        %v2455 = vsub.f32 %v2453, %v2454
        %v2456 = vand.u32 %v2455, 4294901760
        %2457 = vmatpush.msra.mxu0 %v2456
        %v2458 = vand.u32 %v1670, 4294901760
        %v2459 = vsub.f32 %v1670, %v2458
        %v2460 = vand.u32 %v2459, 4294901760
        %v2461 = vsub.f32 %v2459, %v2460
        %v2462 = vand.u32 %v2461, 4294901760
        %2463 = vmatpush.msra.mxu0 %v2462
        %v2464 = vand.u32 %v1668, 4294901760
        %v2465 = vsub.f32 %v1668, %v2464
        %v2466 = vand.u32 %v2465, 4294901760
        %v2467 = vsub.f32 %v2465, %v2466
        %v2468 = vand.u32 %v2467, 4294901760
        %2469 = vmatpush.msra.mxu0 %v2468
        %v2470 = vand.u32 %v1666, 4294901760
        %v2471 = vsub.f32 %v1666, %v2470
        %v2472 = vand.u32 %v2471, 4294901760
        %v2473 = vsub.f32 %v2471, %v2472
        %v2474 = vand.u32 %v2473, 4294901760
        %2475 = vmatpush.msra.mxu0 %v2474
        %v2476 = vand.u32 %v1664, 4294901760
        %v2477 = vsub.f32 %v1664, %v2476
        %v2478 = vand.u32 %v2477, 4294901760
        %v2479 = vsub.f32 %v2477, %v2478
        %v2480 = vand.u32 %v2479, 4294901760
        %2481 = vmatpush.msra.mxu0 %v2480
        %v2482 = vand.u32 %v1662, 4294901760
        %v2483 = vsub.f32 %v1662, %v2482
        %v2484 = vand.u32 %v2483, 4294901760
        %v2485 = vsub.f32 %v2483, %v2484
        %v2486 = vand.u32 %v2485, 4294901760
        %2487 = vmatpush.msra.mxu0 %v2486
        %v2488 = vand.u32 %v1660, 4294901760
        %v2489 = vsub.f32 %v1660, %v2488
        %v2490 = vand.u32 %v2489, 4294901760
        %v2491 = vsub.f32 %v2489, %v2490
        %v2492 = vand.u32 %v2491, 4294901760
        %2493 = vmatpush.msra.mxu0 %v2492
        %v2494 = vand.u32 %v1658, 4294901760
        %v2495 = vsub.f32 %v1658, %v2494
        %v2496 = vand.u32 %v2495, 4294901760
        %v2497 = vsub.f32 %v2495, %v2496
        %v2498 = vand.u32 %v2497, 4294901760
        %2499 = vmatpush.msra.mxu0 %v2498
        %v2500 = vand.u32 %v1656, 4294901760
        %v2501 = vsub.f32 %v1656, %v2500
        %v2502 = vand.u32 %v2501, 4294901760
        %v2503 = vsub.f32 %v2501, %v2502
        %v2504 = vand.u32 %v2503, 4294901760
        %2505 = vmatpush.msra.mxu0 %v2504
        %v2506 = vand.u32 %v1654, 4294901760
        %v2507 = vsub.f32 %v1654, %v2506
        %v2508 = vand.u32 %v2507, 4294901760
        %v2509 = vsub.f32 %v2507, %v2508
        %v2510 = vand.u32 %v2509, 4294901760
        %2511 = vmatpush.msra.mxu0 %v2510
        %v2512 = vand.u32 %v1652, 4294901760
        %v2513 = vsub.f32 %v1652, %v2512
        %v2514 = vand.u32 %v2513, 4294901760
        %v2515 = vsub.f32 %v2513, %v2514
        %v2516 = vand.u32 %v2515, 4294901760
        %2517 = vmatpush.msra.mxu0 %v2516
        %v2518 = vand.u32 %v1650, 4294901760
        %v2519 = vsub.f32 %v1650, %v2518
        %v2520 = vand.u32 %v2519, 4294901760
        %v2521 = vsub.f32 %v2519, %v2520
        %v2522 = vand.u32 %v2521, 4294901760
        %2523 = vmatpush.msra.mxu0 %v2522
        %v2524 = vand.u32 %v1648, 4294901760
        %v2525 = vsub.f32 %v1648, %v2524
        %v2526 = vand.u32 %v2525, 4294901760
        %v2527 = vsub.f32 %v2525, %v2526
        %v2528 = vand.u32 %v2527, 4294901760
        %2529 = vmatpush.msra.mxu0 %v2528
        %v2530 = vand.u32 %v216, 4294901760
        %2531 = vmatmul.f32.gmra.mxu0 %v2530
        %v2532 = vpop.f32.mrf.mxu0
        %v2533 = vadd.f32 %v2432, %v2532
        %2534 = vdwg.mxu0
        %v2535 = vand.u32 %v1678, 4294901760
        %v2536 = vsub.f32 %v1678, %v2535
        %2537 = vmatpush.msra.mxu0 %v2536
        %v2538 = vand.u32 %v1676, 4294901760
        %v2539 = vsub.f32 %v1676, %v2538
        %2540 = vmatpush.msra.mxu0 %v2539
        %v2541 = vand.u32 %v1674, 4294901760
        %v2542 = vsub.f32 %v1674, %v2541
        %2543 = vmatpush.msra.mxu0 %v2542
        %v2544 = vand.u32 %v1672, 4294901760
        %v2545 = vsub.f32 %v1672, %v2544
        %2546 = vmatpush.msra.mxu0 %v2545
        %v2547 = vand.u32 %v1670, 4294901760
        %v2548 = vsub.f32 %v1670, %v2547
        %2549 = vmatpush.msra.mxu0 %v2548
        %v2550 = vand.u32 %v1668, 4294901760
        %v2551 = vsub.f32 %v1668, %v2550
        %2552 = vmatpush.msra.mxu0 %v2551
        %v2553 = vand.u32 %v1666, 4294901760
        %v2554 = vsub.f32 %v1666, %v2553
        %2555 = vmatpush.msra.mxu0 %v2554
        %v2556 = vand.u32 %v1664, 4294901760
        %v2557 = vsub.f32 %v1664, %v2556
        %2558 = vmatpush.msra.mxu0 %v2557
        %v2559 = vand.u32 %v1662, 4294901760
        %v2560 = vsub.f32 %v1662, %v2559
        %2561 = vmatpush.msra.mxu0 %v2560
        %v2562 = vand.u32 %v1660, 4294901760
        %v2563 = vsub.f32 %v1660, %v2562
        %2564 = vmatpush.msra.mxu0 %v2563
        %v2565 = vand.u32 %v1658, 4294901760
        %v2566 = vsub.f32 %v1658, %v2565
        %2567 = vmatpush.msra.mxu0 %v2566
        %v2568 = vand.u32 %v1656, 4294901760
        %v2569 = vsub.f32 %v1656, %v2568
        %2570 = vmatpush.msra.mxu0 %v2569
        %v2571 = vand.u32 %v1654, 4294901760
        %v2572 = vsub.f32 %v1654, %v2571
        %2573 = vmatpush.msra.mxu0 %v2572
        %v2574 = vand.u32 %v1652, 4294901760
        %v2575 = vsub.f32 %v1652, %v2574
        %2576 = vmatpush.msra.mxu0 %v2575
        %v2577 = vand.u32 %v1650, 4294901760
        %v2578 = vsub.f32 %v1650, %v2577
        %2579 = vmatpush.msra.mxu0 %v2578
        %v2580 = vand.u32 %v1648, 4294901760
        %v2581 = vsub.f32 %v1648, %v2580
        %2582 = vmatpush.msra.mxu0 %v2581
        %v2583 = vand.u32 %v216, 4294901760
        %v2584 = vsub.f32 %v216, %v2583
        %2585 = vmatmul.f32.gmra.mxu0 %v2584
        %v2586 = vpop.f32.mrf.mxu0
        %v2587 = vadd.f32 %v2533, %v2586
        %2588 = vdwg.mxu0
        %v2589 = vand.u32 %v1678, 4294901760
        %2590 = vmatpush.msra.mxu0 %v2589
        %v2591 = vand.u32 %v1676, 4294901760
        %2592 = vmatpush.msra.mxu0 %v2591
        %v2593 = vand.u32 %v1674, 4294901760
        %2594 = vmatpush.msra.mxu0 %v2593
        %v2595 = vand.u32 %v1672, 4294901760
        %2596 = vmatpush.msra.mxu0 %v2595
        %v2597 = vand.u32 %v1670, 4294901760
        %2598 = vmatpush.msra.mxu0 %v2597
        %v2599 = vand.u32 %v1668, 4294901760
        %2600 = vmatpush.msra.mxu0 %v2599
        %v2601 = vand.u32 %v1666, 4294901760
        %2602 = vmatpush.msra.mxu0 %v2601
        %v2603 = vand.u32 %v1664, 4294901760
        %2604 = vmatpush.msra.mxu0 %v2603
        %v2605 = vand.u32 %v1662, 4294901760
        %2606 = vmatpush.msra.mxu0 %v2605
        %v2607 = vand.u32 %v1660, 4294901760
        %2608 = vmatpush.msra.mxu0 %v2607
        %v2609 = vand.u32 %v1658, 4294901760
        %2610 = vmatpush.msra.mxu0 %v2609
        %v2611 = vand.u32 %v1656, 4294901760
        %2612 = vmatpush.msra.mxu0 %v2611
        %v2613 = vand.u32 %v1654, 4294901760
        %2614 = vmatpush.msra.mxu0 %v2613
        %v2615 = vand.u32 %v1652, 4294901760
        %2616 = vmatpush.msra.mxu0 %v2615
        %v2617 = vand.u32 %v1650, 4294901760
        %2618 = vmatpush.msra.mxu0 %v2617
        %v2619 = vand.u32 %v1648, 4294901760
        %2620 = vmatpush.msra.mxu0 %v2619
        %v2621 = vand.u32 %v216, 4294901760
        %v2622 = vsub.f32 %v216, %v2621
        %v2623 = vand.u32 %v2622, 4294901760
        %2624 = vmatmul.f32.gmra.mxu0 %v2623
        %v2625 = vpop.f32.mrf.mxu0
        %v2626 = vadd.f32 %v2587, %v2625
        %2627 = vdwg.mxu0
        %v2628 = vand.u32 %v1678, 4294901760
        %v2629 = vsub.f32 %v1678, %v2628
        %v2630 = vand.u32 %v2629, 4294901760
        %2631 = vmatpush.msra.mxu0 %v2630
        %v2632 = vand.u32 %v1676, 4294901760
        %v2633 = vsub.f32 %v1676, %v2632
        %v2634 = vand.u32 %v2633, 4294901760
        %2635 = vmatpush.msra.mxu0 %v2634
        %v2636 = vand.u32 %v1674, 4294901760
        %v2637 = vsub.f32 %v1674, %v2636
        %v2638 = vand.u32 %v2637, 4294901760
        %2639 = vmatpush.msra.mxu0 %v2638
        %v2640 = vand.u32 %v1672, 4294901760
        %v2641 = vsub.f32 %v1672, %v2640
        %v2642 = vand.u32 %v2641, 4294901760
        %2643 = vmatpush.msra.mxu0 %v2642
        %v2644 = vand.u32 %v1670, 4294901760
        %v2645 = vsub.f32 %v1670, %v2644
        %v2646 = vand.u32 %v2645, 4294901760
        %2647 = vmatpush.msra.mxu0 %v2646
        %v2648 = vand.u32 %v1668, 4294901760
        %v2649 = vsub.f32 %v1668, %v2648
        %v2650 = vand.u32 %v2649, 4294901760
        %2651 = vmatpush.msra.mxu0 %v2650
        %v2652 = vand.u32 %v1666, 4294901760
        %v2653 = vsub.f32 %v1666, %v2652
        %v2654 = vand.u32 %v2653, 4294901760
        %2655 = vmatpush.msra.mxu0 %v2654
        %v2656 = vand.u32 %v1664, 4294901760
        %v2657 = vsub.f32 %v1664, %v2656
        %v2658 = vand.u32 %v2657, 4294901760
        %2659 = vmatpush.msra.mxu0 %v2658
        %v2660 = vand.u32 %v1662, 4294901760
        %v2661 = vsub.f32 %v1662, %v2660
        %v2662 = vand.u32 %v2661, 4294901760
        %2663 = vmatpush.msra.mxu0 %v2662
        %v2664 = vand.u32 %v1660, 4294901760
        %v2665 = vsub.f32 %v1660, %v2664
        %v2666 = vand.u32 %v2665, 4294901760
        %2667 = vmatpush.msra.mxu0 %v2666
        %v2668 = vand.u32 %v1658, 4294901760
        %v2669 = vsub.f32 %v1658, %v2668
        %v2670 = vand.u32 %v2669, 4294901760
        %2671 = vmatpush.msra.mxu0 %v2670
        %v2672 = vand.u32 %v1656, 4294901760
        %v2673 = vsub.f32 %v1656, %v2672
        %v2674 = vand.u32 %v2673, 4294901760
        %2675 = vmatpush.msra.mxu0 %v2674
        %v2676 = vand.u32 %v1654, 4294901760
        %v2677 = vsub.f32 %v1654, %v2676
        %v2678 = vand.u32 %v2677, 4294901760
        %2679 = vmatpush.msra.mxu0 %v2678
        %v2680 = vand.u32 %v1652, 4294901760
        %v2681 = vsub.f32 %v1652, %v2680
        %v2682 = vand.u32 %v2681, 4294901760
        %2683 = vmatpush.msra.mxu0 %v2682
        %v2684 = vand.u32 %v1650, 4294901760
        %v2685 = vsub.f32 %v1650, %v2684
        %v2686 = vand.u32 %v2685, 4294901760
        %2687 = vmatpush.msra.mxu0 %v2686
        %v2688 = vand.u32 %v1648, 4294901760
        %v2689 = vsub.f32 %v1648, %v2688
        %v2690 = vand.u32 %v2689, 4294901760
        %2691 = vmatpush.msra.mxu0 %v2690
        %v2692 = vand.u32 %v216, 4294901760
        %2693 = vmatmul.f32.gmra.mxu0 %v2692
        %v2694 = vpop.f32.mrf.mxu0
        %v2695 = vadd.f32 %v2626, %v2694
        %2696 = vdwg.mxu0
        %v2697 = vand.u32 %v1678, 4294901760
        %2698 = vmatpush.msra.mxu0 %v2697
        %v2699 = vand.u32 %v1676, 4294901760
        %2700 = vmatpush.msra.mxu0 %v2699
        %v2701 = vand.u32 %v1674, 4294901760
        %2702 = vmatpush.msra.mxu0 %v2701
        %v2703 = vand.u32 %v1672, 4294901760
        %2704 = vmatpush.msra.mxu0 %v2703
        %v2705 = vand.u32 %v1670, 4294901760
        %2706 = vmatpush.msra.mxu0 %v2705
        %v2707 = vand.u32 %v1668, 4294901760
        %2708 = vmatpush.msra.mxu0 %v2707
        %v2709 = vand.u32 %v1666, 4294901760
        %2710 = vmatpush.msra.mxu0 %v2709
        %v2711 = vand.u32 %v1664, 4294901760
        %2712 = vmatpush.msra.mxu0 %v2711
        %v2713 = vand.u32 %v1662, 4294901760
        %2714 = vmatpush.msra.mxu0 %v2713
        %v2715 = vand.u32 %v1660, 4294901760
        %2716 = vmatpush.msra.mxu0 %v2715
        %v2717 = vand.u32 %v1658, 4294901760
        %2718 = vmatpush.msra.mxu0 %v2717
        %v2719 = vand.u32 %v1656, 4294901760
        %2720 = vmatpush.msra.mxu0 %v2719
        %v2721 = vand.u32 %v1654, 4294901760
        %2722 = vmatpush.msra.mxu0 %v2721
        %v2723 = vand.u32 %v1652, 4294901760
        %2724 = vmatpush.msra.mxu0 %v2723
        %v2725 = vand.u32 %v1650, 4294901760
        %2726 = vmatpush.msra.mxu0 %v2725
        %v2727 = vand.u32 %v1648, 4294901760
        %2728 = vmatpush.msra.mxu0 %v2727
        %v2729 = vand.u32 %v216, 4294901760
        %2730 = vmatmul.f32.gmra.mxu0 %v2729
        %v2731 = vpop.f32.mrf.mxu0
        %v2732 = vadd.f32 %v2695, %v2731
        %2733 = vdwg.mxu0
        %v2734 = vand.u32 %v1710, 4294901760
        %2735 = vmatpush.msra.mxu0 %v2734
        %v2736 = vand.u32 %v1708, 4294901760
        %2737 = vmatpush.msra.mxu0 %v2736
        %v2738 = vand.u32 %v1706, 4294901760
        %2739 = vmatpush.msra.mxu0 %v2738
        %v2740 = vand.u32 %v1704, 4294901760
        %2741 = vmatpush.msra.mxu0 %v2740
        %v2742 = vand.u32 %v1702, 4294901760
        %2743 = vmatpush.msra.mxu0 %v2742
        %v2744 = vand.u32 %v1700, 4294901760
        %2745 = vmatpush.msra.mxu0 %v2744
        %v2746 = vand.u32 %v1698, 4294901760
        %2747 = vmatpush.msra.mxu0 %v2746
        %v2748 = vand.u32 %v1696, 4294901760
        %2749 = vmatpush.msra.mxu0 %v2748
        %v2750 = vand.u32 %v1694, 4294901760
        %2751 = vmatpush.msra.mxu0 %v2750
        %v2752 = vand.u32 %v1692, 4294901760
        %2753 = vmatpush.msra.mxu0 %v2752
        %v2754 = vand.u32 %v1690, 4294901760
        %2755 = vmatpush.msra.mxu0 %v2754
        %v2756 = vand.u32 %v1688, 4294901760
        %2757 = vmatpush.msra.mxu0 %v2756
        %v2758 = vand.u32 %v1686, 4294901760
        %2759 = vmatpush.msra.mxu0 %v2758
        %v2760 = vand.u32 %v1684, 4294901760
        %2761 = vmatpush.msra.mxu0 %v2760
        %v2762 = vand.u32 %v1682, 4294901760
        %2763 = vmatpush.msra.mxu0 %v2762
        %v2764 = vand.u32 %v1680, 4294901760
        %2765 = vmatpush.msra.mxu0 %v2764
        %v2766 = vand.u32 %v217, 4294901760
        %v2767 = vsub.f32 %v217, %v2766
        %v2768 = vand.u32 %v2767, 4294901760
        %v2769 = vsub.f32 %v2767, %v2768
        %v2770 = vand.u32 %v2769, 4294901760
        %2771 = vmatmul.f32.gmra.mxu0 %v2770
        %v2772 = vpop.f32.mrf.mxu0
        %v2773 = vadd.f32 %v2732, %v2772
        %2774 = vdwg.mxu0
        %v2775 = vand.u32 %v1710, 4294901760
        %v2776 = vsub.f32 %v1710, %v2775
        %v2777 = vand.u32 %v2776, 4294901760
        %v2778 = vsub.f32 %v2776, %v2777
        %v2779 = vand.u32 %v2778, 4294901760
        %2780 = vmatpush.msra.mxu0 %v2779
        %v2781 = vand.u32 %v1708, 4294901760
        %v2782 = vsub.f32 %v1708, %v2781
        %v2783 = vand.u32 %v2782, 4294901760
        %v2784 = vsub.f32 %v2782, %v2783
        %v2785 = vand.u32 %v2784, 4294901760
        %2786 = vmatpush.msra.mxu0 %v2785
        %v2787 = vand.u32 %v1706, 4294901760
        %v2788 = vsub.f32 %v1706, %v2787
        %v2789 = vand.u32 %v2788, 4294901760
        %v2790 = vsub.f32 %v2788, %v2789
        %v2791 = vand.u32 %v2790, 4294901760
        %2792 = vmatpush.msra.mxu0 %v2791
        %v2793 = vand.u32 %v1704, 4294901760
        %v2794 = vsub.f32 %v1704, %v2793
        %v2795 = vand.u32 %v2794, 4294901760
        %v2796 = vsub.f32 %v2794, %v2795
        %v2797 = vand.u32 %v2796, 4294901760
        %2798 = vmatpush.msra.mxu0 %v2797
        %v2799 = vand.u32 %v1702, 4294901760
        %v2800 = vsub.f32 %v1702, %v2799
        %v2801 = vand.u32 %v2800, 4294901760
        %v2802 = vsub.f32 %v2800, %v2801
        %v2803 = vand.u32 %v2802, 4294901760
        %2804 = vmatpush.msra.mxu0 %v2803
        %v2805 = vand.u32 %v1700, 4294901760
        %v2806 = vsub.f32 %v1700, %v2805
        %v2807 = vand.u32 %v2806, 4294901760
        %v2808 = vsub.f32 %v2806, %v2807
        %v2809 = vand.u32 %v2808, 4294901760
        %2810 = vmatpush.msra.mxu0 %v2809
        %v2811 = vand.u32 %v1698, 4294901760
        %v2812 = vsub.f32 %v1698, %v2811
        %v2813 = vand.u32 %v2812, 4294901760
        %v2814 = vsub.f32 %v2812, %v2813
        %v2815 = vand.u32 %v2814, 4294901760
        %2816 = vmatpush.msra.mxu0 %v2815
        %v2817 = vand.u32 %v1696, 4294901760
        %v2818 = vsub.f32 %v1696, %v2817
        %v2819 = vand.u32 %v2818, 4294901760
        %v2820 = vsub.f32 %v2818, %v2819
        %v2821 = vand.u32 %v2820, 4294901760
        %2822 = vmatpush.msra.mxu0 %v2821
        %v2823 = vand.u32 %v1694, 4294901760
        %v2824 = vsub.f32 %v1694, %v2823
        %v2825 = vand.u32 %v2824, 4294901760
        %v2826 = vsub.f32 %v2824, %v2825
        %v2827 = vand.u32 %v2826, 4294901760
        %2828 = vmatpush.msra.mxu0 %v2827
        %v2829 = vand.u32 %v1692, 4294901760
        %v2830 = vsub.f32 %v1692, %v2829
        %v2831 = vand.u32 %v2830, 4294901760
        %v2832 = vsub.f32 %v2830, %v2831
        %v2833 = vand.u32 %v2832, 4294901760
        %2834 = vmatpush.msra.mxu0 %v2833
        %v2835 = vand.u32 %v1690, 4294901760
        %v2836 = vsub.f32 %v1690, %v2835
        %v2837 = vand.u32 %v2836, 4294901760
        %v2838 = vsub.f32 %v2836, %v2837
        %v2839 = vand.u32 %v2838, 4294901760
        %2840 = vmatpush.msra.mxu0 %v2839
        %v2841 = vand.u32 %v1688, 4294901760
        %v2842 = vsub.f32 %v1688, %v2841
        %v2843 = vand.u32 %v2842, 4294901760
        %v2844 = vsub.f32 %v2842, %v2843
        %v2845 = vand.u32 %v2844, 4294901760
        %2846 = vmatpush.msra.mxu0 %v2845
        %v2847 = vand.u32 %v1686, 4294901760
        %v2848 = vsub.f32 %v1686, %v2847
        %v2849 = vand.u32 %v2848, 4294901760
        %v2850 = vsub.f32 %v2848, %v2849
        %v2851 = vand.u32 %v2850, 4294901760
        %2852 = vmatpush.msra.mxu0 %v2851
        %v2853 = vand.u32 %v1684, 4294901760
        %v2854 = vsub.f32 %v1684, %v2853
        %v2855 = vand.u32 %v2854, 4294901760
        %v2856 = vsub.f32 %v2854, %v2855
        %v2857 = vand.u32 %v2856, 4294901760
        %2858 = vmatpush.msra.mxu0 %v2857
        %v2859 = vand.u32 %v1682, 4294901760
        %v2860 = vsub.f32 %v1682, %v2859
        %v2861 = vand.u32 %v2860, 4294901760
        %v2862 = vsub.f32 %v2860, %v2861
        %v2863 = vand.u32 %v2862, 4294901760
        %2864 = vmatpush.msra.mxu0 %v2863
        %v2865 = vand.u32 %v1680, 4294901760
        %v2866 = vsub.f32 %v1680, %v2865
        %v2867 = vand.u32 %v2866, 4294901760
        %v2868 = vsub.f32 %v2866, %v2867
        %v2869 = vand.u32 %v2868, 4294901760
        %2870 = vmatpush.msra.mxu0 %v2869
        %v2871 = vand.u32 %v217, 4294901760
        %2872 = vmatmul.f32.gmra.mxu0 %v2871
        %v2873 = vpop.f32.mrf.mxu0
        %v2874 = vadd.f32 %v2773, %v2873
        %2875 = vdwg.mxu0
        %v2876 = vand.u32 %v1710, 4294901760
        %v2877 = vsub.f32 %v1710, %v2876
        %2878 = vmatpush.msra.mxu0 %v2877
        %v2879 = vand.u32 %v1708, 4294901760
        %v2880 = vsub.f32 %v1708, %v2879
        %2881 = vmatpush.msra.mxu0 %v2880
        %v2882 = vand.u32 %v1706, 4294901760
        %v2883 = vsub.f32 %v1706, %v2882
        %2884 = vmatpush.msra.mxu0 %v2883
        %v2885 = vand.u32 %v1704, 4294901760
        %v2886 = vsub.f32 %v1704, %v2885
        %2887 = vmatpush.msra.mxu0 %v2886
        %v2888 = vand.u32 %v1702, 4294901760
        %v2889 = vsub.f32 %v1702, %v2888
        %2890 = vmatpush.msra.mxu0 %v2889
        %v2891 = vand.u32 %v1700, 4294901760
        %v2892 = vsub.f32 %v1700, %v2891
        %2893 = vmatpush.msra.mxu0 %v2892
        %v2894 = vand.u32 %v1698, 4294901760
        %v2895 = vsub.f32 %v1698, %v2894
        %2896 = vmatpush.msra.mxu0 %v2895
        %v2897 = vand.u32 %v1696, 4294901760
        %v2898 = vsub.f32 %v1696, %v2897
        %2899 = vmatpush.msra.mxu0 %v2898
        %v2900 = vand.u32 %v1694, 4294901760
        %v2901 = vsub.f32 %v1694, %v2900
        %2902 = vmatpush.msra.mxu0 %v2901
        %v2903 = vand.u32 %v1692, 4294901760
        %v2904 = vsub.f32 %v1692, %v2903
        %2905 = vmatpush.msra.mxu0 %v2904
        %v2906 = vand.u32 %v1690, 4294901760
        %v2907 = vsub.f32 %v1690, %v2906
        %2908 = vmatpush.msra.mxu0 %v2907
        %v2909 = vand.u32 %v1688, 4294901760
        %v2910 = vsub.f32 %v1688, %v2909
        %2911 = vmatpush.msra.mxu0 %v2910
        %v2912 = vand.u32 %v1686, 4294901760
        %v2913 = vsub.f32 %v1686, %v2912
        %2914 = vmatpush.msra.mxu0 %v2913
        %v2915 = vand.u32 %v1684, 4294901760
        %v2916 = vsub.f32 %v1684, %v2915
        %2917 = vmatpush.msra.mxu0 %v2916
        %v2918 = vand.u32 %v1682, 4294901760
        %v2919 = vsub.f32 %v1682, %v2918
        %2920 = vmatpush.msra.mxu0 %v2919
        %v2921 = vand.u32 %v1680, 4294901760
        %v2922 = vsub.f32 %v1680, %v2921
        %2923 = vmatpush.msra.mxu0 %v2922
        %v2924 = vand.u32 %v217, 4294901760
        %v2925 = vsub.f32 %v217, %v2924
        %2926 = vmatmul.f32.gmra.mxu0 %v2925
        %v2927 = vpop.f32.mrf.mxu0
        %v2928 = vadd.f32 %v2874, %v2927
        %2929 = vdwg.mxu0
        %v2930 = vand.u32 %v1710, 4294901760
        %2931 = vmatpush.msra.mxu0 %v2930
        %v2932 = vand.u32 %v1708, 4294901760
        %2933 = vmatpush.msra.mxu0 %v2932
        %v2934 = vand.u32 %v1706, 4294901760
        %2935 = vmatpush.msra.mxu0 %v2934
        %v2936 = vand.u32 %v1704, 4294901760
        %2937 = vmatpush.msra.mxu0 %v2936
        %v2938 = vand.u32 %v1702, 4294901760
        %2939 = vmatpush.msra.mxu0 %v2938
        %v2940 = vand.u32 %v1700, 4294901760
        %2941 = vmatpush.msra.mxu0 %v2940
        %v2942 = vand.u32 %v1698, 4294901760
        %2943 = vmatpush.msra.mxu0 %v2942
        %v2944 = vand.u32 %v1696, 4294901760
        %2945 = vmatpush.msra.mxu0 %v2944
        %v2946 = vand.u32 %v1694, 4294901760
        %2947 = vmatpush.msra.mxu0 %v2946
        %v2948 = vand.u32 %v1692, 4294901760
        %2949 = vmatpush.msra.mxu0 %v2948
        %v2950 = vand.u32 %v1690, 4294901760
        %2951 = vmatpush.msra.mxu0 %v2950
        %v2952 = vand.u32 %v1688, 4294901760
        %2953 = vmatpush.msra.mxu0 %v2952
        %v2954 = vand.u32 %v1686, 4294901760
        %2955 = vmatpush.msra.mxu0 %v2954
        %v2956 = vand.u32 %v1684, 4294901760
        %2957 = vmatpush.msra.mxu0 %v2956
        %v2958 = vand.u32 %v1682, 4294901760
        %2959 = vmatpush.msra.mxu0 %v2958
        %v2960 = vand.u32 %v1680, 4294901760
        %2961 = vmatpush.msra.mxu0 %v2960
        %v2962 = vand.u32 %v217, 4294901760
        %v2963 = vsub.f32 %v217, %v2962
        %v2964 = vand.u32 %v2963, 4294901760
        %2965 = vmatmul.f32.gmra.mxu0 %v2964
        %v2966 = vpop.f32.mrf.mxu0
        %v2967 = vadd.f32 %v2928, %v2966
        %2968 = vdwg.mxu0
        %v2969 = vand.u32 %v1710, 4294901760
        %v2970 = vsub.f32 %v1710, %v2969
        %v2971 = vand.u32 %v2970, 4294901760
        %2972 = vmatpush.msra.mxu0 %v2971
        %v2973 = vand.u32 %v1708, 4294901760
        %v2974 = vsub.f32 %v1708, %v2973
        %v2975 = vand.u32 %v2974, 4294901760
        %2976 = vmatpush.msra.mxu0 %v2975
        %v2977 = vand.u32 %v1706, 4294901760
        %v2978 = vsub.f32 %v1706, %v2977
        %v2979 = vand.u32 %v2978, 4294901760
        %2980 = vmatpush.msra.mxu0 %v2979
        %v2981 = vand.u32 %v1704, 4294901760
        %v2982 = vsub.f32 %v1704, %v2981
        %v2983 = vand.u32 %v2982, 4294901760
        %2984 = vmatpush.msra.mxu0 %v2983
        %v2985 = vand.u32 %v1702, 4294901760
        %v2986 = vsub.f32 %v1702, %v2985
        %v2987 = vand.u32 %v2986, 4294901760
        %2988 = vmatpush.msra.mxu0 %v2987
        %v2989 = vand.u32 %v1700, 4294901760
        %v2990 = vsub.f32 %v1700, %v2989
        %v2991 = vand.u32 %v2990, 4294901760
        %2992 = vmatpush.msra.mxu0 %v2991
        %v2993 = vand.u32 %v1698, 4294901760
        %v2994 = vsub.f32 %v1698, %v2993
        %v2995 = vand.u32 %v2994, 4294901760
        %2996 = vmatpush.msra.mxu0 %v2995
        %v2997 = vand.u32 %v1696, 4294901760
        %v2998 = vsub.f32 %v1696, %v2997
        %v2999 = vand.u32 %v2998, 4294901760
        %3000 = vmatpush.msra.mxu0 %v2999
        %v3001 = vand.u32 %v1694, 4294901760
        %v3002 = vsub.f32 %v1694, %v3001
        %v3003 = vand.u32 %v3002, 4294901760
        %3004 = vmatpush.msra.mxu0 %v3003
        %v3005 = vand.u32 %v1692, 4294901760
        %v3006 = vsub.f32 %v1692, %v3005
        %v3007 = vand.u32 %v3006, 4294901760
        %3008 = vmatpush.msra.mxu0 %v3007
        %v3009 = vand.u32 %v1690, 4294901760
        %v3010 = vsub.f32 %v1690, %v3009
        %v3011 = vand.u32 %v3010, 4294901760
        %3012 = vmatpush.msra.mxu0 %v3011
        %v3013 = vand.u32 %v1688, 4294901760
        %v3014 = vsub.f32 %v1688, %v3013
        %v3015 = vand.u32 %v3014, 4294901760
        %3016 = vmatpush.msra.mxu0 %v3015
        %v3017 = vand.u32 %v1686, 4294901760
        %v3018 = vsub.f32 %v1686, %v3017
        %v3019 = vand.u32 %v3018, 4294901760
        %3020 = vmatpush.msra.mxu0 %v3019
        %v3021 = vand.u32 %v1684, 4294901760
        %v3022 = vsub.f32 %v1684, %v3021
        %v3023 = vand.u32 %v3022, 4294901760
        %3024 = vmatpush.msra.mxu0 %v3023
        %v3025 = vand.u32 %v1682, 4294901760
        %v3026 = vsub.f32 %v1682, %v3025
        %v3027 = vand.u32 %v3026, 4294901760
        %3028 = vmatpush.msra.mxu0 %v3027
        %v3029 = vand.u32 %v1680, 4294901760
        %v3030 = vsub.f32 %v1680, %v3029
        %v3031 = vand.u32 %v3030, 4294901760
        %3032 = vmatpush.msra.mxu0 %v3031
        %v3033 = vand.u32 %v217, 4294901760
        %3034 = vmatmul.f32.gmra.mxu0 %v3033
        %v3035 = vpop.f32.mrf.mxu0
        %v3036 = vadd.f32 %v2967, %v3035
        %3037 = vdwg.mxu0
        %v3038 = vand.u32 %v1710, 4294901760
        %3039 = vmatpush.msra.mxu0 %v3038
        %v3040 = vand.u32 %v1708, 4294901760
        %3041 = vmatpush.msra.mxu0 %v3040
        %v3042 = vand.u32 %v1706, 4294901760
        %3043 = vmatpush.msra.mxu0 %v3042
        %v3044 = vand.u32 %v1704, 4294901760
        %3045 = vmatpush.msra.mxu0 %v3044
        %v3046 = vand.u32 %v1702, 4294901760
        %3047 = vmatpush.msra.mxu0 %v3046
        %v3048 = vand.u32 %v1700, 4294901760
        %3049 = vmatpush.msra.mxu0 %v3048
        %v3050 = vand.u32 %v1698, 4294901760
        %3051 = vmatpush.msra.mxu0 %v3050
        %v3052 = vand.u32 %v1696, 4294901760
        %3053 = vmatpush.msra.mxu0 %v3052
        %v3054 = vand.u32 %v1694, 4294901760
        %3055 = vmatpush.msra.mxu0 %v3054
        %v3056 = vand.u32 %v1692, 4294901760
        %3057 = vmatpush.msra.mxu0 %v3056
        %v3058 = vand.u32 %v1690, 4294901760
        %3059 = vmatpush.msra.mxu0 %v3058
        %v3060 = vand.u32 %v1688, 4294901760
        %3061 = vmatpush.msra.mxu0 %v3060
        %v3062 = vand.u32 %v1686, 4294901760
        %3063 = vmatpush.msra.mxu0 %v3062
        %v3064 = vand.u32 %v1684, 4294901760
        %3065 = vmatpush.msra.mxu0 %v3064
        %v3066 = vand.u32 %v1682, 4294901760
        %3067 = vmatpush.msra.mxu0 %v3066
        %v3068 = vand.u32 %v1680, 4294901760
        %3069 = vmatpush.msra.mxu0 %v3068
        %v3070 = vand.u32 %v217, 4294901760
        %3071 = vmatmul.f32.gmra.mxu0 %v3070
        %v3072 = vpop.f32.mrf.mxu0
        %v3073 = vadd.f32 %v3036, %v3072
        %3074 = vdwg.mxu0
        %s3075 = scalar_lea.vmem %s1, 1024
        %v3076 = vld [vmem:[%s3075] sm:$0xff]
        %v3077 = vld [vmem:[%s3075 + $0x8] sm:$0xff]
        %v3078 = vld [vmem:[%s3075 + $0x10] sm:$0xff]
        %v3079 = vld [vmem:[%s3075 + $0x18] sm:$0xff]
        %v3080 = vld [vmem:[%s3075 + $0x20] sm:$0xff]
        %v3081 = vld [vmem:[%s3075 + $0x28] sm:$0xff]
        %v3082 = vld [vmem:[%s3075 + $0x30] sm:$0xff]
        %v3083 = vld [vmem:[%s3075 + $0x38] sm:$0xff]
        %v3084 = vld [vmem:[%s3075 + $0x40] sm:$0xff]
        %v3085 = vld [vmem:[%s3075 + $0x48] sm:$0xff]
        %v3086 = vld [vmem:[%s3075 + $0x50] sm:$0xff]
        %v3087 = vld [vmem:[%s3075 + $0x58] sm:$0xff]
        %v3088 = vld [vmem:[%s3075 + $0x60] sm:$0xff]
        %v3089 = vld [vmem:[%s3075 + $0x68] sm:$0xff]
        %v3090 = vld [vmem:[%s3075 + $0x70] sm:$0xff]
        %v3091 = vld [vmem:[%s3075 + $0x78] sm:$0xff]
        %v3092 = vld [vmem:[%s3075 + $0x80] sm:$0xff]
        %v3093 = vld [vmem:[%s3075 + $0x88] sm:$0xff]
        %v3094 = vld [vmem:[%s3075 + $0x90] sm:$0xff]
        %v3095 = vld [vmem:[%s3075 + $0x98] sm:$0xff]
        %v3096 = vld [vmem:[%s3075 + $0xa0] sm:$0xff]
        %v3097 = vld [vmem:[%s3075 + $0xa8] sm:$0xff]
        %v3098 = vld [vmem:[%s3075 + $0xb0] sm:$0xff]
        %v3099 = vld [vmem:[%s3075 + $0xb8] sm:$0xff]
        %v3100 = vld [vmem:[%s3075 + $0xc0] sm:$0xff]
        %v3101 = vld [vmem:[%s3075 + $0xc8] sm:$0xff]
        %v3102 = vld [vmem:[%s3075 + $0xd0] sm:$0xff]
        %v3103 = vld [vmem:[%s3075 + $0xd8] sm:$0xff]
        %v3104 = vld [vmem:[%s3075 + $0xe0] sm:$0xff]
        %v3105 = vld [vmem:[%s3075 + $0xe8] sm:$0xff]
        %v3106 = vld [vmem:[%s3075 + $0xf0] sm:$0xff]
        %v3107 = vld [vmem:[%s3075 + $0xf8] sm:$0xff]
        %v3108 = vld [vmem:[%s3075 + $0x100] sm:$0xff]
        %v3109 = vld [vmem:[%s3075 + $0x108] sm:$0xff]
        %v3110 = vld [vmem:[%s3075 + $0x110] sm:$0xff]
        %v3111 = vld [vmem:[%s3075 + $0x118] sm:$0xff]
        %v3112 = vld [vmem:[%s3075 + $0x120] sm:$0xff]
        %v3113 = vld [vmem:[%s3075 + $0x128] sm:$0xff]
        %v3114 = vld [vmem:[%s3075 + $0x130] sm:$0xff]
        %v3115 = vld [vmem:[%s3075 + $0x138] sm:$0xff]
        %v3116 = vld [vmem:[%s3075 + $0x140] sm:$0xff]
        %v3117 = vld [vmem:[%s3075 + $0x148] sm:$0xff]
        %v3118 = vld [vmem:[%s3075 + $0x150] sm:$0xff]
        %v3119 = vld [vmem:[%s3075 + $0x158] sm:$0xff]
        %v3120 = vld [vmem:[%s3075 + $0x160] sm:$0xff]
        %v3121 = vld [vmem:[%s3075 + $0x168] sm:$0xff]
        %v3122 = vld [vmem:[%s3075 + $0x170] sm:$0xff]
        %v3123 = vld [vmem:[%s3075 + $0x178] sm:$0xff]
        %v3124 = vld [vmem:[%s3075 + $0x180] sm:$0xff]
        %v3125 = vld [vmem:[%s3075 + $0x188] sm:$0xff]
        %v3126 = vld [vmem:[%s3075 + $0x190] sm:$0xff]
        %v3127 = vld [vmem:[%s3075 + $0x198] sm:$0xff]
        %v3128 = vld [vmem:[%s3075 + $0x1a0] sm:$0xff]
        %v3129 = vld [vmem:[%s3075 + $0x1a8] sm:$0xff]
        %v3130 = vld [vmem:[%s3075 + $0x1b0] sm:$0xff]
        %v3131 = vld [vmem:[%s3075 + $0x1b8] sm:$0xff]
        %v3132 = vld [vmem:[%s3075 + $0x1c0] sm:$0xff]
        %v3133 = vld [vmem:[%s3075 + $0x1c8] sm:$0xff]
        %v3134 = vld [vmem:[%s3075 + $0x1d0] sm:$0xff]
        %v3135 = vld [vmem:[%s3075 + $0x1d8] sm:$0xff]
        %v3136 = vld [vmem:[%s3075 + $0x1e0] sm:$0xff]
        %v3137 = vld [vmem:[%s3075 + $0x1e8] sm:$0xff]
        %v3138 = vld [vmem:[%s3075 + $0x1f0] sm:$0xff]
        %v3139 = vld [vmem:[%s3075 + $0x1f8] sm:$0xff]
        %v3140 = vand.u32 %v3106, 4294901760
        %3141 = vmatpush.msra.mxu0 %v3140
        %v3142 = vand.u32 %v3104, 4294901760
        %3143 = vmatpush.msra.mxu0 %v3142
        %v3144 = vand.u32 %v3102, 4294901760
        %3145 = vmatpush.msra.mxu0 %v3144
        %v3146 = vand.u32 %v3100, 4294901760
        %3147 = vmatpush.msra.mxu0 %v3146
        %v3148 = vand.u32 %v3098, 4294901760
        %3149 = vmatpush.msra.mxu0 %v3148
        %v3150 = vand.u32 %v3096, 4294901760
        %3151 = vmatpush.msra.mxu0 %v3150
        %v3152 = vand.u32 %v3094, 4294901760
        %3153 = vmatpush.msra.mxu0 %v3152
        %v3154 = vand.u32 %v3092, 4294901760
        %3155 = vmatpush.msra.mxu0 %v3154
        %v3156 = vand.u32 %v3090, 4294901760
        %3157 = vmatpush.msra.mxu0 %v3156
        %v3158 = vand.u32 %v3088, 4294901760
        %3159 = vmatpush.msra.mxu0 %v3158
        %v3160 = vand.u32 %v3086, 4294901760
        %3161 = vmatpush.msra.mxu0 %v3160
        %v3162 = vand.u32 %v3084, 4294901760
        %3163 = vmatpush.msra.mxu0 %v3162
        %v3164 = vand.u32 %v3082, 4294901760
        %3165 = vmatpush.msra.mxu0 %v3164
        %v3166 = vand.u32 %v3080, 4294901760
        %3167 = vmatpush.msra.mxu0 %v3166
        %v3168 = vand.u32 %v3078, 4294901760
        %3169 = vmatpush.msra.mxu0 %v3168
        %v3170 = vand.u32 %v3076, 4294901760
        %3171 = vmatpush.msra.mxu0 %v3170
        %v3172 = vand.u32 %v216, 4294901760
        %v3173 = vsub.f32 %v216, %v3172
        %v3174 = vand.u32 %v3173, 4294901760
        %v3175 = vsub.f32 %v3173, %v3174
        %v3176 = vand.u32 %v3175, 4294901760
        %3177 = vmatmul.f32.gmra.mxu0 %v3176
        %v3178 = vpop.f32.mrf.mxu0
        %v3179 = vadd.f32 0.0, %v3178
        %3180 = vdwg.mxu0
        %v3181 = vand.u32 %v3106, 4294901760
        %v3182 = vsub.f32 %v3106, %v3181
        %v3183 = vand.u32 %v3182, 4294901760
        %v3184 = vsub.f32 %v3182, %v3183
        %v3185 = vand.u32 %v3184, 4294901760
        %3186 = vmatpush.msra.mxu0 %v3185
        %v3187 = vand.u32 %v3104, 4294901760
        %v3188 = vsub.f32 %v3104, %v3187
        %v3189 = vand.u32 %v3188, 4294901760
        %v3190 = vsub.f32 %v3188, %v3189
        %v3191 = vand.u32 %v3190, 4294901760
        %3192 = vmatpush.msra.mxu0 %v3191
        %v3193 = vand.u32 %v3102, 4294901760
        %v3194 = vsub.f32 %v3102, %v3193
        %v3195 = vand.u32 %v3194, 4294901760
        %v3196 = vsub.f32 %v3194, %v3195
        %v3197 = vand.u32 %v3196, 4294901760
        %3198 = vmatpush.msra.mxu0 %v3197
        %v3199 = vand.u32 %v3100, 4294901760
        %v3200 = vsub.f32 %v3100, %v3199
        %v3201 = vand.u32 %v3200, 4294901760
        %v3202 = vsub.f32 %v3200, %v3201
        %v3203 = vand.u32 %v3202, 4294901760
        %3204 = vmatpush.msra.mxu0 %v3203
        %v3205 = vand.u32 %v3098, 4294901760
        %v3206 = vsub.f32 %v3098, %v3205
        %v3207 = vand.u32 %v3206, 4294901760
        %v3208 = vsub.f32 %v3206, %v3207
        %v3209 = vand.u32 %v3208, 4294901760
        %3210 = vmatpush.msra.mxu0 %v3209
        %v3211 = vand.u32 %v3096, 4294901760
        %v3212 = vsub.f32 %v3096, %v3211
        %v3213 = vand.u32 %v3212, 4294901760
        %v3214 = vsub.f32 %v3212, %v3213
        %v3215 = vand.u32 %v3214, 4294901760
        %3216 = vmatpush.msra.mxu0 %v3215
        %v3217 = vand.u32 %v3094, 4294901760
        %v3218 = vsub.f32 %v3094, %v3217
        %v3219 = vand.u32 %v3218, 4294901760
        %v3220 = vsub.f32 %v3218, %v3219
        %v3221 = vand.u32 %v3220, 4294901760
        %3222 = vmatpush.msra.mxu0 %v3221
        %v3223 = vand.u32 %v3092, 4294901760
        %v3224 = vsub.f32 %v3092, %v3223
        %v3225 = vand.u32 %v3224, 4294901760
        %v3226 = vsub.f32 %v3224, %v3225
        %v3227 = vand.u32 %v3226, 4294901760
        %3228 = vmatpush.msra.mxu0 %v3227
        %v3229 = vand.u32 %v3090, 4294901760
        %v3230 = vsub.f32 %v3090, %v3229
        %v3231 = vand.u32 %v3230, 4294901760
        %v3232 = vsub.f32 %v3230, %v3231
        %v3233 = vand.u32 %v3232, 4294901760
        %3234 = vmatpush.msra.mxu0 %v3233
        %v3235 = vand.u32 %v3088, 4294901760
        %v3236 = vsub.f32 %v3088, %v3235
        %v3237 = vand.u32 %v3236, 4294901760
        %v3238 = vsub.f32 %v3236, %v3237
        %v3239 = vand.u32 %v3238, 4294901760
        %3240 = vmatpush.msra.mxu0 %v3239
        %v3241 = vand.u32 %v3086, 4294901760
        %v3242 = vsub.f32 %v3086, %v3241
        %v3243 = vand.u32 %v3242, 4294901760
        %v3244 = vsub.f32 %v3242, %v3243
        %v3245 = vand.u32 %v3244, 4294901760
        %3246 = vmatpush.msra.mxu0 %v3245
        %v3247 = vand.u32 %v3084, 4294901760
        %v3248 = vsub.f32 %v3084, %v3247
        %v3249 = vand.u32 %v3248, 4294901760
        %v3250 = vsub.f32 %v3248, %v3249
        %v3251 = vand.u32 %v3250, 4294901760
        %3252 = vmatpush.msra.mxu0 %v3251
        %v3253 = vand.u32 %v3082, 4294901760
        %v3254 = vsub.f32 %v3082, %v3253
        %v3255 = vand.u32 %v3254, 4294901760
        %v3256 = vsub.f32 %v3254, %v3255
        %v3257 = vand.u32 %v3256, 4294901760
        %3258 = vmatpush.msra.mxu0 %v3257
        %v3259 = vand.u32 %v3080, 4294901760
        %v3260 = vsub.f32 %v3080, %v3259
        %v3261 = vand.u32 %v3260, 4294901760
        %v3262 = vsub.f32 %v3260, %v3261
        %v3263 = vand.u32 %v3262, 4294901760
        %3264 = vmatpush.msra.mxu0 %v3263
        %v3265 = vand.u32 %v3078, 4294901760
        %v3266 = vsub.f32 %v3078, %v3265
        %v3267 = vand.u32 %v3266, 4294901760
        %v3268 = vsub.f32 %v3266, %v3267
        %v3269 = vand.u32 %v3268, 4294901760
        %3270 = vmatpush.msra.mxu0 %v3269
        %v3271 = vand.u32 %v3076, 4294901760
        %v3272 = vsub.f32 %v3076, %v3271
        %v3273 = vand.u32 %v3272, 4294901760
        %v3274 = vsub.f32 %v3272, %v3273
        %v3275 = vand.u32 %v3274, 4294901760
        %3276 = vmatpush.msra.mxu0 %v3275
        %v3277 = vand.u32 %v216, 4294901760
        %3278 = vmatmul.f32.gmra.mxu0 %v3277
        %v3279 = vpop.f32.mrf.mxu0
        %v3280 = vadd.f32 %v3179, %v3279
        %3281 = vdwg.mxu0
        %v3282 = vand.u32 %v3106, 4294901760
        %v3283 = vsub.f32 %v3106, %v3282
        %3284 = vmatpush.msra.mxu0 %v3283
        %v3285 = vand.u32 %v3104, 4294901760
        %v3286 = vsub.f32 %v3104, %v3285
        %3287 = vmatpush.msra.mxu0 %v3286
        %v3288 = vand.u32 %v3102, 4294901760
        %v3289 = vsub.f32 %v3102, %v3288
        %3290 = vmatpush.msra.mxu0 %v3289
        %v3291 = vand.u32 %v3100, 4294901760
        %v3292 = vsub.f32 %v3100, %v3291
        %3293 = vmatpush.msra.mxu0 %v3292
        %v3294 = vand.u32 %v3098, 4294901760
        %v3295 = vsub.f32 %v3098, %v3294
        %3296 = vmatpush.msra.mxu0 %v3295
        %v3297 = vand.u32 %v3096, 4294901760
        %v3298 = vsub.f32 %v3096, %v3297
        %3299 = vmatpush.msra.mxu0 %v3298
        %v3300 = vand.u32 %v3094, 4294901760
        %v3301 = vsub.f32 %v3094, %v3300
        %3302 = vmatpush.msra.mxu0 %v3301
        %v3303 = vand.u32 %v3092, 4294901760
        %v3304 = vsub.f32 %v3092, %v3303
        %3305 = vmatpush.msra.mxu0 %v3304
        %v3306 = vand.u32 %v3090, 4294901760
        %v3307 = vsub.f32 %v3090, %v3306
        %3308 = vmatpush.msra.mxu0 %v3307
        %v3309 = vand.u32 %v3088, 4294901760
        %v3310 = vsub.f32 %v3088, %v3309
        %3311 = vmatpush.msra.mxu0 %v3310
        %v3312 = vand.u32 %v3086, 4294901760
        %v3313 = vsub.f32 %v3086, %v3312
        %3314 = vmatpush.msra.mxu0 %v3313
        %v3315 = vand.u32 %v3084, 4294901760
        %v3316 = vsub.f32 %v3084, %v3315
        %3317 = vmatpush.msra.mxu0 %v3316
        %v3318 = vand.u32 %v3082, 4294901760
        %v3319 = vsub.f32 %v3082, %v3318
        %3320 = vmatpush.msra.mxu0 %v3319
        %v3321 = vand.u32 %v3080, 4294901760
        %v3322 = vsub.f32 %v3080, %v3321
        %3323 = vmatpush.msra.mxu0 %v3322
        %v3324 = vand.u32 %v3078, 4294901760
        %v3325 = vsub.f32 %v3078, %v3324
        %3326 = vmatpush.msra.mxu0 %v3325
        %v3327 = vand.u32 %v3076, 4294901760
        %v3328 = vsub.f32 %v3076, %v3327
        %3329 = vmatpush.msra.mxu0 %v3328
        %v3330 = vand.u32 %v216, 4294901760
        %v3331 = vsub.f32 %v216, %v3330
        %3332 = vmatmul.f32.gmra.mxu0 %v3331
        %v3333 = vpop.f32.mrf.mxu0
        %v3334 = vadd.f32 %v3280, %v3333
        %3335 = vdwg.mxu0
        %v3336 = vand.u32 %v3106, 4294901760
        %3337 = vmatpush.msra.mxu0 %v3336
        %v3338 = vand.u32 %v3104, 4294901760
        %3339 = vmatpush.msra.mxu0 %v3338
        %v3340 = vand.u32 %v3102, 4294901760
        %3341 = vmatpush.msra.mxu0 %v3340
        %v3342 = vand.u32 %v3100, 4294901760
        %3343 = vmatpush.msra.mxu0 %v3342
        %v3344 = vand.u32 %v3098, 4294901760
        %3345 = vmatpush.msra.mxu0 %v3344
        %v3346 = vand.u32 %v3096, 4294901760
        %3347 = vmatpush.msra.mxu0 %v3346
        %v3348 = vand.u32 %v3094, 4294901760
        %3349 = vmatpush.msra.mxu0 %v3348
        %v3350 = vand.u32 %v3092, 4294901760
        %3351 = vmatpush.msra.mxu0 %v3350
        %v3352 = vand.u32 %v3090, 4294901760
        %3353 = vmatpush.msra.mxu0 %v3352
        %v3354 = vand.u32 %v3088, 4294901760
        %3355 = vmatpush.msra.mxu0 %v3354
        %v3356 = vand.u32 %v3086, 4294901760
        %3357 = vmatpush.msra.mxu0 %v3356
        %v3358 = vand.u32 %v3084, 4294901760
        %3359 = vmatpush.msra.mxu0 %v3358
        %v3360 = vand.u32 %v3082, 4294901760
        %3361 = vmatpush.msra.mxu0 %v3360
        %v3362 = vand.u32 %v3080, 4294901760
        %3363 = vmatpush.msra.mxu0 %v3362
        %v3364 = vand.u32 %v3078, 4294901760
        %3365 = vmatpush.msra.mxu0 %v3364
        %v3366 = vand.u32 %v3076, 4294901760
        %3367 = vmatpush.msra.mxu0 %v3366
        %v3368 = vand.u32 %v216, 4294901760
        %v3369 = vsub.f32 %v216, %v3368
        %v3370 = vand.u32 %v3369, 4294901760
        %3371 = vmatmul.f32.gmra.mxu0 %v3370
        %v3372 = vpop.f32.mrf.mxu0
        %v3373 = vadd.f32 %v3334, %v3372
        %3374 = vdwg.mxu0
        %v3375 = vand.u32 %v3106, 4294901760
        %v3376 = vsub.f32 %v3106, %v3375
        %v3377 = vand.u32 %v3376, 4294901760
        %3378 = vmatpush.msra.mxu0 %v3377
        %v3379 = vand.u32 %v3104, 4294901760
        %v3380 = vsub.f32 %v3104, %v3379
        %v3381 = vand.u32 %v3380, 4294901760
        %3382 = vmatpush.msra.mxu0 %v3381
        %v3383 = vand.u32 %v3102, 4294901760
        %v3384 = vsub.f32 %v3102, %v3383
        %v3385 = vand.u32 %v3384, 4294901760
        %3386 = vmatpush.msra.mxu0 %v3385
        %v3387 = vand.u32 %v3100, 4294901760
        %v3388 = vsub.f32 %v3100, %v3387
        %v3389 = vand.u32 %v3388, 4294901760
        %3390 = vmatpush.msra.mxu0 %v3389
        %v3391 = vand.u32 %v3098, 4294901760
        %v3392 = vsub.f32 %v3098, %v3391
        %v3393 = vand.u32 %v3392, 4294901760
        %3394 = vmatpush.msra.mxu0 %v3393
        %v3395 = vand.u32 %v3096, 4294901760
        %v3396 = vsub.f32 %v3096, %v3395
        %v3397 = vand.u32 %v3396, 4294901760
        %3398 = vmatpush.msra.mxu0 %v3397
        %v3399 = vand.u32 %v3094, 4294901760
        %v3400 = vsub.f32 %v3094, %v3399
        %v3401 = vand.u32 %v3400, 4294901760
        %3402 = vmatpush.msra.mxu0 %v3401
        %v3403 = vand.u32 %v3092, 4294901760
        %v3404 = vsub.f32 %v3092, %v3403
        %v3405 = vand.u32 %v3404, 4294901760
        %3406 = vmatpush.msra.mxu0 %v3405
        %v3407 = vand.u32 %v3090, 4294901760
        %v3408 = vsub.f32 %v3090, %v3407
        %v3409 = vand.u32 %v3408, 4294901760
        %3410 = vmatpush.msra.mxu0 %v3409
        %v3411 = vand.u32 %v3088, 4294901760
        %v3412 = vsub.f32 %v3088, %v3411
        %v3413 = vand.u32 %v3412, 4294901760
        %3414 = vmatpush.msra.mxu0 %v3413
        %v3415 = vand.u32 %v3086, 4294901760
        %v3416 = vsub.f32 %v3086, %v3415
        %v3417 = vand.u32 %v3416, 4294901760
        %3418 = vmatpush.msra.mxu0 %v3417
        %v3419 = vand.u32 %v3084, 4294901760
        %v3420 = vsub.f32 %v3084, %v3419
        %v3421 = vand.u32 %v3420, 4294901760
        %3422 = vmatpush.msra.mxu0 %v3421
        %v3423 = vand.u32 %v3082, 4294901760
        %v3424 = vsub.f32 %v3082, %v3423
        %v3425 = vand.u32 %v3424, 4294901760
        %3426 = vmatpush.msra.mxu0 %v3425
        %v3427 = vand.u32 %v3080, 4294901760
        %v3428 = vsub.f32 %v3080, %v3427
        %v3429 = vand.u32 %v3428, 4294901760
        %3430 = vmatpush.msra.mxu0 %v3429
        %v3431 = vand.u32 %v3078, 4294901760
        %v3432 = vsub.f32 %v3078, %v3431
        %v3433 = vand.u32 %v3432, 4294901760
        %3434 = vmatpush.msra.mxu0 %v3433
        %v3435 = vand.u32 %v3076, 4294901760
        %v3436 = vsub.f32 %v3076, %v3435
        %v3437 = vand.u32 %v3436, 4294901760
        %3438 = vmatpush.msra.mxu0 %v3437
        %v3439 = vand.u32 %v216, 4294901760
        %3440 = vmatmul.f32.gmra.mxu0 %v3439
        %v3441 = vpop.f32.mrf.mxu0
        %v3442 = vadd.f32 %v3373, %v3441
        %3443 = vdwg.mxu0
        %v3444 = vand.u32 %v3106, 4294901760
        %3445 = vmatpush.msra.mxu0 %v3444
        %v3446 = vand.u32 %v3104, 4294901760
        %3447 = vmatpush.msra.mxu0 %v3446
        %v3448 = vand.u32 %v3102, 4294901760
        %3449 = vmatpush.msra.mxu0 %v3448
        %v3450 = vand.u32 %v3100, 4294901760
        %3451 = vmatpush.msra.mxu0 %v3450
        %v3452 = vand.u32 %v3098, 4294901760
        %3453 = vmatpush.msra.mxu0 %v3452
        %v3454 = vand.u32 %v3096, 4294901760
        %3455 = vmatpush.msra.mxu0 %v3454
        %v3456 = vand.u32 %v3094, 4294901760
        %3457 = vmatpush.msra.mxu0 %v3456
        %v3458 = vand.u32 %v3092, 4294901760
        %3459 = vmatpush.msra.mxu0 %v3458
        %v3460 = vand.u32 %v3090, 4294901760
        %3461 = vmatpush.msra.mxu0 %v3460
        %v3462 = vand.u32 %v3088, 4294901760
        %3463 = vmatpush.msra.mxu0 %v3462
        %v3464 = vand.u32 %v3086, 4294901760
        %3465 = vmatpush.msra.mxu0 %v3464
        %v3466 = vand.u32 %v3084, 4294901760
        %3467 = vmatpush.msra.mxu0 %v3466
        %v3468 = vand.u32 %v3082, 4294901760
        %3469 = vmatpush.msra.mxu0 %v3468
        %v3470 = vand.u32 %v3080, 4294901760
        %3471 = vmatpush.msra.mxu0 %v3470
        %v3472 = vand.u32 %v3078, 4294901760
        %3473 = vmatpush.msra.mxu0 %v3472
        %v3474 = vand.u32 %v3076, 4294901760
        %3475 = vmatpush.msra.mxu0 %v3474
        %v3476 = vand.u32 %v216, 4294901760
        %3477 = vmatmul.f32.gmra.mxu0 %v3476
        %v3478 = vpop.f32.mrf.mxu0
        %v3479 = vadd.f32 %v3442, %v3478
        %3480 = vdwg.mxu0
        %v3481 = vand.u32 %v3138, 4294901760
        %3482 = vmatpush.msra.mxu0 %v3481
        %v3483 = vand.u32 %v3136, 4294901760
        %3484 = vmatpush.msra.mxu0 %v3483
        %v3485 = vand.u32 %v3134, 4294901760
        %3486 = vmatpush.msra.mxu0 %v3485
        %v3487 = vand.u32 %v3132, 4294901760
        %3488 = vmatpush.msra.mxu0 %v3487
        %v3489 = vand.u32 %v3130, 4294901760
        %3490 = vmatpush.msra.mxu0 %v3489
        %v3491 = vand.u32 %v3128, 4294901760
        %3492 = vmatpush.msra.mxu0 %v3491
        %v3493 = vand.u32 %v3126, 4294901760
        %3494 = vmatpush.msra.mxu0 %v3493
        %v3495 = vand.u32 %v3124, 4294901760
        %3496 = vmatpush.msra.mxu0 %v3495
        %v3497 = vand.u32 %v3122, 4294901760
        %3498 = vmatpush.msra.mxu0 %v3497
        %v3499 = vand.u32 %v3120, 4294901760
        %3500 = vmatpush.msra.mxu0 %v3499
        %v3501 = vand.u32 %v3118, 4294901760
        %3502 = vmatpush.msra.mxu0 %v3501
        %v3503 = vand.u32 %v3116, 4294901760
        %3504 = vmatpush.msra.mxu0 %v3503
        %v3505 = vand.u32 %v3114, 4294901760
        %3506 = vmatpush.msra.mxu0 %v3505
        %v3507 = vand.u32 %v3112, 4294901760
        %3508 = vmatpush.msra.mxu0 %v3507
        %v3509 = vand.u32 %v3110, 4294901760
        %3510 = vmatpush.msra.mxu0 %v3509
        %v3511 = vand.u32 %v3108, 4294901760
        %3512 = vmatpush.msra.mxu0 %v3511
        %v3513 = vand.u32 %v217, 4294901760
        %v3514 = vsub.f32 %v217, %v3513
        %v3515 = vand.u32 %v3514, 4294901760
        %v3516 = vsub.f32 %v3514, %v3515
        %v3517 = vand.u32 %v3516, 4294901760
        %3518 = vmatmul.f32.gmra.mxu0 %v3517
        %v3519 = vpop.f32.mrf.mxu0
        %v3520 = vadd.f32 %v3479, %v3519
        %3521 = vdwg.mxu0
        %v3522 = vand.u32 %v3138, 4294901760
        %v3523 = vsub.f32 %v3138, %v3522
        %v3524 = vand.u32 %v3523, 4294901760
        %v3525 = vsub.f32 %v3523, %v3524
        %v3526 = vand.u32 %v3525, 4294901760
        %3527 = vmatpush.msra.mxu0 %v3526
        %v3528 = vand.u32 %v3136, 4294901760
        %v3529 = vsub.f32 %v3136, %v3528
        %v3530 = vand.u32 %v3529, 4294901760
        %v3531 = vsub.f32 %v3529, %v3530
        %v3532 = vand.u32 %v3531, 4294901760
        %3533 = vmatpush.msra.mxu0 %v3532
        %v3534 = vand.u32 %v3134, 4294901760
        %v3535 = vsub.f32 %v3134, %v3534
        %v3536 = vand.u32 %v3535, 4294901760
        %v3537 = vsub.f32 %v3535, %v3536
        %v3538 = vand.u32 %v3537, 4294901760
        %3539 = vmatpush.msra.mxu0 %v3538
        %v3540 = vand.u32 %v3132, 4294901760
        %v3541 = vsub.f32 %v3132, %v3540
        %v3542 = vand.u32 %v3541, 4294901760
        %v3543 = vsub.f32 %v3541, %v3542
        %v3544 = vand.u32 %v3543, 4294901760
        %3545 = vmatpush.msra.mxu0 %v3544
        %v3546 = vand.u32 %v3130, 4294901760
        %v3547 = vsub.f32 %v3130, %v3546
        %v3548 = vand.u32 %v3547, 4294901760
        %v3549 = vsub.f32 %v3547, %v3548
        %v3550 = vand.u32 %v3549, 4294901760
        %3551 = vmatpush.msra.mxu0 %v3550
        %v3552 = vand.u32 %v3128, 4294901760
        %v3553 = vsub.f32 %v3128, %v3552
        %v3554 = vand.u32 %v3553, 4294901760
        %v3555 = vsub.f32 %v3553, %v3554
        %v3556 = vand.u32 %v3555, 4294901760
        %3557 = vmatpush.msra.mxu0 %v3556
        %v3558 = vand.u32 %v3126, 4294901760
        %v3559 = vsub.f32 %v3126, %v3558
        %v3560 = vand.u32 %v3559, 4294901760
        %v3561 = vsub.f32 %v3559, %v3560
        %v3562 = vand.u32 %v3561, 4294901760
        %3563 = vmatpush.msra.mxu0 %v3562
        %v3564 = vand.u32 %v3124, 4294901760
        %v3565 = vsub.f32 %v3124, %v3564
        %v3566 = vand.u32 %v3565, 4294901760
        %v3567 = vsub.f32 %v3565, %v3566
        %v3568 = vand.u32 %v3567, 4294901760
        %3569 = vmatpush.msra.mxu0 %v3568
        %v3570 = vand.u32 %v3122, 4294901760
        %v3571 = vsub.f32 %v3122, %v3570
        %v3572 = vand.u32 %v3571, 4294901760
        %v3573 = vsub.f32 %v3571, %v3572
        %v3574 = vand.u32 %v3573, 4294901760
        %3575 = vmatpush.msra.mxu0 %v3574
        %v3576 = vand.u32 %v3120, 4294901760
        %v3577 = vsub.f32 %v3120, %v3576
        %v3578 = vand.u32 %v3577, 4294901760
        %v3579 = vsub.f32 %v3577, %v3578
        %v3580 = vand.u32 %v3579, 4294901760
        %3581 = vmatpush.msra.mxu0 %v3580
        %v3582 = vand.u32 %v3118, 4294901760
        %v3583 = vsub.f32 %v3118, %v3582
        %v3584 = vand.u32 %v3583, 4294901760
        %v3585 = vsub.f32 %v3583, %v3584
        %v3586 = vand.u32 %v3585, 4294901760
        %3587 = vmatpush.msra.mxu0 %v3586
        %v3588 = vand.u32 %v3116, 4294901760
        %v3589 = vsub.f32 %v3116, %v3588
        %v3590 = vand.u32 %v3589, 4294901760
        %v3591 = vsub.f32 %v3589, %v3590
        %v3592 = vand.u32 %v3591, 4294901760
        %3593 = vmatpush.msra.mxu0 %v3592
        %v3594 = vand.u32 %v3114, 4294901760
        %v3595 = vsub.f32 %v3114, %v3594
        %v3596 = vand.u32 %v3595, 4294901760
        %v3597 = vsub.f32 %v3595, %v3596
        %v3598 = vand.u32 %v3597, 4294901760
        %3599 = vmatpush.msra.mxu0 %v3598
        %v3600 = vand.u32 %v3112, 4294901760
        %v3601 = vsub.f32 %v3112, %v3600
        %v3602 = vand.u32 %v3601, 4294901760
        %v3603 = vsub.f32 %v3601, %v3602
        %v3604 = vand.u32 %v3603, 4294901760
        %3605 = vmatpush.msra.mxu0 %v3604
        %v3606 = vand.u32 %v3110, 4294901760
        %v3607 = vsub.f32 %v3110, %v3606
        %v3608 = vand.u32 %v3607, 4294901760
        %v3609 = vsub.f32 %v3607, %v3608
        %v3610 = vand.u32 %v3609, 4294901760
        %3611 = vmatpush.msra.mxu0 %v3610
        %v3612 = vand.u32 %v3108, 4294901760
        %v3613 = vsub.f32 %v3108, %v3612
        %v3614 = vand.u32 %v3613, 4294901760
        %v3615 = vsub.f32 %v3613, %v3614
        %v3616 = vand.u32 %v3615, 4294901760
        %3617 = vmatpush.msra.mxu0 %v3616
        %v3618 = vand.u32 %v217, 4294901760
        %3619 = vmatmul.f32.gmra.mxu0 %v3618
        %v3620 = vpop.f32.mrf.mxu0
        %v3621 = vadd.f32 %v3520, %v3620
        %3622 = vdwg.mxu0
        %v3623 = vand.u32 %v3138, 4294901760
        %v3624 = vsub.f32 %v3138, %v3623
        %3625 = vmatpush.msra.mxu0 %v3624
        %v3626 = vand.u32 %v3136, 4294901760
        %v3627 = vsub.f32 %v3136, %v3626
        %3628 = vmatpush.msra.mxu0 %v3627
        %v3629 = vand.u32 %v3134, 4294901760
        %v3630 = vsub.f32 %v3134, %v3629
        %3631 = vmatpush.msra.mxu0 %v3630
        %v3632 = vand.u32 %v3132, 4294901760
        %v3633 = vsub.f32 %v3132, %v3632
        %3634 = vmatpush.msra.mxu0 %v3633
        %v3635 = vand.u32 %v3130, 4294901760
        %v3636 = vsub.f32 %v3130, %v3635
        %3637 = vmatpush.msra.mxu0 %v3636
        %v3638 = vand.u32 %v3128, 4294901760
        %v3639 = vsub.f32 %v3128, %v3638
        %3640 = vmatpush.msra.mxu0 %v3639
        %v3641 = vand.u32 %v3126, 4294901760
        %v3642 = vsub.f32 %v3126, %v3641
        %3643 = vmatpush.msra.mxu0 %v3642
        %v3644 = vand.u32 %v3124, 4294901760
        %v3645 = vsub.f32 %v3124, %v3644
        %3646 = vmatpush.msra.mxu0 %v3645
        %v3647 = vand.u32 %v3122, 4294901760
        %v3648 = vsub.f32 %v3122, %v3647
        %3649 = vmatpush.msra.mxu0 %v3648
        %v3650 = vand.u32 %v3120, 4294901760
        %v3651 = vsub.f32 %v3120, %v3650
        %3652 = vmatpush.msra.mxu0 %v3651
        %v3653 = vand.u32 %v3118, 4294901760
        %v3654 = vsub.f32 %v3118, %v3653
        %3655 = vmatpush.msra.mxu0 %v3654
        %v3656 = vand.u32 %v3116, 4294901760
        %v3657 = vsub.f32 %v3116, %v3656
        %3658 = vmatpush.msra.mxu0 %v3657
        %v3659 = vand.u32 %v3114, 4294901760
        %v3660 = vsub.f32 %v3114, %v3659
        %3661 = vmatpush.msra.mxu0 %v3660
        %v3662 = vand.u32 %v3112, 4294901760
        %v3663 = vsub.f32 %v3112, %v3662
        %3664 = vmatpush.msra.mxu0 %v3663
        %v3665 = vand.u32 %v3110, 4294901760
        %v3666 = vsub.f32 %v3110, %v3665
        %3667 = vmatpush.msra.mxu0 %v3666
        %v3668 = vand.u32 %v3108, 4294901760
        %v3669 = vsub.f32 %v3108, %v3668
        %3670 = vmatpush.msra.mxu0 %v3669
        %v3671 = vand.u32 %v217, 4294901760
        %v3672 = vsub.f32 %v217, %v3671
        %3673 = vmatmul.f32.gmra.mxu0 %v3672
        %v3674 = vpop.f32.mrf.mxu0
        %v3675 = vadd.f32 %v3621, %v3674
        %3676 = vdwg.mxu0
        %v3677 = vand.u32 %v3138, 4294901760
        %3678 = vmatpush.msra.mxu0 %v3677
        %v3679 = vand.u32 %v3136, 4294901760
        %3680 = vmatpush.msra.mxu0 %v3679
        %v3681 = vand.u32 %v3134, 4294901760
        %3682 = vmatpush.msra.mxu0 %v3681
        %v3683 = vand.u32 %v3132, 4294901760
        %3684 = vmatpush.msra.mxu0 %v3683
        %v3685 = vand.u32 %v3130, 4294901760
        %3686 = vmatpush.msra.mxu0 %v3685
        %v3687 = vand.u32 %v3128, 4294901760
        %3688 = vmatpush.msra.mxu0 %v3687
        %v3689 = vand.u32 %v3126, 4294901760
        %3690 = vmatpush.msra.mxu0 %v3689
        %v3691 = vand.u32 %v3124, 4294901760
        %3692 = vmatpush.msra.mxu0 %v3691
        %v3693 = vand.u32 %v3122, 4294901760
        %3694 = vmatpush.msra.mxu0 %v3693
        %v3695 = vand.u32 %v3120, 4294901760
        %3696 = vmatpush.msra.mxu0 %v3695
        %v3697 = vand.u32 %v3118, 4294901760
        %3698 = vmatpush.msra.mxu0 %v3697
        %v3699 = vand.u32 %v3116, 4294901760
        %3700 = vmatpush.msra.mxu0 %v3699
        %v3701 = vand.u32 %v3114, 4294901760
        %3702 = vmatpush.msra.mxu0 %v3701
        %v3703 = vand.u32 %v3112, 4294901760
        %3704 = vmatpush.msra.mxu0 %v3703
        %v3705 = vand.u32 %v3110, 4294901760
        %3706 = vmatpush.msra.mxu0 %v3705
        %v3707 = vand.u32 %v3108, 4294901760
        %3708 = vmatpush.msra.mxu0 %v3707
        %v3709 = vand.u32 %v217, 4294901760
        %v3710 = vsub.f32 %v217, %v3709
        %v3711 = vand.u32 %v3710, 4294901760
        %3712 = vmatmul.f32.gmra.mxu0 %v3711
        %v3713 = vpop.f32.mrf.mxu0
        %v3714 = vadd.f32 %v3675, %v3713
        %3715 = vdwg.mxu0
        %v3716 = vand.u32 %v3138, 4294901760
        %v3717 = vsub.f32 %v3138, %v3716
        %v3718 = vand.u32 %v3717, 4294901760
        %3719 = vmatpush.msra.mxu0 %v3718
        %v3720 = vand.u32 %v3136, 4294901760
        %v3721 = vsub.f32 %v3136, %v3720
        %v3722 = vand.u32 %v3721, 4294901760
        %3723 = vmatpush.msra.mxu0 %v3722
        %v3724 = vand.u32 %v3134, 4294901760
        %v3725 = vsub.f32 %v3134, %v3724
        %v3726 = vand.u32 %v3725, 4294901760
        %3727 = vmatpush.msra.mxu0 %v3726
        %v3728 = vand.u32 %v3132, 4294901760
        %v3729 = vsub.f32 %v3132, %v3728
        %v3730 = vand.u32 %v3729, 4294901760
        %3731 = vmatpush.msra.mxu0 %v3730
        %v3732 = vand.u32 %v3130, 4294901760
        %v3733 = vsub.f32 %v3130, %v3732
        %v3734 = vand.u32 %v3733, 4294901760
        %3735 = vmatpush.msra.mxu0 %v3734
        %v3736 = vand.u32 %v3128, 4294901760
        %v3737 = vsub.f32 %v3128, %v3736
        %v3738 = vand.u32 %v3737, 4294901760
        %3739 = vmatpush.msra.mxu0 %v3738
        %v3740 = vand.u32 %v3126, 4294901760
        %v3741 = vsub.f32 %v3126, %v3740
        %v3742 = vand.u32 %v3741, 4294901760
        %3743 = vmatpush.msra.mxu0 %v3742
        %v3744 = vand.u32 %v3124, 4294901760
        %v3745 = vsub.f32 %v3124, %v3744
        %v3746 = vand.u32 %v3745, 4294901760
        %3747 = vmatpush.msra.mxu0 %v3746
        %v3748 = vand.u32 %v3122, 4294901760
        %v3749 = vsub.f32 %v3122, %v3748
        %v3750 = vand.u32 %v3749, 4294901760
        %3751 = vmatpush.msra.mxu0 %v3750
        %v3752 = vand.u32 %v3120, 4294901760
        %v3753 = vsub.f32 %v3120, %v3752
        %v3754 = vand.u32 %v3753, 4294901760
        %3755 = vmatpush.msra.mxu0 %v3754
        %v3756 = vand.u32 %v3118, 4294901760
        %v3757 = vsub.f32 %v3118, %v3756
        %v3758 = vand.u32 %v3757, 4294901760
        %3759 = vmatpush.msra.mxu0 %v3758
        %v3760 = vand.u32 %v3116, 4294901760
        %v3761 = vsub.f32 %v3116, %v3760
        %v3762 = vand.u32 %v3761, 4294901760
        %3763 = vmatpush.msra.mxu0 %v3762
        %v3764 = vand.u32 %v3114, 4294901760
        %v3765 = vsub.f32 %v3114, %v3764
        %v3766 = vand.u32 %v3765, 4294901760
        %3767 = vmatpush.msra.mxu0 %v3766
        %v3768 = vand.u32 %v3112, 4294901760
        %v3769 = vsub.f32 %v3112, %v3768
        %v3770 = vand.u32 %v3769, 4294901760
        %3771 = vmatpush.msra.mxu0 %v3770
        %v3772 = vand.u32 %v3110, 4294901760
        %v3773 = vsub.f32 %v3110, %v3772
        %v3774 = vand.u32 %v3773, 4294901760
        %3775 = vmatpush.msra.mxu0 %v3774
        %v3776 = vand.u32 %v3108, 4294901760
        %v3777 = vsub.f32 %v3108, %v3776
        %v3778 = vand.u32 %v3777, 4294901760
        %3779 = vmatpush.msra.mxu0 %v3778
        %v3780 = vand.u32 %v217, 4294901760
        %3781 = vmatmul.f32.gmra.mxu0 %v3780
        %v3782 = vpop.f32.mrf.mxu0
        %v3783 = vadd.f32 %v3714, %v3782
        %3784 = vdwg.mxu0
        %v3785 = vand.u32 %v3138, 4294901760
        %3786 = vmatpush.msra.mxu0 %v3785
        %v3787 = vand.u32 %v3136, 4294901760
        %3788 = vmatpush.msra.mxu0 %v3787
        %v3789 = vand.u32 %v3134, 4294901760
        %3790 = vmatpush.msra.mxu0 %v3789
        %v3791 = vand.u32 %v3132, 4294901760
        %3792 = vmatpush.msra.mxu0 %v3791
        %v3793 = vand.u32 %v3130, 4294901760
        %3794 = vmatpush.msra.mxu0 %v3793
        %v3795 = vand.u32 %v3128, 4294901760
        %3796 = vmatpush.msra.mxu0 %v3795
        %v3797 = vand.u32 %v3126, 4294901760
        %3798 = vmatpush.msra.mxu0 %v3797
        %v3799 = vand.u32 %v3124, 4294901760
        %3800 = vmatpush.msra.mxu0 %v3799
        %v3801 = vand.u32 %v3122, 4294901760
        %3802 = vmatpush.msra.mxu0 %v3801
        %v3803 = vand.u32 %v3120, 4294901760
        %3804 = vmatpush.msra.mxu0 %v3803
        %v3805 = vand.u32 %v3118, 4294901760
        %3806 = vmatpush.msra.mxu0 %v3805
        %v3807 = vand.u32 %v3116, 4294901760
        %3808 = vmatpush.msra.mxu0 %v3807
        %v3809 = vand.u32 %v3114, 4294901760
        %3810 = vmatpush.msra.mxu0 %v3809
        %v3811 = vand.u32 %v3112, 4294901760
        %3812 = vmatpush.msra.mxu0 %v3811
        %v3813 = vand.u32 %v3110, 4294901760
        %3814 = vmatpush.msra.mxu0 %v3813
        %v3815 = vand.u32 %v3108, 4294901760
        %3816 = vmatpush.msra.mxu0 %v3815
        %v3817 = vand.u32 %v217, 4294901760
        %3818 = vmatmul.f32.gmra.mxu0 %v3817
        %v3819 = vpop.f32.mrf.mxu0
        %v3820 = vadd.f32 %v3783, %v3819
        %3821 = vdwg.mxu0
        %v3822 = vand.u32 %v3107, 4294901760
        %3823 = vmatpush.msra.mxu0 %v3822
        %v3824 = vand.u32 %v3105, 4294901760
        %3825 = vmatpush.msra.mxu0 %v3824
        %v3826 = vand.u32 %v3103, 4294901760
        %3827 = vmatpush.msra.mxu0 %v3826
        %v3828 = vand.u32 %v3101, 4294901760
        %3829 = vmatpush.msra.mxu0 %v3828
        %v3830 = vand.u32 %v3099, 4294901760
        %3831 = vmatpush.msra.mxu0 %v3830
        %v3832 = vand.u32 %v3097, 4294901760
        %3833 = vmatpush.msra.mxu0 %v3832
        %v3834 = vand.u32 %v3095, 4294901760
        %3835 = vmatpush.msra.mxu0 %v3834
        %v3836 = vand.u32 %v3093, 4294901760
        %3837 = vmatpush.msra.mxu0 %v3836
        %v3838 = vand.u32 %v3091, 4294901760
        %3839 = vmatpush.msra.mxu0 %v3838
        %v3840 = vand.u32 %v3089, 4294901760
        %3841 = vmatpush.msra.mxu0 %v3840
        %v3842 = vand.u32 %v3087, 4294901760
        %3843 = vmatpush.msra.mxu0 %v3842
        %v3844 = vand.u32 %v3085, 4294901760
        %3845 = vmatpush.msra.mxu0 %v3844
        %v3846 = vand.u32 %v3083, 4294901760
        %3847 = vmatpush.msra.mxu0 %v3846
        %v3848 = vand.u32 %v3081, 4294901760
        %3849 = vmatpush.msra.mxu0 %v3848
        %v3850 = vand.u32 %v3079, 4294901760
        %3851 = vmatpush.msra.mxu0 %v3850
        %v3852 = vand.u32 %v3077, 4294901760
        %3853 = vmatpush.msra.mxu0 %v3852
        %v3854 = vand.u32 %v216, 4294901760
        %v3855 = vsub.f32 %v216, %v3854
        %v3856 = vand.u32 %v3855, 4294901760
        %v3857 = vsub.f32 %v3855, %v3856
        %v3858 = vand.u32 %v3857, 4294901760
        %3859 = vmatmul.f32.gmra.mxu0 %v3858
        %v3860 = vpop.f32.mrf.mxu0
        %v3861 = vadd.f32 0.0, %v3860
        %3862 = vdwg.mxu0
        %v3863 = vand.u32 %v3107, 4294901760
        %v3864 = vsub.f32 %v3107, %v3863
        %v3865 = vand.u32 %v3864, 4294901760
        %v3866 = vsub.f32 %v3864, %v3865
        %v3867 = vand.u32 %v3866, 4294901760
        %3868 = vmatpush.msra.mxu0 %v3867
        %v3869 = vand.u32 %v3105, 4294901760
        %v3870 = vsub.f32 %v3105, %v3869
        %v3871 = vand.u32 %v3870, 4294901760
        %v3872 = vsub.f32 %v3870, %v3871
        %v3873 = vand.u32 %v3872, 4294901760
        %3874 = vmatpush.msra.mxu0 %v3873
        %v3875 = vand.u32 %v3103, 4294901760
        %v3876 = vsub.f32 %v3103, %v3875
        %v3877 = vand.u32 %v3876, 4294901760
        %v3878 = vsub.f32 %v3876, %v3877
        %v3879 = vand.u32 %v3878, 4294901760
        %3880 = vmatpush.msra.mxu0 %v3879
        %v3881 = vand.u32 %v3101, 4294901760
        %v3882 = vsub.f32 %v3101, %v3881
        %v3883 = vand.u32 %v3882, 4294901760
        %v3884 = vsub.f32 %v3882, %v3883
        %v3885 = vand.u32 %v3884, 4294901760
        %3886 = vmatpush.msra.mxu0 %v3885
        %v3887 = vand.u32 %v3099, 4294901760
        %v3888 = vsub.f32 %v3099, %v3887
        %v3889 = vand.u32 %v3888, 4294901760
        %v3890 = vsub.f32 %v3888, %v3889
        %v3891 = vand.u32 %v3890, 4294901760
        %3892 = vmatpush.msra.mxu0 %v3891
        %v3893 = vand.u32 %v3097, 4294901760
        %v3894 = vsub.f32 %v3097, %v3893
        %v3895 = vand.u32 %v3894, 4294901760
        %v3896 = vsub.f32 %v3894, %v3895
        %v3897 = vand.u32 %v3896, 4294901760
        %3898 = vmatpush.msra.mxu0 %v3897
        %v3899 = vand.u32 %v3095, 4294901760
        %v3900 = vsub.f32 %v3095, %v3899
        %v3901 = vand.u32 %v3900, 4294901760
        %v3902 = vsub.f32 %v3900, %v3901
        %v3903 = vand.u32 %v3902, 4294901760
        %3904 = vmatpush.msra.mxu0 %v3903
        %v3905 = vand.u32 %v3093, 4294901760
        %v3906 = vsub.f32 %v3093, %v3905
        %v3907 = vand.u32 %v3906, 4294901760
        %v3908 = vsub.f32 %v3906, %v3907
        %v3909 = vand.u32 %v3908, 4294901760
        %3910 = vmatpush.msra.mxu0 %v3909
        %v3911 = vand.u32 %v3091, 4294901760
        %v3912 = vsub.f32 %v3091, %v3911
        %v3913 = vand.u32 %v3912, 4294901760
        %v3914 = vsub.f32 %v3912, %v3913
        %v3915 = vand.u32 %v3914, 4294901760
        %3916 = vmatpush.msra.mxu0 %v3915
        %v3917 = vand.u32 %v3089, 4294901760
        %v3918 = vsub.f32 %v3089, %v3917
        %v3919 = vand.u32 %v3918, 4294901760
        %v3920 = vsub.f32 %v3918, %v3919
        %v3921 = vand.u32 %v3920, 4294901760
        %3922 = vmatpush.msra.mxu0 %v3921
        %v3923 = vand.u32 %v3087, 4294901760
        %v3924 = vsub.f32 %v3087, %v3923
        %v3925 = vand.u32 %v3924, 4294901760
        %v3926 = vsub.f32 %v3924, %v3925
        %v3927 = vand.u32 %v3926, 4294901760
        %3928 = vmatpush.msra.mxu0 %v3927
        %v3929 = vand.u32 %v3085, 4294901760
        %v3930 = vsub.f32 %v3085, %v3929
        %v3931 = vand.u32 %v3930, 4294901760
        %v3932 = vsub.f32 %v3930, %v3931
        %v3933 = vand.u32 %v3932, 4294901760
        %3934 = vmatpush.msra.mxu0 %v3933
        %v3935 = vand.u32 %v3083, 4294901760
        %v3936 = vsub.f32 %v3083, %v3935
        %v3937 = vand.u32 %v3936, 4294901760
        %v3938 = vsub.f32 %v3936, %v3937
        %v3939 = vand.u32 %v3938, 4294901760
        %3940 = vmatpush.msra.mxu0 %v3939
        %v3941 = vand.u32 %v3081, 4294901760
        %v3942 = vsub.f32 %v3081, %v3941
        %v3943 = vand.u32 %v3942, 4294901760
        %v3944 = vsub.f32 %v3942, %v3943
        %v3945 = vand.u32 %v3944, 4294901760
        %3946 = vmatpush.msra.mxu0 %v3945
        %v3947 = vand.u32 %v3079, 4294901760
        %v3948 = vsub.f32 %v3079, %v3947
        %v3949 = vand.u32 %v3948, 4294901760
        %v3950 = vsub.f32 %v3948, %v3949
        %v3951 = vand.u32 %v3950, 4294901760
        %3952 = vmatpush.msra.mxu0 %v3951
        %v3953 = vand.u32 %v3077, 4294901760
        %v3954 = vsub.f32 %v3077, %v3953
        %v3955 = vand.u32 %v3954, 4294901760
        %v3956 = vsub.f32 %v3954, %v3955
        %v3957 = vand.u32 %v3956, 4294901760
        %3958 = vmatpush.msra.mxu0 %v3957
        %v3959 = vand.u32 %v216, 4294901760
        %3960 = vmatmul.f32.gmra.mxu0 %v3959
        %v3961 = vpop.f32.mrf.mxu0
        %v3962 = vadd.f32 %v3861, %v3961
        %3963 = vdwg.mxu0
        %v3964 = vand.u32 %v3107, 4294901760
        %v3965 = vsub.f32 %v3107, %v3964
        %3966 = vmatpush.msra.mxu0 %v3965
        %v3967 = vand.u32 %v3105, 4294901760
        %v3968 = vsub.f32 %v3105, %v3967
        %3969 = vmatpush.msra.mxu0 %v3968
        %v3970 = vand.u32 %v3103, 4294901760
        %v3971 = vsub.f32 %v3103, %v3970
        %3972 = vmatpush.msra.mxu0 %v3971
        %v3973 = vand.u32 %v3101, 4294901760
        %v3974 = vsub.f32 %v3101, %v3973
        %3975 = vmatpush.msra.mxu0 %v3974
        %v3976 = vand.u32 %v3099, 4294901760
        %v3977 = vsub.f32 %v3099, %v3976
        %3978 = vmatpush.msra.mxu0 %v3977
        %v3979 = vand.u32 %v3097, 4294901760
        %v3980 = vsub.f32 %v3097, %v3979
        %3981 = vmatpush.msra.mxu0 %v3980
        %v3982 = vand.u32 %v3095, 4294901760
        %v3983 = vsub.f32 %v3095, %v3982
        %3984 = vmatpush.msra.mxu0 %v3983
        %v3985 = vand.u32 %v3093, 4294901760
        %v3986 = vsub.f32 %v3093, %v3985
        %3987 = vmatpush.msra.mxu0 %v3986
        %v3988 = vand.u32 %v3091, 4294901760
        %v3989 = vsub.f32 %v3091, %v3988
        %3990 = vmatpush.msra.mxu0 %v3989
        %v3991 = vand.u32 %v3089, 4294901760
        %v3992 = vsub.f32 %v3089, %v3991
        %3993 = vmatpush.msra.mxu0 %v3992
        %v3994 = vand.u32 %v3087, 4294901760
        %v3995 = vsub.f32 %v3087, %v3994
        %3996 = vmatpush.msra.mxu0 %v3995
        %v3997 = vand.u32 %v3085, 4294901760
        %v3998 = vsub.f32 %v3085, %v3997
        %3999 = vmatpush.msra.mxu0 %v3998
        %v4000 = vand.u32 %v3083, 4294901760
        %v4001 = vsub.f32 %v3083, %v4000
        %4002 = vmatpush.msra.mxu0 %v4001
        %v4003 = vand.u32 %v3081, 4294901760
        %v4004 = vsub.f32 %v3081, %v4003
        %4005 = vmatpush.msra.mxu0 %v4004
        %v4006 = vand.u32 %v3079, 4294901760
        %v4007 = vsub.f32 %v3079, %v4006
        %4008 = vmatpush.msra.mxu0 %v4007
        %v4009 = vand.u32 %v3077, 4294901760
        %v4010 = vsub.f32 %v3077, %v4009
        %4011 = vmatpush.msra.mxu0 %v4010
        %v4012 = vand.u32 %v216, 4294901760
        %v4013 = vsub.f32 %v216, %v4012
        %4014 = vmatmul.f32.gmra.mxu0 %v4013
        %v4015 = vpop.f32.mrf.mxu0
        %v4016 = vadd.f32 %v3962, %v4015
        %4017 = vdwg.mxu0
        %v4018 = vand.u32 %v3107, 4294901760
        %4019 = vmatpush.msra.mxu0 %v4018
        %v4020 = vand.u32 %v3105, 4294901760
        %4021 = vmatpush.msra.mxu0 %v4020
        %v4022 = vand.u32 %v3103, 4294901760
        %4023 = vmatpush.msra.mxu0 %v4022
        %v4024 = vand.u32 %v3101, 4294901760
        %4025 = vmatpush.msra.mxu0 %v4024
        %v4026 = vand.u32 %v3099, 4294901760
        %4027 = vmatpush.msra.mxu0 %v4026
        %v4028 = vand.u32 %v3097, 4294901760
        %4029 = vmatpush.msra.mxu0 %v4028
        %v4030 = vand.u32 %v3095, 4294901760
        %4031 = vmatpush.msra.mxu0 %v4030
        %v4032 = vand.u32 %v3093, 4294901760
        %4033 = vmatpush.msra.mxu0 %v4032
        %v4034 = vand.u32 %v3091, 4294901760
        %4035 = vmatpush.msra.mxu0 %v4034
        %v4036 = vand.u32 %v3089, 4294901760
        %4037 = vmatpush.msra.mxu0 %v4036
        %v4038 = vand.u32 %v3087, 4294901760
        %4039 = vmatpush.msra.mxu0 %v4038
        %v4040 = vand.u32 %v3085, 4294901760
        %4041 = vmatpush.msra.mxu0 %v4040
        %v4042 = vand.u32 %v3083, 4294901760
        %4043 = vmatpush.msra.mxu0 %v4042
        %v4044 = vand.u32 %v3081, 4294901760
        %4045 = vmatpush.msra.mxu0 %v4044
        %v4046 = vand.u32 %v3079, 4294901760
        %4047 = vmatpush.msra.mxu0 %v4046
        %v4048 = vand.u32 %v3077, 4294901760
        %4049 = vmatpush.msra.mxu0 %v4048
        %v4050 = vand.u32 %v216, 4294901760
        %v4051 = vsub.f32 %v216, %v4050
        %v4052 = vand.u32 %v4051, 4294901760
        %4053 = vmatmul.f32.gmra.mxu0 %v4052
        %v4054 = vpop.f32.mrf.mxu0
        %v4055 = vadd.f32 %v4016, %v4054
        %4056 = vdwg.mxu0
        %v4057 = vand.u32 %v3107, 4294901760
        %v4058 = vsub.f32 %v3107, %v4057
        %v4059 = vand.u32 %v4058, 4294901760
        %4060 = vmatpush.msra.mxu0 %v4059
        %v4061 = vand.u32 %v3105, 4294901760
        %v4062 = vsub.f32 %v3105, %v4061
        %v4063 = vand.u32 %v4062, 4294901760
        %4064 = vmatpush.msra.mxu0 %v4063
        %v4065 = vand.u32 %v3103, 4294901760
        %v4066 = vsub.f32 %v3103, %v4065
        %v4067 = vand.u32 %v4066, 4294901760
        %4068 = vmatpush.msra.mxu0 %v4067
        %v4069 = vand.u32 %v3101, 4294901760
        %v4070 = vsub.f32 %v3101, %v4069
        %v4071 = vand.u32 %v4070, 4294901760
        %4072 = vmatpush.msra.mxu0 %v4071
        %v4073 = vand.u32 %v3099, 4294901760
        %v4074 = vsub.f32 %v3099, %v4073
        %v4075 = vand.u32 %v4074, 4294901760
        %4076 = vmatpush.msra.mxu0 %v4075
        %v4077 = vand.u32 %v3097, 4294901760
        %v4078 = vsub.f32 %v3097, %v4077
        %v4079 = vand.u32 %v4078, 4294901760
        %4080 = vmatpush.msra.mxu0 %v4079
        %v4081 = vand.u32 %v3095, 4294901760
        %v4082 = vsub.f32 %v3095, %v4081
        %v4083 = vand.u32 %v4082, 4294901760
        %4084 = vmatpush.msra.mxu0 %v4083
        %v4085 = vand.u32 %v3093, 4294901760
        %v4086 = vsub.f32 %v3093, %v4085
        %v4087 = vand.u32 %v4086, 4294901760
        %4088 = vmatpush.msra.mxu0 %v4087
        %v4089 = vand.u32 %v3091, 4294901760
        %v4090 = vsub.f32 %v3091, %v4089
        %v4091 = vand.u32 %v4090, 4294901760
        %4092 = vmatpush.msra.mxu0 %v4091
        %v4093 = vand.u32 %v3089, 4294901760
        %v4094 = vsub.f32 %v3089, %v4093
        %v4095 = vand.u32 %v4094, 4294901760
        %4096 = vmatpush.msra.mxu0 %v4095
        %v4097 = vand.u32 %v3087, 4294901760
        %v4098 = vsub.f32 %v3087, %v4097
        %v4099 = vand.u32 %v4098, 4294901760
        %4100 = vmatpush.msra.mxu0 %v4099
        %v4101 = vand.u32 %v3085, 4294901760
        %v4102 = vsub.f32 %v3085, %v4101
        %v4103 = vand.u32 %v4102, 4294901760
        %4104 = vmatpush.msra.mxu0 %v4103
        %v4105 = vand.u32 %v3083, 4294901760
        %v4106 = vsub.f32 %v3083, %v4105
        %v4107 = vand.u32 %v4106, 4294901760
        %4108 = vmatpush.msra.mxu0 %v4107
        %v4109 = vand.u32 %v3081, 4294901760
        %v4110 = vsub.f32 %v3081, %v4109
        %v4111 = vand.u32 %v4110, 4294901760
        %4112 = vmatpush.msra.mxu0 %v4111
        %v4113 = vand.u32 %v3079, 4294901760
        %v4114 = vsub.f32 %v3079, %v4113
        %v4115 = vand.u32 %v4114, 4294901760
        %4116 = vmatpush.msra.mxu0 %v4115
        %v4117 = vand.u32 %v3077, 4294901760
        %v4118 = vsub.f32 %v3077, %v4117
        %v4119 = vand.u32 %v4118, 4294901760
        %4120 = vmatpush.msra.mxu0 %v4119
        %v4121 = vand.u32 %v216, 4294901760
        %4122 = vmatmul.f32.gmra.mxu0 %v4121
        %v4123 = vpop.f32.mrf.mxu0
        %v4124 = vadd.f32 %v4055, %v4123
        %4125 = vdwg.mxu0
        %v4126 = vand.u32 %v3107, 4294901760
        %4127 = vmatpush.msra.mxu0 %v4126
        %v4128 = vand.u32 %v3105, 4294901760
        %4129 = vmatpush.msra.mxu0 %v4128
        %v4130 = vand.u32 %v3103, 4294901760
        %4131 = vmatpush.msra.mxu0 %v4130
        %v4132 = vand.u32 %v3101, 4294901760
        %4133 = vmatpush.msra.mxu0 %v4132
        %v4134 = vand.u32 %v3099, 4294901760
        %4135 = vmatpush.msra.mxu0 %v4134
        %v4136 = vand.u32 %v3097, 4294901760
        %4137 = vmatpush.msra.mxu0 %v4136
        %v4138 = vand.u32 %v3095, 4294901760
        %4139 = vmatpush.msra.mxu0 %v4138
        %v4140 = vand.u32 %v3093, 4294901760
        %4141 = vmatpush.msra.mxu0 %v4140
        %v4142 = vand.u32 %v3091, 4294901760
        %4143 = vmatpush.msra.mxu0 %v4142
        %v4144 = vand.u32 %v3089, 4294901760
        %4145 = vmatpush.msra.mxu0 %v4144
        %v4146 = vand.u32 %v3087, 4294901760
        %4147 = vmatpush.msra.mxu0 %v4146
        %v4148 = vand.u32 %v3085, 4294901760
        %4149 = vmatpush.msra.mxu0 %v4148
        %v4150 = vand.u32 %v3083, 4294901760
        %4151 = vmatpush.msra.mxu0 %v4150
        %v4152 = vand.u32 %v3081, 4294901760
        %4153 = vmatpush.msra.mxu0 %v4152
        %v4154 = vand.u32 %v3079, 4294901760
        %4155 = vmatpush.msra.mxu0 %v4154
        %v4156 = vand.u32 %v3077, 4294901760
        %4157 = vmatpush.msra.mxu0 %v4156
        %v4158 = vand.u32 %v216, 4294901760
        %4159 = vmatmul.f32.gmra.mxu0 %v4158
        %v4160 = vpop.f32.mrf.mxu0
        %v4161 = vadd.f32 %v4124, %v4160
        %4162 = vdwg.mxu0
        %v4163 = vand.u32 %v3139, 4294901760
        %4164 = vmatpush.msra.mxu0 %v4163
        %v4165 = vand.u32 %v3137, 4294901760
        %4166 = vmatpush.msra.mxu0 %v4165
        %v4167 = vand.u32 %v3135, 4294901760
        %4168 = vmatpush.msra.mxu0 %v4167
        %v4169 = vand.u32 %v3133, 4294901760
        %4170 = vmatpush.msra.mxu0 %v4169
        %v4171 = vand.u32 %v3131, 4294901760
        %4172 = vmatpush.msra.mxu0 %v4171
        %v4173 = vand.u32 %v3129, 4294901760
        %4174 = vmatpush.msra.mxu0 %v4173
        %v4175 = vand.u32 %v3127, 4294901760
        %4176 = vmatpush.msra.mxu0 %v4175
        %v4177 = vand.u32 %v3125, 4294901760
        %4178 = vmatpush.msra.mxu0 %v4177
        %v4179 = vand.u32 %v3123, 4294901760
        %4180 = vmatpush.msra.mxu0 %v4179
        %v4181 = vand.u32 %v3121, 4294901760
        %4182 = vmatpush.msra.mxu0 %v4181
        %v4183 = vand.u32 %v3119, 4294901760
        %4184 = vmatpush.msra.mxu0 %v4183
        %v4185 = vand.u32 %v3117, 4294901760
        %4186 = vmatpush.msra.mxu0 %v4185
        %v4187 = vand.u32 %v3115, 4294901760
        %4188 = vmatpush.msra.mxu0 %v4187
        %v4189 = vand.u32 %v3113, 4294901760
        %4190 = vmatpush.msra.mxu0 %v4189
        %v4191 = vand.u32 %v3111, 4294901760
        %4192 = vmatpush.msra.mxu0 %v4191
        %v4193 = vand.u32 %v3109, 4294901760
        %4194 = vmatpush.msra.mxu0 %v4193
        %v4195 = vand.u32 %v217, 4294901760
        %v4196 = vsub.f32 %v217, %v4195
        %v4197 = vand.u32 %v4196, 4294901760
        %v4198 = vsub.f32 %v4196, %v4197
        %v4199 = vand.u32 %v4198, 4294901760
        %4200 = vmatmul.f32.gmra.mxu0 %v4199
        %v4201 = vpop.f32.mrf.mxu0
        %v4202 = vadd.f32 %v4161, %v4201
        %4203 = vdwg.mxu0
        %v4204 = vand.u32 %v3139, 4294901760
        %v4205 = vsub.f32 %v3139, %v4204
        %v4206 = vand.u32 %v4205, 4294901760
        %v4207 = vsub.f32 %v4205, %v4206
        %v4208 = vand.u32 %v4207, 4294901760
        %4209 = vmatpush.msra.mxu0 %v4208
        %v4210 = vand.u32 %v3137, 4294901760
        %v4211 = vsub.f32 %v3137, %v4210
        %v4212 = vand.u32 %v4211, 4294901760
        %v4213 = vsub.f32 %v4211, %v4212
        %v4214 = vand.u32 %v4213, 4294901760
        %4215 = vmatpush.msra.mxu0 %v4214
        %v4216 = vand.u32 %v3135, 4294901760
        %v4217 = vsub.f32 %v3135, %v4216
        %v4218 = vand.u32 %v4217, 4294901760
        %v4219 = vsub.f32 %v4217, %v4218
        %v4220 = vand.u32 %v4219, 4294901760
        %4221 = vmatpush.msra.mxu0 %v4220
        %v4222 = vand.u32 %v3133, 4294901760
        %v4223 = vsub.f32 %v3133, %v4222
        %v4224 = vand.u32 %v4223, 4294901760
        %v4225 = vsub.f32 %v4223, %v4224
        %v4226 = vand.u32 %v4225, 4294901760
        %4227 = vmatpush.msra.mxu0 %v4226
        %v4228 = vand.u32 %v3131, 4294901760
        %v4229 = vsub.f32 %v3131, %v4228
        %v4230 = vand.u32 %v4229, 4294901760
        %v4231 = vsub.f32 %v4229, %v4230
        %v4232 = vand.u32 %v4231, 4294901760
        %4233 = vmatpush.msra.mxu0 %v4232
        %v4234 = vand.u32 %v3129, 4294901760
        %v4235 = vsub.f32 %v3129, %v4234
        %v4236 = vand.u32 %v4235, 4294901760
        %v4237 = vsub.f32 %v4235, %v4236
        %v4238 = vand.u32 %v4237, 4294901760
        %4239 = vmatpush.msra.mxu0 %v4238
        %v4240 = vand.u32 %v3127, 4294901760
        %v4241 = vsub.f32 %v3127, %v4240
        %v4242 = vand.u32 %v4241, 4294901760
        %v4243 = vsub.f32 %v4241, %v4242
        %v4244 = vand.u32 %v4243, 4294901760
        %4245 = vmatpush.msra.mxu0 %v4244
        %v4246 = vand.u32 %v3125, 4294901760
        %v4247 = vsub.f32 %v3125, %v4246
        %v4248 = vand.u32 %v4247, 4294901760
        %v4249 = vsub.f32 %v4247, %v4248
        %v4250 = vand.u32 %v4249, 4294901760
        %4251 = vmatpush.msra.mxu0 %v4250
        %v4252 = vand.u32 %v3123, 4294901760
        %v4253 = vsub.f32 %v3123, %v4252
        %v4254 = vand.u32 %v4253, 4294901760
        %v4255 = vsub.f32 %v4253, %v4254
        %v4256 = vand.u32 %v4255, 4294901760
        %4257 = vmatpush.msra.mxu0 %v4256
        %v4258 = vand.u32 %v3121, 4294901760
        %v4259 = vsub.f32 %v3121, %v4258
        %v4260 = vand.u32 %v4259, 4294901760
        %v4261 = vsub.f32 %v4259, %v4260
        %v4262 = vand.u32 %v4261, 4294901760
        %4263 = vmatpush.msra.mxu0 %v4262
        %v4264 = vand.u32 %v3119, 4294901760
        %v4265 = vsub.f32 %v3119, %v4264
        %v4266 = vand.u32 %v4265, 4294901760
        %v4267 = vsub.f32 %v4265, %v4266
        %v4268 = vand.u32 %v4267, 4294901760
        %4269 = vmatpush.msra.mxu0 %v4268
        %v4270 = vand.u32 %v3117, 4294901760
        %v4271 = vsub.f32 %v3117, %v4270
        %v4272 = vand.u32 %v4271, 4294901760
        %v4273 = vsub.f32 %v4271, %v4272
        %v4274 = vand.u32 %v4273, 4294901760
        %4275 = vmatpush.msra.mxu0 %v4274
        %v4276 = vand.u32 %v3115, 4294901760
        %v4277 = vsub.f32 %v3115, %v4276
        %v4278 = vand.u32 %v4277, 4294901760
        %v4279 = vsub.f32 %v4277, %v4278
        %v4280 = vand.u32 %v4279, 4294901760
        %4281 = vmatpush.msra.mxu0 %v4280
        %v4282 = vand.u32 %v3113, 4294901760
        %v4283 = vsub.f32 %v3113, %v4282
        %v4284 = vand.u32 %v4283, 4294901760
        %v4285 = vsub.f32 %v4283, %v4284
        %v4286 = vand.u32 %v4285, 4294901760
        %4287 = vmatpush.msra.mxu0 %v4286
        %v4288 = vand.u32 %v3111, 4294901760
        %v4289 = vsub.f32 %v3111, %v4288
        %v4290 = vand.u32 %v4289, 4294901760
        %v4291 = vsub.f32 %v4289, %v4290
        %v4292 = vand.u32 %v4291, 4294901760
        %4293 = vmatpush.msra.mxu0 %v4292
        %v4294 = vand.u32 %v3109, 4294901760
        %v4295 = vsub.f32 %v3109, %v4294
        %v4296 = vand.u32 %v4295, 4294901760
        %v4297 = vsub.f32 %v4295, %v4296
        %v4298 = vand.u32 %v4297, 4294901760
        %4299 = vmatpush.msra.mxu0 %v4298
        %v4300 = vand.u32 %v217, 4294901760
        %4301 = vmatmul.f32.gmra.mxu0 %v4300
        %v4302 = vpop.f32.mrf.mxu0
        %v4303 = vadd.f32 %v4202, %v4302
        %4304 = vdwg.mxu0
        %v4305 = vand.u32 %v3139, 4294901760
        %v4306 = vsub.f32 %v3139, %v4305
        %4307 = vmatpush.msra.mxu0 %v4306
        %v4308 = vand.u32 %v3137, 4294901760
        %v4309 = vsub.f32 %v3137, %v4308
        %4310 = vmatpush.msra.mxu0 %v4309
        %v4311 = vand.u32 %v3135, 4294901760
        %v4312 = vsub.f32 %v3135, %v4311
        %4313 = vmatpush.msra.mxu0 %v4312
        %v4314 = vand.u32 %v3133, 4294901760
        %v4315 = vsub.f32 %v3133, %v4314
        %4316 = vmatpush.msra.mxu0 %v4315
        %v4317 = vand.u32 %v3131, 4294901760
        %v4318 = vsub.f32 %v3131, %v4317
        %4319 = vmatpush.msra.mxu0 %v4318
        %v4320 = vand.u32 %v3129, 4294901760
        %v4321 = vsub.f32 %v3129, %v4320
        %4322 = vmatpush.msra.mxu0 %v4321
        %v4323 = vand.u32 %v3127, 4294901760
        %v4324 = vsub.f32 %v3127, %v4323
        %4325 = vmatpush.msra.mxu0 %v4324
        %v4326 = vand.u32 %v3125, 4294901760
        %v4327 = vsub.f32 %v3125, %v4326
        %4328 = vmatpush.msra.mxu0 %v4327
        %v4329 = vand.u32 %v3123, 4294901760
        %v4330 = vsub.f32 %v3123, %v4329
        %4331 = vmatpush.msra.mxu0 %v4330
        %v4332 = vand.u32 %v3121, 4294901760
        %v4333 = vsub.f32 %v3121, %v4332
        %4334 = vmatpush.msra.mxu0 %v4333
        %v4335 = vand.u32 %v3119, 4294901760
        %v4336 = vsub.f32 %v3119, %v4335
        %4337 = vmatpush.msra.mxu0 %v4336
        %v4338 = vand.u32 %v3117, 4294901760
        %v4339 = vsub.f32 %v3117, %v4338
        %4340 = vmatpush.msra.mxu0 %v4339
        %v4341 = vand.u32 %v3115, 4294901760
        %v4342 = vsub.f32 %v3115, %v4341
        %4343 = vmatpush.msra.mxu0 %v4342
        %v4344 = vand.u32 %v3113, 4294901760
        %v4345 = vsub.f32 %v3113, %v4344
        %4346 = vmatpush.msra.mxu0 %v4345
        %v4347 = vand.u32 %v3111, 4294901760
        %v4348 = vsub.f32 %v3111, %v4347
        %4349 = vmatpush.msra.mxu0 %v4348
        %v4350 = vand.u32 %v3109, 4294901760
        %v4351 = vsub.f32 %v3109, %v4350
        %4352 = vmatpush.msra.mxu0 %v4351
        %v4353 = vand.u32 %v217, 4294901760
        %v4354 = vsub.f32 %v217, %v4353
        %4355 = vmatmul.f32.gmra.mxu0 %v4354
        %v4356 = vpop.f32.mrf.mxu0
        %v4357 = vadd.f32 %v4303, %v4356
        %4358 = vdwg.mxu0
        %v4359 = vand.u32 %v3139, 4294901760
        %4360 = vmatpush.msra.mxu0 %v4359
        %v4361 = vand.u32 %v3137, 4294901760
        %4362 = vmatpush.msra.mxu0 %v4361
        %v4363 = vand.u32 %v3135, 4294901760
        %4364 = vmatpush.msra.mxu0 %v4363
        %v4365 = vand.u32 %v3133, 4294901760
        %4366 = vmatpush.msra.mxu0 %v4365
        %v4367 = vand.u32 %v3131, 4294901760
        %4368 = vmatpush.msra.mxu0 %v4367
        %v4369 = vand.u32 %v3129, 4294901760
        %4370 = vmatpush.msra.mxu0 %v4369
        %v4371 = vand.u32 %v3127, 4294901760
        %4372 = vmatpush.msra.mxu0 %v4371
        %v4373 = vand.u32 %v3125, 4294901760
        %4374 = vmatpush.msra.mxu0 %v4373
        %v4375 = vand.u32 %v3123, 4294901760
        %4376 = vmatpush.msra.mxu0 %v4375
        %v4377 = vand.u32 %v3121, 4294901760
        %4378 = vmatpush.msra.mxu0 %v4377
        %v4379 = vand.u32 %v3119, 4294901760
        %4380 = vmatpush.msra.mxu0 %v4379
        %v4381 = vand.u32 %v3117, 4294901760
        %4382 = vmatpush.msra.mxu0 %v4381
        %v4383 = vand.u32 %v3115, 4294901760
        %4384 = vmatpush.msra.mxu0 %v4383
        %v4385 = vand.u32 %v3113, 4294901760
        %4386 = vmatpush.msra.mxu0 %v4385
        %v4387 = vand.u32 %v3111, 4294901760
        %4388 = vmatpush.msra.mxu0 %v4387
        %v4389 = vand.u32 %v3109, 4294901760
        %4390 = vmatpush.msra.mxu0 %v4389
        %v4391 = vand.u32 %v217, 4294901760
        %v4392 = vsub.f32 %v217, %v4391
        %v4393 = vand.u32 %v4392, 4294901760
        %4394 = vmatmul.f32.gmra.mxu0 %v4393
        %v4395 = vpop.f32.mrf.mxu0
        %v4396 = vadd.f32 %v4357, %v4395
        %4397 = vdwg.mxu0
        %v4398 = vand.u32 %v3139, 4294901760
        %v4399 = vsub.f32 %v3139, %v4398
        %v4400 = vand.u32 %v4399, 4294901760
        %4401 = vmatpush.msra.mxu0 %v4400
        %v4402 = vand.u32 %v3137, 4294901760
        %v4403 = vsub.f32 %v3137, %v4402
        %v4404 = vand.u32 %v4403, 4294901760
        %4405 = vmatpush.msra.mxu0 %v4404
        %v4406 = vand.u32 %v3135, 4294901760
        %v4407 = vsub.f32 %v3135, %v4406
        %v4408 = vand.u32 %v4407, 4294901760
        %4409 = vmatpush.msra.mxu0 %v4408
        %v4410 = vand.u32 %v3133, 4294901760
        %v4411 = vsub.f32 %v3133, %v4410
        %v4412 = vand.u32 %v4411, 4294901760
        %4413 = vmatpush.msra.mxu0 %v4412
        %v4414 = vand.u32 %v3131, 4294901760
        %v4415 = vsub.f32 %v3131, %v4414
        %v4416 = vand.u32 %v4415, 4294901760
        %4417 = vmatpush.msra.mxu0 %v4416
        %v4418 = vand.u32 %v3129, 4294901760
        %v4419 = vsub.f32 %v3129, %v4418
        %v4420 = vand.u32 %v4419, 4294901760
        %4421 = vmatpush.msra.mxu0 %v4420
        %v4422 = vand.u32 %v3127, 4294901760
        %v4423 = vsub.f32 %v3127, %v4422
        %v4424 = vand.u32 %v4423, 4294901760
        %4425 = vmatpush.msra.mxu0 %v4424
        %v4426 = vand.u32 %v3125, 4294901760
        %v4427 = vsub.f32 %v3125, %v4426
        %v4428 = vand.u32 %v4427, 4294901760
        %4429 = vmatpush.msra.mxu0 %v4428
        %v4430 = vand.u32 %v3123, 4294901760
        %v4431 = vsub.f32 %v3123, %v4430
        %v4432 = vand.u32 %v4431, 4294901760
        %4433 = vmatpush.msra.mxu0 %v4432
        %v4434 = vand.u32 %v3121, 4294901760
        %v4435 = vsub.f32 %v3121, %v4434
        %v4436 = vand.u32 %v4435, 4294901760
        %4437 = vmatpush.msra.mxu0 %v4436
        %v4438 = vand.u32 %v3119, 4294901760
        %v4439 = vsub.f32 %v3119, %v4438
        %v4440 = vand.u32 %v4439, 4294901760
        %4441 = vmatpush.msra.mxu0 %v4440
        %v4442 = vand.u32 %v3117, 4294901760
        %v4443 = vsub.f32 %v3117, %v4442
        %v4444 = vand.u32 %v4443, 4294901760
        %4445 = vmatpush.msra.mxu0 %v4444
        %v4446 = vand.u32 %v3115, 4294901760
        %v4447 = vsub.f32 %v3115, %v4446
        %v4448 = vand.u32 %v4447, 4294901760
        %4449 = vmatpush.msra.mxu0 %v4448
        %v4450 = vand.u32 %v3113, 4294901760
        %v4451 = vsub.f32 %v3113, %v4450
        %v4452 = vand.u32 %v4451, 4294901760
        %4453 = vmatpush.msra.mxu0 %v4452
        %v4454 = vand.u32 %v3111, 4294901760
        %v4455 = vsub.f32 %v3111, %v4454
        %v4456 = vand.u32 %v4455, 4294901760
        %4457 = vmatpush.msra.mxu0 %v4456
        %v4458 = vand.u32 %v3109, 4294901760
        %v4459 = vsub.f32 %v3109, %v4458
        %v4460 = vand.u32 %v4459, 4294901760
        %4461 = vmatpush.msra.mxu0 %v4460
        %v4462 = vand.u32 %v217, 4294901760
        %4463 = vmatmul.f32.gmra.mxu0 %v4462
        %v4464 = vpop.f32.mrf.mxu0
        %v4465 = vadd.f32 %v4396, %v4464
        %4466 = vdwg.mxu0
        %v4467 = vand.u32 %v3139, 4294901760
        %4468 = vmatpush.msra.mxu0 %v4467
        %v4469 = vand.u32 %v3137, 4294901760
        %4470 = vmatpush.msra.mxu0 %v4469
        %v4471 = vand.u32 %v3135, 4294901760
        %4472 = vmatpush.msra.mxu0 %v4471
        %v4473 = vand.u32 %v3133, 4294901760
        %4474 = vmatpush.msra.mxu0 %v4473
        %v4475 = vand.u32 %v3131, 4294901760
        %4476 = vmatpush.msra.mxu0 %v4475
        %v4477 = vand.u32 %v3129, 4294901760
        %4478 = vmatpush.msra.mxu0 %v4477
        %v4479 = vand.u32 %v3127, 4294901760
        %4480 = vmatpush.msra.mxu0 %v4479
        %v4481 = vand.u32 %v3125, 4294901760
        %4482 = vmatpush.msra.mxu0 %v4481
        %v4483 = vand.u32 %v3123, 4294901760
        %4484 = vmatpush.msra.mxu0 %v4483
        %v4485 = vand.u32 %v3121, 4294901760
        %4486 = vmatpush.msra.mxu0 %v4485
        %v4487 = vand.u32 %v3119, 4294901760
        %4488 = vmatpush.msra.mxu0 %v4487
        %v4489 = vand.u32 %v3117, 4294901760
        %4490 = vmatpush.msra.mxu0 %v4489
        %v4491 = vand.u32 %v3115, 4294901760
        %4492 = vmatpush.msra.mxu0 %v4491
        %v4493 = vand.u32 %v3113, 4294901760
        %4494 = vmatpush.msra.mxu0 %v4493
        %v4495 = vand.u32 %v3111, 4294901760
        %4496 = vmatpush.msra.mxu0 %v4495
        %v4497 = vand.u32 %v3109, 4294901760
        %4498 = vmatpush.msra.mxu0 %v4497
        %v4499 = vand.u32 %v217, 4294901760
        %4500 = vmatmul.f32.gmra.mxu0 %v4499
        %v4501 = vpop.f32.mrf.mxu0
        %v4502 = vadd.f32 %v4465, %v4501
        %4503 = vdwg.mxu0
        %v4504 = vlaneseq
        %v4505 = vshrl.u32 %v4504, 7
        %v4506 = vand.u32 %v4505, 7
        %vm4507 = vcmp.gt.s32.totalorder %v4506, 0
        %v4508 = vrot.slane %v962, 7
        %v4509 = vrot.slane %v1644, 7
        %v4510 = vsel %vm4507, %v4508, 0.0
        %v4511 = vsel %vm4507, %v4509, 0.0
        %vm4512 = vcmp.lt.s32.totalorder %v4506, 7
        %v4513 = vrot.slane %v3820, 1
        %v4514 = vrot.slane %v4502, 1
        %v4515 = vsel %vm4512, %v4513, 0.0
        %v4516 = vsel %vm4512, %v4514, 0.0
        %v4517 = vadd.f32 %v4510, %v2391
        %v4518 = vadd.f32 %v4511, %v3073
        %v4519 = vadd.f32 %v4517, %v4515
        %v4520 = vadd.f32 %v4518, %v4516
        %v4521 = vmul.f32 %v4519, 0.5
        %v4522 = vmul.f32 %v4520, 0.5
        %v4523 = vtanh.pop %v4521
        %v4524 = vtanh.pop %v4522
        %v4525 = vadd.f32 %v4523, 1.0
        %v4526 = vadd.f32 %v4524, 1.0
        %v4527 = vmul.f32 %v4525, 0.5
        %v4528 = vmul.f32 %v4526, 0.5
        %v4529 = vmul.f32 %v186, %v4527
        %v4530 = vmul.f32 %v187, %v4528
        %4531 = vst [vmem:[%s184] sm:$0xff] %v4529
        %4532 = vst [vmem:[%s184 + $0x8] sm:$0xff] %v4530
        %v4533 = vld [vmem:[%s192] sm:$0xff]
        %v4534 = vld [vmem:[%s192 + $0x8] sm:$0xff]
        %v4535 = vmul.f32 %v4533, %v4527
        %v4536 = vmul.f32 %v4534, %v4528
        %s4537 = scalar_lea.vmem %s184, 16
        %4538 = vst [vmem:[%s4537] sm:$0xff] %v4535
        %4539 = vst [vmem:[%s4537 + $0x8] sm:$0xff] %v4536
        %v4540 = vld [vmem:[%s201] sm:$0xff]
        %v4541 = vld [vmem:[%s201 + $0x8] sm:$0xff]
        %v4542 = vmul.f32 %v4540, %v4527
        %v4543 = vmul.f32 %v4541, %v4528
        %s4544 = scalar_lea.vmem %s184, 32
        %4545 = vst [vmem:[%s4544] sm:$0xff] %v4542
        %4546 = vst [vmem:[%s4544 + $0x8] sm:$0xff] %v4543
        %v4547 = vld [vmem:[%s210] sm:$0xff]
        %v4548 = vld [vmem:[%s210 + $0x8] sm:$0xff]
        %v4549 = vmul.f32 %v4547, %v4527
        %v4550 = vmul.f32 %v4548, %v4528
        %s4551 = scalar_lea.vmem %s184, 48
        %4552 = vst [vmem:[%s4551] sm:$0xff] %v4549
        %4553 = vst [vmem:[%s4551 + $0x8] sm:$0xff] %v4550
        %p4554 = scmp.lt.s32.totalorder %s15, 1
        %s4555 = scalar_select %p4554, %s15, 1
        %s4556 = smul.addr %s4555, 8
        %s4557 = smul.addr %s4556, 8
        %s4558 = scalar_lea.vmem %s3, %s4557
        // Predicated region
        $region37: #{sw_forward.1} parent=31 // pred_check
          %p4559 = pneg %p101
        $region38: #{sw_forward.1} parent=31 // pred_check_branch
          %4561 = sbr.rel (%p4559) target = $region40
        $region39: #{sw_forward.1} parent=31 // pred_region
          _
        $region40: #{sw_forward.1} parent=31 // pred_fallthru
          _
      $region32: #{sw_forward.1} parent=5 // pred_fallthru
        _
      %p4562 = scmp.le.s32.totalorder 2, %s10
      // Predicated region
      $region41: #{sw_forward.1} parent=5 // pred_check
        %p4563 = pneg %p4562
      $region42: #{sw_forward.1} parent=5 // pred_check_branch
        %4565 = sbr.rel (%p4563) target = $region44
      $region43: #{sw_forward.1} parent=5 // pred_region
        %s4566 = ssub.s32 %s10, 2
        // Predicated region
        $region45: #{sw_forward.1} parent=43 // pred_check
          %p4567 = pneg %p107
        $region46: #{sw_forward.1} parent=43 // pred_check_branch
          %4569 = sbr.rel (%p4567) target = $region48
        $region47: #{sw_forward.1} parent=43 // pred_region
          %p4570 = scmp.lt.s32.totalorder %s16, 1
          %s4571 = scalar_select %p4570, %s16, 1
          %s4572 = smul.addr %s4571, 8
          %s4573 = smul.addr %s4572, 8
          %s4574 = scalar_lea.vmem %s3, %s4573
        $region48: #{sw_forward.1} parent=43 // pred_fallthru
          _
      $region44: #{sw_forward.1} parent=5 // pred_fallthru
        _
    $region6: #{sw_forward.1} parent=1 // loop_footer
      %s14 = sadd.s32 1, %s10
    $region7: #{sw_forward.1} parent=1 // loop_footer_branch
      %9 = sbr.rel target = $region3
    $region8: #{sw_forward.1} parent=1 // loop_exit
      _
    %4575 = vsyncpa [#allocation3], 1
    %s4576 = scalar_lea.sflag [#allocation3], 1
    %4577 = vsyncpa %s4576, 1

</llo_original>
